<compile_context>
chip_gen: v7x
topology: tpu7x:2x2x1
jax: 0.10.0
libtpu: 0.0.40
codegen_flags: <defaults>
</compile_context>

<pallas_src>
import functools

import jax
import jax.numpy as jnp
from jax.experimental import pallas as pl
from jax.experimental.pallas import tpu as pltpu


def se_kernel(x_ref, w1_ref, w2_ref, o_ref, *, C, L):
    CL = C * L
    x = x_ref[...]                                            # (TB, C*L), native dtype

    # 0/1 channel selector sel[r, c] = (c*L <= r < (c+1)*L), built in-kernel so
    # no constant is DMA'd from HBM.  Range compare avoids an integer divide.
    row = jax.lax.broadcasted_iota(jnp.int32, (CL, C), 0)
    col_lo = jax.lax.broadcasted_iota(jnp.int32, (CL, C), 1) * L
    sel = ((row >= col_lo) & (row < col_lo + L)).astype(x.dtype)   # (C*L, C)

    # Squeeze: per-channel sums on the MXU (f32 accumulation).  1/L is folded
    # into w1 by the wrapper, so 'sel' stays exactly 0/1.
    # NOTE: a padded partial last batch block feeds garbage rows through this
    # matmul — harmless, everything here is row-independent.
    y = jnp.dot(x, sel, preferred_element_type=jnp.float32)        # (TB, C)

    # Excitation: FC -> ReLU -> FC -> exact sigmoid (keeps the 1e-5 tolerance).
    h = jnp.maximum(jnp.dot(y, w1_ref[...],
                            preferred_element_type=jnp.float32), 0.0)   # (TB, H)
    z = jnp.dot(h, w2_ref[...], preferred_element_type=jnp.float32)     # (TB, C)
    s = 1.0 / (1.0 + jnp.exp(-z))                                        # (TB, C)

    # Scale: expand the (TB, C) gate back to the lane-dense (TB, C*L) slab by
    # reusing the SAME selector transposed (contract dim 1 of both -> MXU).
    scale = jax.lax.dot_general(
        s.astype(x.dtype), sel,
        (((1,), (1,)), ((), ())),
        preferred_element_type=jnp.float32)                             # (TB, C*L)

    o_ref[...] = (x.astype(jnp.float32) * scale).astype(o_ref.dtype)


def _tpu_vmem_budget_bytes():
    """~75% of physical VMEM; conservative 48 MiB if the query is unavailable."""
    phys = 64 * 1024 * 1024
    try:
        info = pltpu.get_tpu_info()
        phys = int(getattr(info, "vmem_capacity_bytes", phys))
    except Exception:
        pass
    return max((phys * 3) // 4, 32 * 1024 * 1024)


def _has_multiple_tensorcores():
    """True only if the chip exposes >1 TensorCore (megacore / v7x)."""
    try:
        info = pltpu.get_tpu_info()
        for name in ("num_cores", "num_tensorcores", "tensorcores_per_chip"):
            n = getattr(info, name, None)
            if n is not None:
                return int(n) > 1
    except Exception:
        pass
    try:
        kind = jax.devices()[0].device_kind.lower()
    except Exception:
        return False
    return any(tag in kind for tag in ("v4", "v5p", "v7"))


def _choose_batch_tile(B, CL, itemsize, fixed_bytes, budget_bytes, multi_tc):
    """Largest batch tile whose pipelined in+out tiles + f32 intermediates fit."""
    # Per batch row resident in VMEM:
    #   in + out tiles, double-buffered by the pipeline: 2 * 2 * CL * itemsize
    #   f32 intermediates inside the kernel (x upcast for the final mul, scale)
    per_row = 4 * CL * itemsize + 2 * CL * 4
    avail = budget_bytes - fixed_bytes
    tb = max(int(avail // per_row), 1)          # TODO(synk): long-L reduce+scale split
    tb = min(tb, B)
    align = 16 if itemsize == 2 else 8          # bf16 packs (16, 128) per vreg
    if B <= align:
        return B                                # block == full batch dim is legal
    tb = max((tb // align) * align, align)
    if multi_tc and tb >= B and B >= 2 * align:
        tb = max(((B // 2) // align) * align, align)   # give both TensorCores a step
    return tb


def se_layer(x, w1, w2, *, vmem_budget_bytes=None):
    """x: (B, C, L); w1: (C, C//r); w2: (C//r, C).

    Returns x * sigmoid(relu(mean(x, -1) @ w1) @ w2)[:, :, None].
    """
    B, C, L = x.shape
    CL = C * L
    itemsize = jnp.dtype(x.dtype).itemsize

    if vmem_budget_bytes is None:
        vmem_budget_bytes = _tpu_vmem_budget_bytes()

    # Fold 1/L of the mean into w1 so the in-kernel selector is exactly 0/1.
    w1_eff = w1.astype(jnp.float32) / jnp.float32(L)
    w2_f = w2.astype(jnp.float32)

    # Batch-independent VMEM residents: in-kernel selector, weights, gate temps.
    sel_bytes = CL * C * itemsize
    fixed_bytes = sel_bytes + 2 * 4 * (w1_eff.size + w2_f.size) + (64 << 10)

    TB = _choose_batch_tile(B, CL, itemsize, fixed_bytes, vmem_budget_bytes,
                            _has_multiple_tensorcores())
    grid = (pl.cdiv(B, TB),)

    x2 = x.reshape(B, CL)                       # free row-major, lane-dense view

    kernel = functools.partial(se_kernel, C=C, L=L)
    out2 = pl.pallas_call(
        kernel,
        out_shape=jax.ShapeDtypeStruct((B, CL), x.dtype),
        grid_spec=pltpu.PrefetchScalarGridSpec(
            num_scalar_prefetch=0,
            grid=grid,
            in_specs=[
                pl.BlockSpec((TB, CL), lambda b: (b, 0)),
                pl.BlockSpec(w1_eff.shape, lambda b: (0, 0)),   # resident, tiny
                pl.BlockSpec(w2_f.shape, lambda b: (0, 0)),     # resident, tiny
            ],
            out_specs=pl.BlockSpec((TB, CL), lambda b: (b, 0)),
        ),
        compiler_params=pltpu.CompilerParams(
            dimension_semantics=("parallel",),
            vmem_limit_bytes=int(vmem_budget_bytes),
        ),
    )(x2, w1_eff, w2_f)

    return out2.reshape(B, C, L)


def se_layer_ref(x, w1, w2):
    """Pure-JAX reference mirroring the PyTorch SELayer forward."""
    y = jnp.mean(x.astype(jnp.float32), axis=-1)           # (B, C)
    h = jnp.maximum(y @ w1.astype(jnp.float32), 0.0)        # (B, C//r)
    s = jax.nn.sigmoid(h @ w2.astype(jnp.float32))          # (B, C)
    return (x.astype(jnp.float32) * s[:, :, None]).astype(x.dtype)


if __name__ == "__main__":
    # Inside InceptionTimeBlockV2 each SELayer acts on 4*n_filters = 128 channels.
    B, C, L = 16, 128, 16
    reduction = 16
    H = C // reduction  # 8

    key = jax.random.PRNGKey(0)
    kx, k1, k2 = jax.random.split(key, 3)

    x = jax.random.normal(kx, (B, C, L), dtype=jnp.float32)
    # Deterministic synthetic bias-free Linear weights (Kaiming-uniform-ish scale).
    w1 = jax.random.uniform(k1, (C, H), dtype=jnp.float32,
                            minval=-1.0, maxval=1.0) / jnp.sqrt(C)
    w2 = jax.random.uniform(k2, (H, C), dtype=jnp.float32,
                            minval=-1.0, maxval=1.0) / jnp.sqrt(H)

    out = jax.block_until_ready(se_layer(x, w1, w2))
    ref = se_layer_ref(x, w1, w2)

    assert out.shape == (B, C, L)
    assert jnp.allclose(out, ref, atol=1e-5, rtol=1e-5), "mismatch vs reference"

    print("KERNEL_OK")
</pallas_src>

<mosaic_0001>
module attributes {stable_mosaic.version = 11 : i64} {
  func.func @se_kernel(%arg0: i32, %arg1: memref<16x2048xf32, #tpu.memory_space<vmem>>, %arg2: memref<128x8xf32, #tpu.memory_space<vmem>>, %arg3: memref<8x128xf32, #tpu.memory_space<vmem>>, %arg4: memref<16x2048xf32, #tpu.memory_space<vmem>>) attributes {dimension_semantics = [#tpu.dimension_semantics<parallel>], iteration_bounds = array<i64: 1>, scalar_prefetch = 0 : i64, scratch_operands = 0 : i64, tpu.core_type = #tpu.core_type<tc>, window_params = [{transform_indices = @transform_0, window_bounds = array<i64: 16, 2048>}, {pipeline_mode = #tpu.pipeline_mode<synchronous>, transform_indices = @transform_1, window_bounds = array<i64: 128, 8>}, {pipeline_mode = #tpu.pipeline_mode<synchronous>, transform_indices = @transform_2, window_bounds = array<i64: 8, 128>}, {transform_indices = @transform_3, window_bounds = array<i64: 16, 2048>}]} {
    %c0 = arith.constant 0 : index
    %c0_0 = arith.constant 0 : index
    %0 = vector.load %arg1[%c0, %c0_0] : memref<16x2048xf32, #tpu.memory_space<vmem>>, vector<16x2048xf32>
    %1 = tpu.iota {dimensions = array<i32: 0>} : vector<2048x128xi32>
    %2 = tpu.iota {dimensions = array<i32: 1>} : vector<2048x128xi32>
    %c16_i32 = arith.constant 16 : i32
    %3 = vector.broadcast %c16_i32 : i32 to vector<2048x128xi32>
    %4 = arith.muli %2, %3 : vector<2048x128xi32>
    %5 = arith.cmpi sge, %1, %4 : vector<2048x128xi32>
    %c16_i32_1 = arith.constant 16 : i32
    %6 = vector.broadcast %c16_i32_1 : i32 to vector<2048x128xi32>
    %7 = arith.addi %4, %6 : vector<2048x128xi32>
    %8 = arith.cmpi slt, %1, %7 : vector<2048x128xi32>
    %9 = arith.andi %5, %8 : vector<2048x128xi1>
    %10 = arith.extui %9 : vector<2048x128xi1> to vector<2048x128xi32>
    %11 = arith.sitofp %10 : vector<2048x128xi32> to vector<2048x128xf32>
    %cst = arith.constant dense<0.000000e+00> : vector<16x128xf32>
    %12 = tpu.matmul %0, %11, %cst {dimension_numbers = #tpu.dot_dimension_numbers<[1], [0], [0], [1], [0, 0, 1, 1], [], []>} : vector<16x2048xf32>, vector<2048x128xf32>, vector<16x128xf32> -> vector<16x128xf32>
    %c0_2 = arith.constant 0 : index
    %c0_3 = arith.constant 0 : index
    %13 = vector.load %arg2[%c0_2, %c0_3] : memref<128x8xf32, #tpu.memory_space<vmem>>, vector<128x8xf32>
    %cst_4 = arith.constant dense<0.000000e+00> : vector<16x8xf32>
    %14 = tpu.matmul %12, %13, %cst_4 {dimension_numbers = #tpu.dot_dimension_numbers<[1], [0], [0], [1], [0, 0, 1, 1], [], []>} : vector<16x128xf32>, vector<128x8xf32>, vector<16x8xf32> -> vector<16x8xf32>
    %cst_5 = arith.constant 0.000000e+00 : f32
    %15 = vector.broadcast %cst_5 : f32 to vector<16x8xf32>
    %16 = arith.maximumf %14, %15 : vector<16x8xf32>
    %c0_6 = arith.constant 0 : index
    %c0_7 = arith.constant 0 : index
    %17 = vector.load %arg3[%c0_6, %c0_7] : memref<8x128xf32, #tpu.memory_space<vmem>>, vector<8x128xf32>
    %cst_8 = arith.constant dense<0.000000e+00> : vector<16x128xf32>
    %18 = tpu.matmul %16, %17, %cst_8 {dimension_numbers = #tpu.dot_dimension_numbers<[1], [0], [0], [1], [0, 0, 1, 1], [], []>} : vector<16x8xf32>, vector<8x128xf32>, vector<16x128xf32> -> vector<16x128xf32>
    %cst_9 = arith.constant 0.000000e+00 : f32
    %19 = vector.broadcast %cst_9 : f32 to vector<16x128xf32>
    %20 = arith.subf %19, %18 : vector<16x128xf32>
    %21 = math.exp %20 : vector<16x128xf32>
    %cst_10 = arith.constant 1.000000e+00 : f32
    %22 = vector.broadcast %cst_10 : f32 to vector<16x128xf32>
    %23 = arith.addf %22, %21 : vector<16x128xf32>
    %cst_11 = arith.constant 1.000000e+00 : f32
    %24 = vector.broadcast %cst_11 : f32 to vector<16x128xf32>
    %25 = arith.divf %24, %23 : vector<16x128xf32>
    %cst_12 = arith.constant dense<0.000000e+00> : vector<16x2048xf32>
    %26 = tpu.matmul %25, %11, %cst_12 {dimension_numbers = #tpu.dot_dimension_numbers<[1], [1], [0], [0], [0, 0, 1, 0], [], []>} : vector<16x128xf32>, vector<2048x128xf32>, vector<16x2048xf32> -> vector<16x2048xf32>
    %27 = arith.mulf %0, %26 : vector<16x2048xf32>
    %c0_13 = arith.constant 0 : index
    %c0_14 = arith.constant 0 : index
    %28 = vector.load %arg4[%c0_13, %c0_14] : memref<16x2048xf32, #tpu.memory_space<vmem>>, vector<16x2048xf32>
    tpu.vector_store %arg4[%c0_13, %c0_14], %27 {strides = array<i32>} : memref<16x2048xf32, #tpu.memory_space<vmem>>, vector<16x2048xf32>,
    return
  }
  func.func @transform_0(%arg0: i32) -> (i32, i32) {
    %c0_i32 = arith.constant 0 : i32
    %c0_i32_0 = arith.constant 0 : i32
    return %arg0, %c0_i32 : i32, i32
  }
  func.func @transform_1(%arg0: i32) -> (i32, i32) {
    %c0_i32 = arith.constant 0 : i32
    %c0_i32_0 = arith.constant 0 : i32
    %c0_i32_1 = arith.constant 0 : i32
    return %c0_i32, %c0_i32_0 : i32, i32
  }
  func.func @transform_2(%arg0: i32) -> (i32, i32) {
    %c0_i32 = arith.constant 0 : i32
    %c0_i32_0 = arith.constant 0 : i32
    %c0_i32_1 = arith.constant 0 : i32
    return %c0_i32, %c0_i32_0 : i32, i32
  }
  func.func @transform_3(%arg0: i32) -> (i32, i32) {
    %c0_i32 = arith.constant 0 : i32
    %c0_i32_0 = arith.constant 0 : i32
    return %arg0, %c0_i32 : i32, i32
  }
}

</mosaic_0001>

<llo_original>
// kernel: tpu_custom_call.1
$region0: #{tpu_custom_call.1}
  #allocation0 [shape = 'u32[]', space=smem, size = 0x4, offset = 0x4, fixed_abs, tag = 'smem constant byte address 0x4 - core index']
  #allocation1 [shape = 'u32[144,128]{1,0:T(1,128)}', space=vmem, size = 0x12000, scoped, tag = 'internal scratch']
  %s0 = inlined_call_operand.hbm [shape: f32[16,2048], index: 0, kind: input, shape index: {}]
  %s1 = inlined_call_operand.vmem [shape: f32[128,8], index: 1, kind: input, shape index: {}]
  %s2 = inlined_call_operand.vmem [shape: f32[8,128], index: 2, kind: input, shape index: {}]
  %s3 = inlined_call_operand.hbm [shape: f32[16,2048], index: 3, kind: output, shape index: {}]
  %s4 = sld [smem:[#allocation0]]
  $region26: #{tpu_custom_call.1} parent=0
    _
  %s6 = ssub.s32 1, %s4
  %s7 = scalar_select 0, %s6, %s4
  $region1: #{tpu_custom_call.1} parent=0
    #allocation2 [shape = 'u8[131072]{0}', space=vmem, size = 0x20000, scoped, tag = 'input window, operand 0, single buffered']
    #allocation3 [shape = 's32[1]{0}', space=sflag, size = 0x4, scoped, tag = 'scoped memory for tpu_custom_call.1']
    #allocation4 [shape = 's32[1]{0}', space=sflag, size = 0x4, scoped, tag = 'scoped memory for tpu_custom_call.1']
    #allocation5 [shape = 'u8[131072]{0}', space=vmem, size = 0x20000, scoped, tag = 'output window, operand 0, single buffered']
    %8 = vsyncpa [#allocation3], 0
    %9 = vsyncpa [#allocation4], 0
    // Predicated region
    $region2: #{tpu_custom_call.1} parent=1 // pred_check
      _
    $region3: #{tpu_custom_call.1} parent=1 // pred_check_branch
      %11 = sbr.rel (0) target = $region5
    $region4: #{tpu_custom_call.1} parent=1 // pred_region
      %s13 = ssub.s32 4096, 4096
      %14 = vsyncadd [#allocation3], %s13
      %s15 = sshll.u32 [#allocation2], 4
      %s16 = int_to_ptr.vmem [resolvable:$true] %s15
      %21 = dma.hbm_to_vmem [thread:$0]  %s0, 4096, %s16, [#allocation3], 2048, 2048, 128
    $region5: #{tpu_custom_call.1} parent=1 // pred_fallthru
      _
    // Predicated region
    $region6: #{tpu_custom_call.1} parent=1 // pred_check
      _
    $region7: #{tpu_custom_call.1} parent=1 // pred_check_branch
      %23 = sbr.rel (0) target = $region9
    $region8: #{tpu_custom_call.1} parent=1 // pred_region
      _
    $region9: #{tpu_custom_call.1} parent=1 // pred_fallthru
      _
    // Predicated region
    $region10: #{tpu_custom_call.1} parent=1 // pred_check
      _
    $region11: #{tpu_custom_call.1} parent=1 // pred_check_branch
      %25 = sbr.rel (0) target = $region13
    $region12: #{tpu_custom_call.1} parent=1 // pred_region
      _
    $region13: #{tpu_custom_call.1} parent=1 // pred_fallthru
      _
    // Predicated region
    $region14: #{tpu_custom_call.1} parent=1 // pred_check
      _
    $region15: #{tpu_custom_call.1} parent=1 // pred_check_branch
      %27 = sbr.rel (0) target = $region17
    $region16: #{tpu_custom_call.1} parent=1 // pred_region
      %28 = dma.done [#allocation3], 4096
    $region17: #{tpu_custom_call.1} parent=1 // pred_fallthru
      _
    %v29 = vld [vmem:[#allocation2] sm:$0xff]
    %v30 = vld [vmem:[#allocation2 + $0x8] sm:$0xff]
    %v31 = vld [vmem:[#allocation2 + $0x10] sm:$0xff]
    %v32 = vld [vmem:[#allocation2 + $0x18] sm:$0xff]
    %v33 = vld [vmem:[#allocation2 + $0x20] sm:$0xff]
    %v34 = vld [vmem:[#allocation2 + $0x28] sm:$0xff]
    %v35 = vld [vmem:[#allocation2 + $0x30] sm:$0xff]
    %v36 = vld [vmem:[#allocation2 + $0x38] sm:$0xff]
    %v37 = vld [vmem:[#allocation2 + $0x40] sm:$0xff]
    %v38 = vld [vmem:[#allocation2 + $0x48] sm:$0xff]
    %v39 = vld [vmem:[#allocation2 + $0x50] sm:$0xff]
    %v40 = vld [vmem:[#allocation2 + $0x58] sm:$0xff]
    %v41 = vld [vmem:[#allocation2 + $0x60] sm:$0xff]
    %v42 = vld [vmem:[#allocation2 + $0x68] sm:$0xff]
    %v43 = vld [vmem:[#allocation2 + $0x70] sm:$0xff]
    %v44 = vld [vmem:[#allocation2 + $0x78] sm:$0xff]
    %v45 = vld [vmem:[#allocation2 + $0x80] sm:$0xff]
    %v46 = vld [vmem:[#allocation2 + $0x88] sm:$0xff]
    %v47 = vld [vmem:[#allocation2 + $0x90] sm:$0xff]
    %v48 = vld [vmem:[#allocation2 + $0x98] sm:$0xff]
    %v49 = vld [vmem:[#allocation2 + $0xa0] sm:$0xff]
    %v50 = vld [vmem:[#allocation2 + $0xa8] sm:$0xff]
    %v51 = vld [vmem:[#allocation2 + $0xb0] sm:$0xff]
    %v52 = vld [vmem:[#allocation2 + $0xb8] sm:$0xff]
    %v53 = vld [vmem:[#allocation2 + $0xc0] sm:$0xff]
    %v54 = vld [vmem:[#allocation2 + $0xc8] sm:$0xff]
    %v55 = vld [vmem:[#allocation2 + $0xd0] sm:$0xff]
    %v56 = vld [vmem:[#allocation2 + $0xd8] sm:$0xff]
    %v57 = vld [vmem:[#allocation2 + $0xe0] sm:$0xff]
    %v58 = vld [vmem:[#allocation2 + $0xe8] sm:$0xff]
    %v59 = vld [vmem:[#allocation2 + $0xf0] sm:$0xff]
    %v60 = vld [vmem:[#allocation2 + $0xf8] sm:$0xff]
    %v61 = vlaneseq
    %v62 = vshrl.u32 %v61, 7
    %v63 = vadd.s32 %v62, 8
    %v64 = vadd.s32 %v62, 16
    %v65 = vadd.s32 %v62, 24
    %v66 = vadd.s32 %v62, 32
    %v67 = vadd.s32 %v62, 40
    %v68 = vadd.s32 %v62, 48
    %v69 = vadd.s32 %v62, 56
    %v70 = vadd.s32 %v62, 64
    %v71 = vadd.s32 %v62, 72
    %v72 = vadd.s32 %v62, 80
    %v73 = vadd.s32 %v62, 88
    %v74 = vadd.s32 %v62, 96
    %v75 = vadd.s32 %v62, 104
    %v76 = vadd.s32 %v62, 112
    %v77 = vadd.s32 %v62, 120
    %v78 = vadd.s32 %v62, 128
    %v79 = vadd.s32 %v62, 136
    %v80 = vadd.s32 %v62, 144
    %v81 = vadd.s32 %v62, 152
    %v82 = vadd.s32 %v62, 160
    %v83 = vadd.s32 %v62, 168
    %v84 = vadd.s32 %v62, 176
    %v85 = vadd.s32 %v62, 184
    %v86 = vadd.s32 %v62, 192
    %v87 = vadd.s32 %v62, 200
    %v88 = vadd.s32 %v62, 208
    %v89 = vadd.s32 %v62, 216
    %v90 = vadd.s32 %v62, 224
    %v91 = vadd.s32 %v62, 232
    %v92 = vadd.s32 %v62, 240
    %v93 = vadd.s32 %v62, 248
    %v94 = vadd.s32 %v62, 256
    %v95 = vadd.s32 %v62, 264
    %v96 = vadd.s32 %v62, 272
    %v97 = vadd.s32 %v62, 280
    %v98 = vadd.s32 %v62, 288
    %v99 = vadd.s32 %v62, 296
    %v100 = vadd.s32 %v62, 304
    %v101 = vadd.s32 %v62, 312
    %v102 = vadd.s32 %v62, 320
    %v103 = vadd.s32 %v62, 328
    %v104 = vadd.s32 %v62, 336
    %v105 = vadd.s32 %v62, 344
    %v106 = vadd.s32 %v62, 352
    %v107 = vadd.s32 %v62, 360
    %v108 = vadd.s32 %v62, 368
    %v109 = vadd.s32 %v62, 376
    %v110 = vadd.s32 %v62, 384
    %v111 = vadd.s32 %v62, 392
    %v112 = vadd.s32 %v62, 400
    %v113 = vadd.s32 %v62, 408
    %v114 = vadd.s32 %v62, 416
    %v115 = vadd.s32 %v62, 424
    %v116 = vadd.s32 %v62, 432
    %v117 = vadd.s32 %v62, 440
    %v118 = vadd.s32 %v62, 448
    %v119 = vadd.s32 %v62, 456
    %v120 = vadd.s32 %v62, 464
    %v121 = vadd.s32 %v62, 472
    %v122 = vadd.s32 %v62, 480
    %v123 = vadd.s32 %v62, 488
    %v124 = vadd.s32 %v62, 496
    %v125 = vadd.s32 %v62, 504
    %v126 = vadd.s32 %v62, 512
    %v127 = vadd.s32 %v62, 520
    %v128 = vadd.s32 %v62, 528
    %v129 = vadd.s32 %v62, 536
    %v130 = vadd.s32 %v62, 544
    %v131 = vadd.s32 %v62, 552
    %v132 = vadd.s32 %v62, 560
    %v133 = vadd.s32 %v62, 568
    %v134 = vadd.s32 %v62, 576
    %v135 = vadd.s32 %v62, 584
    %v136 = vadd.s32 %v62, 592
    %v137 = vadd.s32 %v62, 600
    %v138 = vadd.s32 %v62, 608
    %v139 = vadd.s32 %v62, 616
    %v140 = vadd.s32 %v62, 624
    %v141 = vadd.s32 %v62, 632
    %v142 = vadd.s32 %v62, 640
    %v143 = vadd.s32 %v62, 648
    %v144 = vadd.s32 %v62, 656
    %v145 = vadd.s32 %v62, 664
    %v146 = vadd.s32 %v62, 672
    %v147 = vadd.s32 %v62, 680
    %v148 = vadd.s32 %v62, 688
    %v149 = vadd.s32 %v62, 696
    %v150 = vadd.s32 %v62, 704
    %v151 = vadd.s32 %v62, 712
    %v152 = vadd.s32 %v62, 720
    %v153 = vadd.s32 %v62, 728
    %v154 = vadd.s32 %v62, 736
    %v155 = vadd.s32 %v62, 744
    %v156 = vadd.s32 %v62, 752
    %v157 = vadd.s32 %v62, 760
    %v158 = vadd.s32 %v62, 768
    %v159 = vadd.s32 %v62, 776
    %v160 = vadd.s32 %v62, 784
    %v161 = vadd.s32 %v62, 792
    %v162 = vadd.s32 %v62, 800
    %v163 = vadd.s32 %v62, 808
    %v164 = vadd.s32 %v62, 816
    %v165 = vadd.s32 %v62, 824
    %v166 = vadd.s32 %v62, 832
    %v167 = vadd.s32 %v62, 840
    %v168 = vadd.s32 %v62, 848
    %v169 = vadd.s32 %v62, 856
    %v170 = vadd.s32 %v62, 864
    %v171 = vadd.s32 %v62, 872
    %v172 = vadd.s32 %v62, 880
    %v173 = vadd.s32 %v62, 888
    %v174 = vadd.s32 %v62, 896
    %v175 = vadd.s32 %v62, 904
    %v176 = vadd.s32 %v62, 912
    %v177 = vadd.s32 %v62, 920
    %v178 = vadd.s32 %v62, 928
    %v179 = vadd.s32 %v62, 936
    %v180 = vadd.s32 %v62, 944
    %v181 = vadd.s32 %v62, 952
    %v182 = vadd.s32 %v62, 960
    %v183 = vadd.s32 %v62, 968
    %v184 = vadd.s32 %v62, 976
    %v185 = vadd.s32 %v62, 984
    %v186 = vadd.s32 %v62, 992
    %v187 = vadd.s32 %v62, 1000
    %v188 = vadd.s32 %v62, 1008
    %v189 = vadd.s32 %v62, 1016
    %v190 = vadd.s32 %v62, 1024
    %v191 = vadd.s32 %v62, 1032
    %v192 = vadd.s32 %v62, 1040
    %v193 = vadd.s32 %v62, 1048
    %v194 = vadd.s32 %v62, 1056
    %v195 = vadd.s32 %v62, 1064
    %v196 = vadd.s32 %v62, 1072
    %v197 = vadd.s32 %v62, 1080
    %v198 = vadd.s32 %v62, 1088
    %v199 = vadd.s32 %v62, 1096
    %v200 = vadd.s32 %v62, 1104
    %v201 = vadd.s32 %v62, 1112
    %v202 = vadd.s32 %v62, 1120
    %v203 = vadd.s32 %v62, 1128
    %v204 = vadd.s32 %v62, 1136
    %v205 = vadd.s32 %v62, 1144
    %v206 = vadd.s32 %v62, 1152
    %v207 = vadd.s32 %v62, 1160
    %v208 = vadd.s32 %v62, 1168
    %v209 = vadd.s32 %v62, 1176
    %v210 = vadd.s32 %v62, 1184
    %v211 = vadd.s32 %v62, 1192
    %v212 = vadd.s32 %v62, 1200
    %v213 = vadd.s32 %v62, 1208
    %v214 = vadd.s32 %v62, 1216
    %v215 = vadd.s32 %v62, 1224
    %v216 = vadd.s32 %v62, 1232
    %v217 = vadd.s32 %v62, 1240
    %v218 = vadd.s32 %v62, 1248
    %v219 = vadd.s32 %v62, 1256
    %v220 = vadd.s32 %v62, 1264
    %v221 = vadd.s32 %v62, 1272
    %v222 = vadd.s32 %v62, 1280
    %v223 = vadd.s32 %v62, 1288
    %v224 = vadd.s32 %v62, 1296
    %v225 = vadd.s32 %v62, 1304
    %v226 = vadd.s32 %v62, 1312
    %v227 = vadd.s32 %v62, 1320
    %v228 = vadd.s32 %v62, 1328
    %v229 = vadd.s32 %v62, 1336
    %v230 = vadd.s32 %v62, 1344
    %v231 = vadd.s32 %v62, 1352
    %v232 = vadd.s32 %v62, 1360
    %v233 = vadd.s32 %v62, 1368
    %v234 = vadd.s32 %v62, 1376
    %v235 = vadd.s32 %v62, 1384
    %v236 = vadd.s32 %v62, 1392
    %v237 = vadd.s32 %v62, 1400
    %v238 = vadd.s32 %v62, 1408
    %v239 = vadd.s32 %v62, 1416
    %v240 = vadd.s32 %v62, 1424
    %v241 = vadd.s32 %v62, 1432
    %v242 = vadd.s32 %v62, 1440
    %v243 = vadd.s32 %v62, 1448
    %v244 = vadd.s32 %v62, 1456
    %v245 = vadd.s32 %v62, 1464
    %v246 = vadd.s32 %v62, 1472
    %v247 = vadd.s32 %v62, 1480
    %v248 = vadd.s32 %v62, 1488
    %v249 = vadd.s32 %v62, 1496
    %v250 = vadd.s32 %v62, 1504
    %v251 = vadd.s32 %v62, 1512
    %v252 = vadd.s32 %v62, 1520
    %v253 = vadd.s32 %v62, 1528
    %v254 = vadd.s32 %v62, 1536
    %v255 = vadd.s32 %v62, 1544
    %v256 = vadd.s32 %v62, 1552
    %v257 = vadd.s32 %v62, 1560
    %v258 = vadd.s32 %v62, 1568
    %v259 = vadd.s32 %v62, 1576
    %v260 = vadd.s32 %v62, 1584
    %v261 = vadd.s32 %v62, 1592
    %v262 = vadd.s32 %v62, 1600
    %v263 = vadd.s32 %v62, 1608
    %v264 = vadd.s32 %v62, 1616
    %v265 = vadd.s32 %v62, 1624
    %v266 = vadd.s32 %v62, 1632
    %v267 = vadd.s32 %v62, 1640
    %v268 = vadd.s32 %v62, 1648
    %v269 = vadd.s32 %v62, 1656
    %v270 = vadd.s32 %v62, 1664
    %v271 = vadd.s32 %v62, 1672
    %v272 = vadd.s32 %v62, 1680
    %v273 = vadd.s32 %v62, 1688
    %v274 = vadd.s32 %v62, 1696
    %v275 = vadd.s32 %v62, 1704
    %v276 = vadd.s32 %v62, 1712
    %v277 = vadd.s32 %v62, 1720
    %v278 = vadd.s32 %v62, 1728
    %v279 = vadd.s32 %v62, 1736
    %v280 = vadd.s32 %v62, 1744
    %v281 = vadd.s32 %v62, 1752
    %v282 = vadd.s32 %v62, 1760
    %v283 = vadd.s32 %v62, 1768
    %v284 = vadd.s32 %v62, 1776
    %v285 = vadd.s32 %v62, 1784
    %v286 = vadd.s32 %v62, 1792
    %v287 = vadd.s32 %v62, 1800
    %v288 = vadd.s32 %v62, 1808
    %v289 = vadd.s32 %v62, 1816
    %v290 = vadd.s32 %v62, 1824
    %v291 = vadd.s32 %v62, 1832
    %v292 = vadd.s32 %v62, 1840
    %v293 = vadd.s32 %v62, 1848
    %v294 = vadd.s32 %v62, 1856
    %v295 = vadd.s32 %v62, 1864
    %v296 = vadd.s32 %v62, 1872
    %v297 = vadd.s32 %v62, 1880
    %v298 = vadd.s32 %v62, 1888
    %v299 = vadd.s32 %v62, 1896
    %v300 = vadd.s32 %v62, 1904
    %v301 = vadd.s32 %v62, 1912
    %v302 = vadd.s32 %v62, 1920
    %v303 = vadd.s32 %v62, 1928
    %v304 = vadd.s32 %v62, 1936
    %v305 = vadd.s32 %v62, 1944
    %v306 = vadd.s32 %v62, 1952
    %v307 = vadd.s32 %v62, 1960
    %v308 = vadd.s32 %v62, 1968
    %v309 = vadd.s32 %v62, 1976
    %v310 = vadd.s32 %v62, 1984
    %v311 = vadd.s32 %v62, 1992
    %v312 = vadd.s32 %v62, 2000
    %v313 = vadd.s32 %v62, 2008
    %v314 = vadd.s32 %v62, 2016
    %v315 = vadd.s32 %v62, 2024
    %v316 = vadd.s32 %v62, 2032
    %v317 = vadd.s32 %v62, 2040
    %v318 = vlaneseq
    %v319 = vand.u32 %v318, 127
    %v320 = vmul.u32 %v319, 16
    %vm321 = vcmp.ge.s32.totalorder %v62, %v320
    %vm322 = vcmp.ge.s32.totalorder %v63, %v320
    %vm323 = vcmp.ge.s32.totalorder %v64, %v320
    %vm324 = vcmp.ge.s32.totalorder %v65, %v320
    %vm325 = vcmp.ge.s32.totalorder %v66, %v320
    %vm326 = vcmp.ge.s32.totalorder %v67, %v320
    %vm327 = vcmp.ge.s32.totalorder %v68, %v320
    %vm328 = vcmp.ge.s32.totalorder %v69, %v320
    %vm329 = vcmp.ge.s32.totalorder %v70, %v320
    %vm330 = vcmp.ge.s32.totalorder %v71, %v320
    %vm331 = vcmp.ge.s32.totalorder %v72, %v320
    %vm332 = vcmp.ge.s32.totalorder %v73, %v320
    %vm333 = vcmp.ge.s32.totalorder %v74, %v320
    %vm334 = vcmp.ge.s32.totalorder %v75, %v320
    %vm335 = vcmp.ge.s32.totalorder %v76, %v320
    %vm336 = vcmp.ge.s32.totalorder %v77, %v320
    %vm337 = vcmp.ge.s32.totalorder %v78, %v320
    %vm338 = vcmp.ge.s32.totalorder %v79, %v320
    %vm339 = vcmp.ge.s32.totalorder %v80, %v320
    %vm340 = vcmp.ge.s32.totalorder %v81, %v320
    %vm341 = vcmp.ge.s32.totalorder %v82, %v320
    %vm342 = vcmp.ge.s32.totalorder %v83, %v320
    %vm343 = vcmp.ge.s32.totalorder %v84, %v320
    %vm344 = vcmp.ge.s32.totalorder %v85, %v320
    %vm345 = vcmp.ge.s32.totalorder %v86, %v320
    %vm346 = vcmp.ge.s32.totalorder %v87, %v320
    %vm347 = vcmp.ge.s32.totalorder %v88, %v320
    %vm348 = vcmp.ge.s32.totalorder %v89, %v320
    %vm349 = vcmp.ge.s32.totalorder %v90, %v320
    %vm350 = vcmp.ge.s32.totalorder %v91, %v320
    %vm351 = vcmp.ge.s32.totalorder %v92, %v320
    %vm352 = vcmp.ge.s32.totalorder %v93, %v320
    %vm353 = vcmp.ge.s32.totalorder %v94, %v320
    %vm354 = vcmp.ge.s32.totalorder %v95, %v320
    %vm355 = vcmp.ge.s32.totalorder %v96, %v320
    %vm356 = vcmp.ge.s32.totalorder %v97, %v320
    %vm357 = vcmp.ge.s32.totalorder %v98, %v320
    %vm358 = vcmp.ge.s32.totalorder %v99, %v320
    %vm359 = vcmp.ge.s32.totalorder %v100, %v320
    %vm360 = vcmp.ge.s32.totalorder %v101, %v320
    %vm361 = vcmp.ge.s32.totalorder %v102, %v320
    %vm362 = vcmp.ge.s32.totalorder %v103, %v320
    %vm363 = vcmp.ge.s32.totalorder %v104, %v320
    %vm364 = vcmp.ge.s32.totalorder %v105, %v320
    %vm365 = vcmp.ge.s32.totalorder %v106, %v320
    %vm366 = vcmp.ge.s32.totalorder %v107, %v320
    %vm367 = vcmp.ge.s32.totalorder %v108, %v320
    %vm368 = vcmp.ge.s32.totalorder %v109, %v320
    %vm369 = vcmp.ge.s32.totalorder %v110, %v320
    %vm370 = vcmp.ge.s32.totalorder %v111, %v320
    %vm371 = vcmp.ge.s32.totalorder %v112, %v320
    %vm372 = vcmp.ge.s32.totalorder %v113, %v320
    %vm373 = vcmp.ge.s32.totalorder %v114, %v320
    %vm374 = vcmp.ge.s32.totalorder %v115, %v320
    %vm375 = vcmp.ge.s32.totalorder %v116, %v320
    %vm376 = vcmp.ge.s32.totalorder %v117, %v320
    %vm377 = vcmp.ge.s32.totalorder %v118, %v320
    %vm378 = vcmp.ge.s32.totalorder %v119, %v320
    %vm379 = vcmp.ge.s32.totalorder %v120, %v320
    %vm380 = vcmp.ge.s32.totalorder %v121, %v320
    %vm381 = vcmp.ge.s32.totalorder %v122, %v320
    %vm382 = vcmp.ge.s32.totalorder %v123, %v320
    %vm383 = vcmp.ge.s32.totalorder %v124, %v320
    %vm384 = vcmp.ge.s32.totalorder %v125, %v320
    %vm385 = vcmp.ge.s32.totalorder %v126, %v320
    %vm386 = vcmp.ge.s32.totalorder %v127, %v320
    %vm387 = vcmp.ge.s32.totalorder %v128, %v320
    %vm388 = vcmp.ge.s32.totalorder %v129, %v320
    %vm389 = vcmp.ge.s32.totalorder %v130, %v320
    %vm390 = vcmp.ge.s32.totalorder %v131, %v320
    %vm391 = vcmp.ge.s32.totalorder %v132, %v320
    %vm392 = vcmp.ge.s32.totalorder %v133, %v320
    %vm393 = vcmp.ge.s32.totalorder %v134, %v320
    %vm394 = vcmp.ge.s32.totalorder %v135, %v320
    %vm395 = vcmp.ge.s32.totalorder %v136, %v320
    %vm396 = vcmp.ge.s32.totalorder %v137, %v320
    %vm397 = vcmp.ge.s32.totalorder %v138, %v320
    %vm398 = vcmp.ge.s32.totalorder %v139, %v320
    %vm399 = vcmp.ge.s32.totalorder %v140, %v320
    %vm400 = vcmp.ge.s32.totalorder %v141, %v320
    %vm401 = vcmp.ge.s32.totalorder %v142, %v320
    %vm402 = vcmp.ge.s32.totalorder %v143, %v320
    %vm403 = vcmp.ge.s32.totalorder %v144, %v320
    %vm404 = vcmp.ge.s32.totalorder %v145, %v320
    %vm405 = vcmp.ge.s32.totalorder %v146, %v320
    %vm406 = vcmp.ge.s32.totalorder %v147, %v320
    %vm407 = vcmp.ge.s32.totalorder %v148, %v320
    %vm408 = vcmp.ge.s32.totalorder %v149, %v320
    %vm409 = vcmp.ge.s32.totalorder %v150, %v320
    %vm410 = vcmp.ge.s32.totalorder %v151, %v320
    %vm411 = vcmp.ge.s32.totalorder %v152, %v320
    %vm412 = vcmp.ge.s32.totalorder %v153, %v320
    %vm413 = vcmp.ge.s32.totalorder %v154, %v320
    %vm414 = vcmp.ge.s32.totalorder %v155, %v320
    %vm415 = vcmp.ge.s32.totalorder %v156, %v320
    %vm416 = vcmp.ge.s32.totalorder %v157, %v320
    %vm417 = vcmp.ge.s32.totalorder %v158, %v320
    %vm418 = vcmp.ge.s32.totalorder %v159, %v320
    %vm419 = vcmp.ge.s32.totalorder %v160, %v320
    %vm420 = vcmp.ge.s32.totalorder %v161, %v320
    %vm421 = vcmp.ge.s32.totalorder %v162, %v320
    %vm422 = vcmp.ge.s32.totalorder %v163, %v320
    %vm423 = vcmp.ge.s32.totalorder %v164, %v320
    %vm424 = vcmp.ge.s32.totalorder %v165, %v320
    %vm425 = vcmp.ge.s32.totalorder %v166, %v320
    %vm426 = vcmp.ge.s32.totalorder %v167, %v320
    %vm427 = vcmp.ge.s32.totalorder %v168, %v320
    %vm428 = vcmp.ge.s32.totalorder %v169, %v320
    %vm429 = vcmp.ge.s32.totalorder %v170, %v320
    %vm430 = vcmp.ge.s32.totalorder %v171, %v320
    %vm431 = vcmp.ge.s32.totalorder %v172, %v320
    %vm432 = vcmp.ge.s32.totalorder %v173, %v320
    %vm433 = vcmp.ge.s32.totalorder %v174, %v320
    %vm434 = vcmp.ge.s32.totalorder %v175, %v320
    %vm435 = vcmp.ge.s32.totalorder %v176, %v320
    %vm436 = vcmp.ge.s32.totalorder %v177, %v320
    %vm437 = vcmp.ge.s32.totalorder %v178, %v320
    %vm438 = vcmp.ge.s32.totalorder %v179, %v320
    %vm439 = vcmp.ge.s32.totalorder %v180, %v320
    %vm440 = vcmp.ge.s32.totalorder %v181, %v320
    %vm441 = vcmp.ge.s32.totalorder %v182, %v320
    %vm442 = vcmp.ge.s32.totalorder %v183, %v320
    %vm443 = vcmp.ge.s32.totalorder %v184, %v320
    %vm444 = vcmp.ge.s32.totalorder %v185, %v320
    %vm445 = vcmp.ge.s32.totalorder %v186, %v320
    %vm446 = vcmp.ge.s32.totalorder %v187, %v320
    %vm447 = vcmp.ge.s32.totalorder %v188, %v320
    %vm448 = vcmp.ge.s32.totalorder %v189, %v320
    %vm449 = vcmp.ge.s32.totalorder %v190, %v320
    %vm450 = vcmp.ge.s32.totalorder %v191, %v320
    %vm451 = vcmp.ge.s32.totalorder %v192, %v320
    %vm452 = vcmp.ge.s32.totalorder %v193, %v320
    %vm453 = vcmp.ge.s32.totalorder %v194, %v320
    %vm454 = vcmp.ge.s32.totalorder %v195, %v320
    %vm455 = vcmp.ge.s32.totalorder %v196, %v320
    %vm456 = vcmp.ge.s32.totalorder %v197, %v320
    %vm457 = vcmp.ge.s32.totalorder %v198, %v320
    %vm458 = vcmp.ge.s32.totalorder %v199, %v320
    %vm459 = vcmp.ge.s32.totalorder %v200, %v320
    %vm460 = vcmp.ge.s32.totalorder %v201, %v320
    %vm461 = vcmp.ge.s32.totalorder %v202, %v320
    %vm462 = vcmp.ge.s32.totalorder %v203, %v320
    %vm463 = vcmp.ge.s32.totalorder %v204, %v320
    %vm464 = vcmp.ge.s32.totalorder %v205, %v320
    %vm465 = vcmp.ge.s32.totalorder %v206, %v320
    %vm466 = vcmp.ge.s32.totalorder %v207, %v320
    %vm467 = vcmp.ge.s32.totalorder %v208, %v320
    %vm468 = vcmp.ge.s32.totalorder %v209, %v320
    %vm469 = vcmp.ge.s32.totalorder %v210, %v320
    %vm470 = vcmp.ge.s32.totalorder %v211, %v320
    %vm471 = vcmp.ge.s32.totalorder %v212, %v320
    %vm472 = vcmp.ge.s32.totalorder %v213, %v320
    %vm473 = vcmp.ge.s32.totalorder %v214, %v320
    %vm474 = vcmp.ge.s32.totalorder %v215, %v320
    %vm475 = vcmp.ge.s32.totalorder %v216, %v320
    %vm476 = vcmp.ge.s32.totalorder %v217, %v320
    %vm477 = vcmp.ge.s32.totalorder %v218, %v320
    %vm478 = vcmp.ge.s32.totalorder %v219, %v320
    %vm479 = vcmp.ge.s32.totalorder %v220, %v320
    %vm480 = vcmp.ge.s32.totalorder %v221, %v320
    %vm481 = vcmp.ge.s32.totalorder %v222, %v320
    %vm482 = vcmp.ge.s32.totalorder %v223, %v320
    %vm483 = vcmp.ge.s32.totalorder %v224, %v320
    %vm484 = vcmp.ge.s32.totalorder %v225, %v320
    %vm485 = vcmp.ge.s32.totalorder %v226, %v320
    %vm486 = vcmp.ge.s32.totalorder %v227, %v320
    %vm487 = vcmp.ge.s32.totalorder %v228, %v320
    %vm488 = vcmp.ge.s32.totalorder %v229, %v320
    %vm489 = vcmp.ge.s32.totalorder %v230, %v320
    %vm490 = vcmp.ge.s32.totalorder %v231, %v320
    %vm491 = vcmp.ge.s32.totalorder %v232, %v320
    %vm492 = vcmp.ge.s32.totalorder %v233, %v320
    %vm493 = vcmp.ge.s32.totalorder %v234, %v320
    %vm494 = vcmp.ge.s32.totalorder %v235, %v320
    %vm495 = vcmp.ge.s32.totalorder %v236, %v320
    %vm496 = vcmp.ge.s32.totalorder %v237, %v320
    %vm497 = vcmp.ge.s32.totalorder %v238, %v320
    %vm498 = vcmp.ge.s32.totalorder %v239, %v320
    %vm499 = vcmp.ge.s32.totalorder %v240, %v320
    %vm500 = vcmp.ge.s32.totalorder %v241, %v320
    %vm501 = vcmp.ge.s32.totalorder %v242, %v320
    %vm502 = vcmp.ge.s32.totalorder %v243, %v320
    %vm503 = vcmp.ge.s32.totalorder %v244, %v320
    %vm504 = vcmp.ge.s32.totalorder %v245, %v320
    %vm505 = vcmp.ge.s32.totalorder %v246, %v320
    %vm506 = vcmp.ge.s32.totalorder %v247, %v320
    %vm507 = vcmp.ge.s32.totalorder %v248, %v320
    %vm508 = vcmp.ge.s32.totalorder %v249, %v320
    %vm509 = vcmp.ge.s32.totalorder %v250, %v320
    %vm510 = vcmp.ge.s32.totalorder %v251, %v320
    %vm511 = vcmp.ge.s32.totalorder %v252, %v320
    %vm512 = vcmp.ge.s32.totalorder %v253, %v320
    %vm513 = vcmp.ge.s32.totalorder %v254, %v320
    %vm514 = vcmp.ge.s32.totalorder %v255, %v320
    %vm515 = vcmp.ge.s32.totalorder %v256, %v320
    %vm516 = vcmp.ge.s32.totalorder %v257, %v320
    %vm517 = vcmp.ge.s32.totalorder %v258, %v320
    %vm518 = vcmp.ge.s32.totalorder %v259, %v320
    %vm519 = vcmp.ge.s32.totalorder %v260, %v320
    %vm520 = vcmp.ge.s32.totalorder %v261, %v320
    %vm521 = vcmp.ge.s32.totalorder %v262, %v320
    %vm522 = vcmp.ge.s32.totalorder %v263, %v320
    %vm523 = vcmp.ge.s32.totalorder %v264, %v320
    %vm524 = vcmp.ge.s32.totalorder %v265, %v320
    %vm525 = vcmp.ge.s32.totalorder %v266, %v320
    %vm526 = vcmp.ge.s32.totalorder %v267, %v320
    %vm527 = vcmp.ge.s32.totalorder %v268, %v320
    %vm528 = vcmp.ge.s32.totalorder %v269, %v320
    %vm529 = vcmp.ge.s32.totalorder %v270, %v320
    %vm530 = vcmp.ge.s32.totalorder %v271, %v320
    %vm531 = vcmp.ge.s32.totalorder %v272, %v320
    %vm532 = vcmp.ge.s32.totalorder %v273, %v320
    %vm533 = vcmp.ge.s32.totalorder %v274, %v320
    %vm534 = vcmp.ge.s32.totalorder %v275, %v320
    %vm535 = vcmp.ge.s32.totalorder %v276, %v320
    %vm536 = vcmp.ge.s32.totalorder %v277, %v320
    %vm537 = vcmp.ge.s32.totalorder %v278, %v320
    %vm538 = vcmp.ge.s32.totalorder %v279, %v320
    %vm539 = vcmp.ge.s32.totalorder %v280, %v320
    %vm540 = vcmp.ge.s32.totalorder %v281, %v320
    %vm541 = vcmp.ge.s32.totalorder %v282, %v320
    %vm542 = vcmp.ge.s32.totalorder %v283, %v320
    %vm543 = vcmp.ge.s32.totalorder %v284, %v320
    %vm544 = vcmp.ge.s32.totalorder %v285, %v320
    %vm545 = vcmp.ge.s32.totalorder %v286, %v320
    %vm546 = vcmp.ge.s32.totalorder %v287, %v320
    %vm547 = vcmp.ge.s32.totalorder %v288, %v320
    %vm548 = vcmp.ge.s32.totalorder %v289, %v320
    %vm549 = vcmp.ge.s32.totalorder %v290, %v320
    %vm550 = vcmp.ge.s32.totalorder %v291, %v320
    %vm551 = vcmp.ge.s32.totalorder %v292, %v320
    %vm552 = vcmp.ge.s32.totalorder %v293, %v320
    %vm553 = vcmp.ge.s32.totalorder %v294, %v320
    %vm554 = vcmp.ge.s32.totalorder %v295, %v320
    %vm555 = vcmp.ge.s32.totalorder %v296, %v320
    %vm556 = vcmp.ge.s32.totalorder %v297, %v320
    %vm557 = vcmp.ge.s32.totalorder %v298, %v320
    %vm558 = vcmp.ge.s32.totalorder %v299, %v320
    %vm559 = vcmp.ge.s32.totalorder %v300, %v320
    %vm560 = vcmp.ge.s32.totalorder %v301, %v320
    %vm561 = vcmp.ge.s32.totalorder %v302, %v320
    %vm562 = vcmp.ge.s32.totalorder %v303, %v320
    %vm563 = vcmp.ge.s32.totalorder %v304, %v320
    %vm564 = vcmp.ge.s32.totalorder %v305, %v320
    %vm565 = vcmp.ge.s32.totalorder %v306, %v320
    %vm566 = vcmp.ge.s32.totalorder %v307, %v320
    %vm567 = vcmp.ge.s32.totalorder %v308, %v320
    %vm568 = vcmp.ge.s32.totalorder %v309, %v320
    %vm569 = vcmp.ge.s32.totalorder %v310, %v320
    %vm570 = vcmp.ge.s32.totalorder %v311, %v320
    %vm571 = vcmp.ge.s32.totalorder %v312, %v320
    %vm572 = vcmp.ge.s32.totalorder %v313, %v320
    %vm573 = vcmp.ge.s32.totalorder %v314, %v320
    %vm574 = vcmp.ge.s32.totalorder %v315, %v320
    %vm575 = vcmp.ge.s32.totalorder %v316, %v320
    %vm576 = vcmp.ge.s32.totalorder %v317, %v320
    %v577 = vadd.s32 %v320, 16
    %vm578 = vcmp.lt.s32.totalorder %v62, %v577
    %vm579 = vcmp.lt.s32.totalorder %v63, %v577
    %vm580 = vcmp.lt.s32.totalorder %v64, %v577
    %vm581 = vcmp.lt.s32.totalorder %v65, %v577
    %vm582 = vcmp.lt.s32.totalorder %v66, %v577
    %vm583 = vcmp.lt.s32.totalorder %v67, %v577
    %vm584 = vcmp.lt.s32.totalorder %v68, %v577
    %vm585 = vcmp.lt.s32.totalorder %v69, %v577
    %vm586 = vcmp.lt.s32.totalorder %v70, %v577
    %vm587 = vcmp.lt.s32.totalorder %v71, %v577
    %vm588 = vcmp.lt.s32.totalorder %v72, %v577
    %vm589 = vcmp.lt.s32.totalorder %v73, %v577
    %vm590 = vcmp.lt.s32.totalorder %v74, %v577
    %vm591 = vcmp.lt.s32.totalorder %v75, %v577
    %vm592 = vcmp.lt.s32.totalorder %v76, %v577
    %vm593 = vcmp.lt.s32.totalorder %v77, %v577
    %vm594 = vcmp.lt.s32.totalorder %v78, %v577
    %vm595 = vcmp.lt.s32.totalorder %v79, %v577
    %vm596 = vcmp.lt.s32.totalorder %v80, %v577
    %vm597 = vcmp.lt.s32.totalorder %v81, %v577
    %vm598 = vcmp.lt.s32.totalorder %v82, %v577
    %vm599 = vcmp.lt.s32.totalorder %v83, %v577
    %vm600 = vcmp.lt.s32.totalorder %v84, %v577
    %vm601 = vcmp.lt.s32.totalorder %v85, %v577
    %vm602 = vcmp.lt.s32.totalorder %v86, %v577
    %vm603 = vcmp.lt.s32.totalorder %v87, %v577
    %vm604 = vcmp.lt.s32.totalorder %v88, %v577
    %vm605 = vcmp.lt.s32.totalorder %v89, %v577
    %vm606 = vcmp.lt.s32.totalorder %v90, %v577
    %vm607 = vcmp.lt.s32.totalorder %v91, %v577
    %vm608 = vcmp.lt.s32.totalorder %v92, %v577
    %vm609 = vcmp.lt.s32.totalorder %v93, %v577
    %vm610 = vcmp.lt.s32.totalorder %v94, %v577
    %vm611 = vcmp.lt.s32.totalorder %v95, %v577
    %vm612 = vcmp.lt.s32.totalorder %v96, %v577
    %vm613 = vcmp.lt.s32.totalorder %v97, %v577
    %vm614 = vcmp.lt.s32.totalorder %v98, %v577
    %vm615 = vcmp.lt.s32.totalorder %v99, %v577
    %vm616 = vcmp.lt.s32.totalorder %v100, %v577
    %vm617 = vcmp.lt.s32.totalorder %v101, %v577
    %vm618 = vcmp.lt.s32.totalorder %v102, %v577
    %vm619 = vcmp.lt.s32.totalorder %v103, %v577
    %vm620 = vcmp.lt.s32.totalorder %v104, %v577
    %vm621 = vcmp.lt.s32.totalorder %v105, %v577
    %vm622 = vcmp.lt.s32.totalorder %v106, %v577
    %vm623 = vcmp.lt.s32.totalorder %v107, %v577
    %vm624 = vcmp.lt.s32.totalorder %v108, %v577
    %vm625 = vcmp.lt.s32.totalorder %v109, %v577
    %vm626 = vcmp.lt.s32.totalorder %v110, %v577
    %vm627 = vcmp.lt.s32.totalorder %v111, %v577
    %vm628 = vcmp.lt.s32.totalorder %v112, %v577
    %vm629 = vcmp.lt.s32.totalorder %v113, %v577
    %vm630 = vcmp.lt.s32.totalorder %v114, %v577
    %vm631 = vcmp.lt.s32.totalorder %v115, %v577
    %vm632 = vcmp.lt.s32.totalorder %v116, %v577
    %vm633 = vcmp.lt.s32.totalorder %v117, %v577
    %vm634 = vcmp.lt.s32.totalorder %v118, %v577
    %vm635 = vcmp.lt.s32.totalorder %v119, %v577
    %vm636 = vcmp.lt.s32.totalorder %v120, %v577
    %vm637 = vcmp.lt.s32.totalorder %v121, %v577
    %vm638 = vcmp.lt.s32.totalorder %v122, %v577
    %vm639 = vcmp.lt.s32.totalorder %v123, %v577
    %vm640 = vcmp.lt.s32.totalorder %v124, %v577
    %vm641 = vcmp.lt.s32.totalorder %v125, %v577
    %vm642 = vcmp.lt.s32.totalorder %v126, %v577
    %vm643 = vcmp.lt.s32.totalorder %v127, %v577
    %vm644 = vcmp.lt.s32.totalorder %v128, %v577
    %vm645 = vcmp.lt.s32.totalorder %v129, %v577
    %vm646 = vcmp.lt.s32.totalorder %v130, %v577
    %vm647 = vcmp.lt.s32.totalorder %v131, %v577
    %vm648 = vcmp.lt.s32.totalorder %v132, %v577
    %vm649 = vcmp.lt.s32.totalorder %v133, %v577
    %vm650 = vcmp.lt.s32.totalorder %v134, %v577
    %vm651 = vcmp.lt.s32.totalorder %v135, %v577
    %vm652 = vcmp.lt.s32.totalorder %v136, %v577
    %vm653 = vcmp.lt.s32.totalorder %v137, %v577
    %vm654 = vcmp.lt.s32.totalorder %v138, %v577
    %vm655 = vcmp.lt.s32.totalorder %v139, %v577
    %vm656 = vcmp.lt.s32.totalorder %v140, %v577
    %vm657 = vcmp.lt.s32.totalorder %v141, %v577
    %vm658 = vcmp.lt.s32.totalorder %v142, %v577
    %vm659 = vcmp.lt.s32.totalorder %v143, %v577
    %vm660 = vcmp.lt.s32.totalorder %v144, %v577
    %vm661 = vcmp.lt.s32.totalorder %v145, %v577
    %vm662 = vcmp.lt.s32.totalorder %v146, %v577
    %vm663 = vcmp.lt.s32.totalorder %v147, %v577
    %vm664 = vcmp.lt.s32.totalorder %v148, %v577
    %vm665 = vcmp.lt.s32.totalorder %v149, %v577
    %vm666 = vcmp.lt.s32.totalorder %v150, %v577
    %vm667 = vcmp.lt.s32.totalorder %v151, %v577
    %vm668 = vcmp.lt.s32.totalorder %v152, %v577
    %vm669 = vcmp.lt.s32.totalorder %v153, %v577
    %vm670 = vcmp.lt.s32.totalorder %v154, %v577
    %vm671 = vcmp.lt.s32.totalorder %v155, %v577
    %vm672 = vcmp.lt.s32.totalorder %v156, %v577
    %vm673 = vcmp.lt.s32.totalorder %v157, %v577
    %vm674 = vcmp.lt.s32.totalorder %v158, %v577
    %vm675 = vcmp.lt.s32.totalorder %v159, %v577
    %vm676 = vcmp.lt.s32.totalorder %v160, %v577
    %vm677 = vcmp.lt.s32.totalorder %v161, %v577
    %vm678 = vcmp.lt.s32.totalorder %v162, %v577
    %vm679 = vcmp.lt.s32.totalorder %v163, %v577
    %vm680 = vcmp.lt.s32.totalorder %v164, %v577
    %vm681 = vcmp.lt.s32.totalorder %v165, %v577
    %vm682 = vcmp.lt.s32.totalorder %v166, %v577
    %vm683 = vcmp.lt.s32.totalorder %v167, %v577
    %vm684 = vcmp.lt.s32.totalorder %v168, %v577
    %vm685 = vcmp.lt.s32.totalorder %v169, %v577
    %vm686 = vcmp.lt.s32.totalorder %v170, %v577
    %vm687 = vcmp.lt.s32.totalorder %v171, %v577
    %vm688 = vcmp.lt.s32.totalorder %v172, %v577
    %vm689 = vcmp.lt.s32.totalorder %v173, %v577
    %vm690 = vcmp.lt.s32.totalorder %v174, %v577
    %vm691 = vcmp.lt.s32.totalorder %v175, %v577
    %vm692 = vcmp.lt.s32.totalorder %v176, %v577
    %vm693 = vcmp.lt.s32.totalorder %v177, %v577
    %vm694 = vcmp.lt.s32.totalorder %v178, %v577
    %vm695 = vcmp.lt.s32.totalorder %v179, %v577
    %vm696 = vcmp.lt.s32.totalorder %v180, %v577
    %vm697 = vcmp.lt.s32.totalorder %v181, %v577
    %vm698 = vcmp.lt.s32.totalorder %v182, %v577
    %vm699 = vcmp.lt.s32.totalorder %v183, %v577
    %vm700 = vcmp.lt.s32.totalorder %v184, %v577
    %vm701 = vcmp.lt.s32.totalorder %v185, %v577
    %vm702 = vcmp.lt.s32.totalorder %v186, %v577
    %vm703 = vcmp.lt.s32.totalorder %v187, %v577
    %vm704 = vcmp.lt.s32.totalorder %v188, %v577
    %vm705 = vcmp.lt.s32.totalorder %v189, %v577
    %vm706 = vcmp.lt.s32.totalorder %v190, %v577
    %vm707 = vcmp.lt.s32.totalorder %v191, %v577
    %vm708 = vcmp.lt.s32.totalorder %v192, %v577
    %vm709 = vcmp.lt.s32.totalorder %v193, %v577
    %vm710 = vcmp.lt.s32.totalorder %v194, %v577
    %vm711 = vcmp.lt.s32.totalorder %v195, %v577
    %vm712 = vcmp.lt.s32.totalorder %v196, %v577
    %vm713 = vcmp.lt.s32.totalorder %v197, %v577
    %vm714 = vcmp.lt.s32.totalorder %v198, %v577
    %vm715 = vcmp.lt.s32.totalorder %v199, %v577
    %vm716 = vcmp.lt.s32.totalorder %v200, %v577
    %vm717 = vcmp.lt.s32.totalorder %v201, %v577
    %vm718 = vcmp.lt.s32.totalorder %v202, %v577
    %vm719 = vcmp.lt.s32.totalorder %v203, %v577
    %vm720 = vcmp.lt.s32.totalorder %v204, %v577
    %vm721 = vcmp.lt.s32.totalorder %v205, %v577
    %vm722 = vcmp.lt.s32.totalorder %v206, %v577
    %vm723 = vcmp.lt.s32.totalorder %v207, %v577
    %vm724 = vcmp.lt.s32.totalorder %v208, %v577
    %vm725 = vcmp.lt.s32.totalorder %v209, %v577
    %vm726 = vcmp.lt.s32.totalorder %v210, %v577
    %vm727 = vcmp.lt.s32.totalorder %v211, %v577
    %vm728 = vcmp.lt.s32.totalorder %v212, %v577
    %vm729 = vcmp.lt.s32.totalorder %v213, %v577
    %vm730 = vcmp.lt.s32.totalorder %v214, %v577
    %vm731 = vcmp.lt.s32.totalorder %v215, %v577
    %vm732 = vcmp.lt.s32.totalorder %v216, %v577
    %vm733 = vcmp.lt.s32.totalorder %v217, %v577
    %vm734 = vcmp.lt.s32.totalorder %v218, %v577
    %vm735 = vcmp.lt.s32.totalorder %v219, %v577
    %vm736 = vcmp.lt.s32.totalorder %v220, %v577
    %vm737 = vcmp.lt.s32.totalorder %v221, %v577
    %vm738 = vcmp.lt.s32.totalorder %v222, %v577
    %vm739 = vcmp.lt.s32.totalorder %v223, %v577
    %vm740 = vcmp.lt.s32.totalorder %v224, %v577
    %vm741 = vcmp.lt.s32.totalorder %v225, %v577
    %vm742 = vcmp.lt.s32.totalorder %v226, %v577
    %vm743 = vcmp.lt.s32.totalorder %v227, %v577
    %vm744 = vcmp.lt.s32.totalorder %v228, %v577
    %vm745 = vcmp.lt.s32.totalorder %v229, %v577
    %vm746 = vcmp.lt.s32.totalorder %v230, %v577
    %vm747 = vcmp.lt.s32.totalorder %v231, %v577
    %vm748 = vcmp.lt.s32.totalorder %v232, %v577
    %vm749 = vcmp.lt.s32.totalorder %v233, %v577
    %vm750 = vcmp.lt.s32.totalorder %v234, %v577
    %vm751 = vcmp.lt.s32.totalorder %v235, %v577
    %vm752 = vcmp.lt.s32.totalorder %v236, %v577
    %vm753 = vcmp.lt.s32.totalorder %v237, %v577
    %vm754 = vcmp.lt.s32.totalorder %v238, %v577
    %vm755 = vcmp.lt.s32.totalorder %v239, %v577
    %vm756 = vcmp.lt.s32.totalorder %v240, %v577
    %vm757 = vcmp.lt.s32.totalorder %v241, %v577
    %vm758 = vcmp.lt.s32.totalorder %v242, %v577
    %vm759 = vcmp.lt.s32.totalorder %v243, %v577
    %vm760 = vcmp.lt.s32.totalorder %v244, %v577
    %vm761 = vcmp.lt.s32.totalorder %v245, %v577
    %vm762 = vcmp.lt.s32.totalorder %v246, %v577
    %vm763 = vcmp.lt.s32.totalorder %v247, %v577
    %vm764 = vcmp.lt.s32.totalorder %v248, %v577
    %vm765 = vcmp.lt.s32.totalorder %v249, %v577
    %vm766 = vcmp.lt.s32.totalorder %v250, %v577
    %vm767 = vcmp.lt.s32.totalorder %v251, %v577
    %vm768 = vcmp.lt.s32.totalorder %v252, %v577
    %vm769 = vcmp.lt.s32.totalorder %v253, %v577
    %vm770 = vcmp.lt.s32.totalorder %v254, %v577
    %vm771 = vcmp.lt.s32.totalorder %v255, %v577
    %vm772 = vcmp.lt.s32.totalorder %v256, %v577
    %vm773 = vcmp.lt.s32.totalorder %v257, %v577
    %vm774 = vcmp.lt.s32.totalorder %v258, %v577
    %vm775 = vcmp.lt.s32.totalorder %v259, %v577
    %vm776 = vcmp.lt.s32.totalorder %v260, %v577
    %vm777 = vcmp.lt.s32.totalorder %v261, %v577
    %vm778 = vcmp.lt.s32.totalorder %v262, %v577
    %vm779 = vcmp.lt.s32.totalorder %v263, %v577
    %vm780 = vcmp.lt.s32.totalorder %v264, %v577
    %vm781 = vcmp.lt.s32.totalorder %v265, %v577
    %vm782 = vcmp.lt.s32.totalorder %v266, %v577
    %vm783 = vcmp.lt.s32.totalorder %v267, %v577
    %vm784 = vcmp.lt.s32.totalorder %v268, %v577
    %vm785 = vcmp.lt.s32.totalorder %v269, %v577
    %vm786 = vcmp.lt.s32.totalorder %v270, %v577
    %vm787 = vcmp.lt.s32.totalorder %v271, %v577
    %vm788 = vcmp.lt.s32.totalorder %v272, %v577
    %vm789 = vcmp.lt.s32.totalorder %v273, %v577
    %vm790 = vcmp.lt.s32.totalorder %v274, %v577
    %vm791 = vcmp.lt.s32.totalorder %v275, %v577
    %vm792 = vcmp.lt.s32.totalorder %v276, %v577
    %vm793 = vcmp.lt.s32.totalorder %v277, %v577
    %vm794 = vcmp.lt.s32.totalorder %v278, %v577
    %vm795 = vcmp.lt.s32.totalorder %v279, %v577
    %vm796 = vcmp.lt.s32.totalorder %v280, %v577
    %vm797 = vcmp.lt.s32.totalorder %v281, %v577
    %vm798 = vcmp.lt.s32.totalorder %v282, %v577
    %vm799 = vcmp.lt.s32.totalorder %v283, %v577
    %vm800 = vcmp.lt.s32.totalorder %v284, %v577
    %vm801 = vcmp.lt.s32.totalorder %v285, %v577
    %vm802 = vcmp.lt.s32.totalorder %v286, %v577
    %vm803 = vcmp.lt.s32.totalorder %v287, %v577
    %vm804 = vcmp.lt.s32.totalorder %v288, %v577
    %vm805 = vcmp.lt.s32.totalorder %v289, %v577
    %vm806 = vcmp.lt.s32.totalorder %v290, %v577
    %vm807 = vcmp.lt.s32.totalorder %v291, %v577
    %vm808 = vcmp.lt.s32.totalorder %v292, %v577
    %vm809 = vcmp.lt.s32.totalorder %v293, %v577
    %vm810 = vcmp.lt.s32.totalorder %v294, %v577
    %vm811 = vcmp.lt.s32.totalorder %v295, %v577
    %vm812 = vcmp.lt.s32.totalorder %v296, %v577
    %vm813 = vcmp.lt.s32.totalorder %v297, %v577
    %vm814 = vcmp.lt.s32.totalorder %v298, %v577
    %vm815 = vcmp.lt.s32.totalorder %v299, %v577
    %vm816 = vcmp.lt.s32.totalorder %v300, %v577
    %vm817 = vcmp.lt.s32.totalorder %v301, %v577
    %vm818 = vcmp.lt.s32.totalorder %v302, %v577
    %vm819 = vcmp.lt.s32.totalorder %v303, %v577
    %vm820 = vcmp.lt.s32.totalorder %v304, %v577
    %vm821 = vcmp.lt.s32.totalorder %v305, %v577
    %vm822 = vcmp.lt.s32.totalorder %v306, %v577
    %vm823 = vcmp.lt.s32.totalorder %v307, %v577
    %vm824 = vcmp.lt.s32.totalorder %v308, %v577
    %vm825 = vcmp.lt.s32.totalorder %v309, %v577
    %vm826 = vcmp.lt.s32.totalorder %v310, %v577
    %vm827 = vcmp.lt.s32.totalorder %v311, %v577
    %vm828 = vcmp.lt.s32.totalorder %v312, %v577
    %vm829 = vcmp.lt.s32.totalorder %v313, %v577
    %vm830 = vcmp.lt.s32.totalorder %v314, %v577
    %vm831 = vcmp.lt.s32.totalorder %v315, %v577
    %vm832 = vcmp.lt.s32.totalorder %v316, %v577
    %vm833 = vcmp.lt.s32.totalorder %v317, %v577
    %vm834 = vmand %vm321, %vm578
    %vm835 = vmand %vm322, %vm579
    %vm836 = vmand %vm323, %vm580
    %vm837 = vmand %vm324, %vm581
    %vm838 = vmand %vm325, %vm582
    %vm839 = vmand %vm326, %vm583
    %vm840 = vmand %vm327, %vm584
    %vm841 = vmand %vm328, %vm585
    %vm842 = vmand %vm329, %vm586
    %vm843 = vmand %vm330, %vm587
    %vm844 = vmand %vm331, %vm588
    %vm845 = vmand %vm332, %vm589
    %vm846 = vmand %vm333, %vm590
    %vm847 = vmand %vm334, %vm591
    %vm848 = vmand %vm335, %vm592
    %vm849 = vmand %vm336, %vm593
    %vm850 = vmand %vm337, %vm594
    %vm851 = vmand %vm338, %vm595
    %vm852 = vmand %vm339, %vm596
    %vm853 = vmand %vm340, %vm597
    %vm854 = vmand %vm341, %vm598
    %vm855 = vmand %vm342, %vm599
    %vm856 = vmand %vm343, %vm600
    %vm857 = vmand %vm344, %vm601
    %vm858 = vmand %vm345, %vm602
    %vm859 = vmand %vm346, %vm603
    %vm860 = vmand %vm347, %vm604
    %vm861 = vmand %vm348, %vm605
    %vm862 = vmand %vm349, %vm606
    %vm863 = vmand %vm350, %vm607
    %vm864 = vmand %vm351, %vm608
    %vm865 = vmand %vm352, %vm609
    %vm866 = vmand %vm353, %vm610
    %vm867 = vmand %vm354, %vm611
    %vm868 = vmand %vm355, %vm612
    %vm869 = vmand %vm356, %vm613
    %vm870 = vmand %vm357, %vm614
    %vm871 = vmand %vm358, %vm615
    %vm872 = vmand %vm359, %vm616
    %vm873 = vmand %vm360, %vm617
    %vm874 = vmand %vm361, %vm618
    %vm875 = vmand %vm362, %vm619
    %vm876 = vmand %vm363, %vm620
    %vm877 = vmand %vm364, %vm621
    %vm878 = vmand %vm365, %vm622
    %vm879 = vmand %vm366, %vm623
    %vm880 = vmand %vm367, %vm624
    %vm881 = vmand %vm368, %vm625
    %vm882 = vmand %vm369, %vm626
    %vm883 = vmand %vm370, %vm627
    %vm884 = vmand %vm371, %vm628
    %vm885 = vmand %vm372, %vm629
    %vm886 = vmand %vm373, %vm630
    %vm887 = vmand %vm374, %vm631
    %vm888 = vmand %vm375, %vm632
    %vm889 = vmand %vm376, %vm633
    %vm890 = vmand %vm377, %vm634
    %vm891 = vmand %vm378, %vm635
    %vm892 = vmand %vm379, %vm636
    %vm893 = vmand %vm380, %vm637
    %vm894 = vmand %vm381, %vm638
    %vm895 = vmand %vm382, %vm639
    %vm896 = vmand %vm383, %vm640
    %vm897 = vmand %vm384, %vm641
    %vm898 = vmand %vm385, %vm642
    %vm899 = vmand %vm386, %vm643
    %vm900 = vmand %vm387, %vm644
    %vm901 = vmand %vm388, %vm645
    %vm902 = vmand %vm389, %vm646
    %vm903 = vmand %vm390, %vm647
    %vm904 = vmand %vm391, %vm648
    %vm905 = vmand %vm392, %vm649
    %vm906 = vmand %vm393, %vm650
    %vm907 = vmand %vm394, %vm651
    %vm908 = vmand %vm395, %vm652
    %vm909 = vmand %vm396, %vm653
    %vm910 = vmand %vm397, %vm654
    %vm911 = vmand %vm398, %vm655
    %vm912 = vmand %vm399, %vm656
    %vm913 = vmand %vm400, %vm657
    %vm914 = vmand %vm401, %vm658
    %vm915 = vmand %vm402, %vm659
    %vm916 = vmand %vm403, %vm660
    %vm917 = vmand %vm404, %vm661
    %vm918 = vmand %vm405, %vm662
    %vm919 = vmand %vm406, %vm663
    %vm920 = vmand %vm407, %vm664
    %vm921 = vmand %vm408, %vm665
    %vm922 = vmand %vm409, %vm666
    %vm923 = vmand %vm410, %vm667
    %vm924 = vmand %vm411, %vm668
    %vm925 = vmand %vm412, %vm669
    %vm926 = vmand %vm413, %vm670
    %vm927 = vmand %vm414, %vm671
    %vm928 = vmand %vm415, %vm672
    %vm929 = vmand %vm416, %vm673
    %vm930 = vmand %vm417, %vm674
    %vm931 = vmand %vm418, %vm675
    %vm932 = vmand %vm419, %vm676
    %vm933 = vmand %vm420, %vm677
    %vm934 = vmand %vm421, %vm678
    %vm935 = vmand %vm422, %vm679
    %vm936 = vmand %vm423, %vm680
    %vm937 = vmand %vm424, %vm681
    %vm938 = vmand %vm425, %vm682
    %vm939 = vmand %vm426, %vm683
    %vm940 = vmand %vm427, %vm684
    %vm941 = vmand %vm428, %vm685
    %vm942 = vmand %vm429, %vm686
    %vm943 = vmand %vm430, %vm687
    %vm944 = vmand %vm431, %vm688
    %vm945 = vmand %vm432, %vm689
    %vm946 = vmand %vm433, %vm690
    %vm947 = vmand %vm434, %vm691
    %vm948 = vmand %vm435, %vm692
    %vm949 = vmand %vm436, %vm693
    %vm950 = vmand %vm437, %vm694
    %vm951 = vmand %vm438, %vm695
    %vm952 = vmand %vm439, %vm696
    %vm953 = vmand %vm440, %vm697
    %vm954 = vmand %vm441, %vm698
    %vm955 = vmand %vm442, %vm699
    %vm956 = vmand %vm443, %vm700
    %vm957 = vmand %vm444, %vm701
    %vm958 = vmand %vm445, %vm702
    %vm959 = vmand %vm446, %vm703
    %vm960 = vmand %vm447, %vm704
    %vm961 = vmand %vm448, %vm705
    %vm962 = vmand %vm449, %vm706
    %vm963 = vmand %vm450, %vm707
    %vm964 = vmand %vm451, %vm708
    %vm965 = vmand %vm452, %vm709
    %vm966 = vmand %vm453, %vm710
    %vm967 = vmand %vm454, %vm711
    %vm968 = vmand %vm455, %vm712
    %vm969 = vmand %vm456, %vm713
    %vm970 = vmand %vm457, %vm714
    %vm971 = vmand %vm458, %vm715
    %vm972 = vmand %vm459, %vm716
    %vm973 = vmand %vm460, %vm717
    %vm974 = vmand %vm461, %vm718
    %vm975 = vmand %vm462, %vm719
    %vm976 = vmand %vm463, %vm720
    %vm977 = vmand %vm464, %vm721
    %vm978 = vmand %vm465, %vm722
    %vm979 = vmand %vm466, %vm723
    %vm980 = vmand %vm467, %vm724
    %vm981 = vmand %vm468, %vm725
    %vm982 = vmand %vm469, %vm726
    %vm983 = vmand %vm470, %vm727
    %vm984 = vmand %vm471, %vm728
    %vm985 = vmand %vm472, %vm729
    %vm986 = vmand %vm473, %vm730
    %vm987 = vmand %vm474, %vm731
    %vm988 = vmand %vm475, %vm732
    %vm989 = vmand %vm476, %vm733
    %vm990 = vmand %vm477, %vm734
    %vm991 = vmand %vm478, %vm735
    %vm992 = vmand %vm479, %vm736
    %vm993 = vmand %vm480, %vm737
    %vm994 = vmand %vm481, %vm738
    %vm995 = vmand %vm482, %vm739
    %vm996 = vmand %vm483, %vm740
    %vm997 = vmand %vm484, %vm741
    %vm998 = vmand %vm485, %vm742
    %vm999 = vmand %vm486, %vm743
    %vm1000 = vmand %vm487, %vm744
    %vm1001 = vmand %vm488, %vm745
    %vm1002 = vmand %vm489, %vm746
    %vm1003 = vmand %vm490, %vm747
    %vm1004 = vmand %vm491, %vm748
    %vm1005 = vmand %vm492, %vm749
    %vm1006 = vmand %vm493, %vm750
    %vm1007 = vmand %vm494, %vm751
    %vm1008 = vmand %vm495, %vm752
    %vm1009 = vmand %vm496, %vm753
    %vm1010 = vmand %vm497, %vm754
    %vm1011 = vmand %vm498, %vm755
    %vm1012 = vmand %vm499, %vm756
    %vm1013 = vmand %vm500, %vm757
    %vm1014 = vmand %vm501, %vm758
    %vm1015 = vmand %vm502, %vm759
    %vm1016 = vmand %vm503, %vm760
    %vm1017 = vmand %vm504, %vm761
    %vm1018 = vmand %vm505, %vm762
    %vm1019 = vmand %vm506, %vm763
    %vm1020 = vmand %vm507, %vm764
    %vm1021 = vmand %vm508, %vm765
    %vm1022 = vmand %vm509, %vm766
    %vm1023 = vmand %vm510, %vm767
    %vm1024 = vmand %vm511, %vm768
    %vm1025 = vmand %vm512, %vm769
    %vm1026 = vmand %vm513, %vm770
    %vm1027 = vmand %vm514, %vm771
    %vm1028 = vmand %vm515, %vm772
    %vm1029 = vmand %vm516, %vm773
    %vm1030 = vmand %vm517, %vm774
    %vm1031 = vmand %vm518, %vm775
    %vm1032 = vmand %vm519, %vm776
    %vm1033 = vmand %vm520, %vm777
    %vm1034 = vmand %vm521, %vm778
    %vm1035 = vmand %vm522, %vm779
    %vm1036 = vmand %vm523, %vm780
    %vm1037 = vmand %vm524, %vm781
    %vm1038 = vmand %vm525, %vm782
    %vm1039 = vmand %vm526, %vm783
    %vm1040 = vmand %vm527, %vm784
    %vm1041 = vmand %vm528, %vm785
    %vm1042 = vmand %vm529, %vm786
    %vm1043 = vmand %vm530, %vm787
    %vm1044 = vmand %vm531, %vm788
    %vm1045 = vmand %vm532, %vm789
    %vm1046 = vmand %vm533, %vm790
    %vm1047 = vmand %vm534, %vm791
    %vm1048 = vmand %vm535, %vm792
    %vm1049 = vmand %vm536, %vm793
    %vm1050 = vmand %vm537, %vm794
    %vm1051 = vmand %vm538, %vm795
    %vm1052 = vmand %vm539, %vm796
    %vm1053 = vmand %vm540, %vm797
    %vm1054 = vmand %vm541, %vm798
    %vm1055 = vmand %vm542, %vm799
    %vm1056 = vmand %vm543, %vm800
    %vm1057 = vmand %vm544, %vm801
    %vm1058 = vmand %vm545, %vm802
    %vm1059 = vmand %vm546, %vm803
    %vm1060 = vmand %vm547, %vm804
    %vm1061 = vmand %vm548, %vm805
    %vm1062 = vmand %vm549, %vm806
    %vm1063 = vmand %vm550, %vm807
    %vm1064 = vmand %vm551, %vm808
    %vm1065 = vmand %vm552, %vm809
    %vm1066 = vmand %vm553, %vm810
    %vm1067 = vmand %vm554, %vm811
    %vm1068 = vmand %vm555, %vm812
    %vm1069 = vmand %vm556, %vm813
    %vm1070 = vmand %vm557, %vm814
    %vm1071 = vmand %vm558, %vm815
    %vm1072 = vmand %vm559, %vm816
    %vm1073 = vmand %vm560, %vm817
    %vm1074 = vmand %vm561, %vm818
    %vm1075 = vmand %vm562, %vm819
    %vm1076 = vmand %vm563, %vm820
    %vm1077 = vmand %vm564, %vm821
    %vm1078 = vmand %vm565, %vm822
    %vm1079 = vmand %vm566, %vm823
    %vm1080 = vmand %vm567, %vm824
    %vm1081 = vmand %vm568, %vm825
    %vm1082 = vmand %vm569, %vm826
    %vm1083 = vmand %vm570, %vm827
    %vm1084 = vmand %vm571, %vm828
    %vm1085 = vmand %vm572, %vm829
    %vm1086 = vmand %vm573, %vm830
    %vm1087 = vmand %vm574, %vm831
    %vm1088 = vmand %vm575, %vm832
    %vm1089 = vmand %vm576, %vm833
    %v1090 = vsel %vm834, 1, 0
    %v1091 = vsel %vm835, 1, 0
    %v1092 = vsel %vm836, 1, 0
    %v1093 = vsel %vm837, 1, 0
    %v1094 = vsel %vm838, 1, 0
    %v1095 = vsel %vm839, 1, 0
    %v1096 = vsel %vm840, 1, 0
    %v1097 = vsel %vm841, 1, 0
    %v1098 = vsel %vm842, 1, 0
    %v1099 = vsel %vm843, 1, 0
    %v1100 = vsel %vm844, 1, 0
    %v1101 = vsel %vm845, 1, 0
    %v1102 = vsel %vm846, 1, 0
    %v1103 = vsel %vm847, 1, 0
    %v1104 = vsel %vm848, 1, 0
    %v1105 = vsel %vm849, 1, 0
    %v1106 = vsel %vm850, 1, 0
    %v1107 = vsel %vm851, 1, 0
    %v1108 = vsel %vm852, 1, 0
    %v1109 = vsel %vm853, 1, 0
    %v1110 = vsel %vm854, 1, 0
    %v1111 = vsel %vm855, 1, 0
    %v1112 = vsel %vm856, 1, 0
    %v1113 = vsel %vm857, 1, 0
    %v1114 = vsel %vm858, 1, 0
    %v1115 = vsel %vm859, 1, 0
    %v1116 = vsel %vm860, 1, 0
    %v1117 = vsel %vm861, 1, 0
    %v1118 = vsel %vm862, 1, 0
    %v1119 = vsel %vm863, 1, 0
    %v1120 = vsel %vm864, 1, 0
    %v1121 = vsel %vm865, 1, 0
    %v1122 = vsel %vm866, 1, 0
    %v1123 = vsel %vm867, 1, 0
    %v1124 = vsel %vm868, 1, 0
    %v1125 = vsel %vm869, 1, 0
    %v1126 = vsel %vm870, 1, 0
    %v1127 = vsel %vm871, 1, 0
    %v1128 = vsel %vm872, 1, 0
    %v1129 = vsel %vm873, 1, 0
    %v1130 = vsel %vm874, 1, 0
    %v1131 = vsel %vm875, 1, 0
    %v1132 = vsel %vm876, 1, 0
    %v1133 = vsel %vm877, 1, 0
    %v1134 = vsel %vm878, 1, 0
    %v1135 = vsel %vm879, 1, 0
    %v1136 = vsel %vm880, 1, 0
    %v1137 = vsel %vm881, 1, 0
    %v1138 = vsel %vm882, 1, 0
    %v1139 = vsel %vm883, 1, 0
    %v1140 = vsel %vm884, 1, 0
    %v1141 = vsel %vm885, 1, 0
    %v1142 = vsel %vm886, 1, 0
    %v1143 = vsel %vm887, 1, 0
    %v1144 = vsel %vm888, 1, 0
    %v1145 = vsel %vm889, 1, 0
    %v1146 = vsel %vm890, 1, 0
    %v1147 = vsel %vm891, 1, 0
    %v1148 = vsel %vm892, 1, 0
    %v1149 = vsel %vm893, 1, 0
    %v1150 = vsel %vm894, 1, 0
    %v1151 = vsel %vm895, 1, 0
    %v1152 = vsel %vm896, 1, 0
    %v1153 = vsel %vm897, 1, 0
    %v1154 = vsel %vm898, 1, 0
    %v1155 = vsel %vm899, 1, 0
    %v1156 = vsel %vm900, 1, 0
    %v1157 = vsel %vm901, 1, 0
    %v1158 = vsel %vm902, 1, 0
    %v1159 = vsel %vm903, 1, 0
    %v1160 = vsel %vm904, 1, 0
    %v1161 = vsel %vm905, 1, 0
    %v1162 = vsel %vm906, 1, 0
    %v1163 = vsel %vm907, 1, 0
    %v1164 = vsel %vm908, 1, 0
    %v1165 = vsel %vm909, 1, 0
    %v1166 = vsel %vm910, 1, 0
    %v1167 = vsel %vm911, 1, 0
    %v1168 = vsel %vm912, 1, 0
    %v1169 = vsel %vm913, 1, 0
    %v1170 = vsel %vm914, 1, 0
    %v1171 = vsel %vm915, 1, 0
    %v1172 = vsel %vm916, 1, 0
    %v1173 = vsel %vm917, 1, 0
    %v1174 = vsel %vm918, 1, 0
    %v1175 = vsel %vm919, 1, 0
    %v1176 = vsel %vm920, 1, 0
    %v1177 = vsel %vm921, 1, 0
    %v1178 = vsel %vm922, 1, 0
    %v1179 = vsel %vm923, 1, 0
    %v1180 = vsel %vm924, 1, 0
    %v1181 = vsel %vm925, 1, 0
    %v1182 = vsel %vm926, 1, 0
    %v1183 = vsel %vm927, 1, 0
    %v1184 = vsel %vm928, 1, 0
    %v1185 = vsel %vm929, 1, 0
    %v1186 = vsel %vm930, 1, 0
    %v1187 = vsel %vm931, 1, 0
    %v1188 = vsel %vm932, 1, 0
    %v1189 = vsel %vm933, 1, 0
    %v1190 = vsel %vm934, 1, 0
    %v1191 = vsel %vm935, 1, 0
    %v1192 = vsel %vm936, 1, 0
    %v1193 = vsel %vm937, 1, 0
    %v1194 = vsel %vm938, 1, 0
    %v1195 = vsel %vm939, 1, 0
    %v1196 = vsel %vm940, 1, 0
    %v1197 = vsel %vm941, 1, 0
    %v1198 = vsel %vm942, 1, 0
    %v1199 = vsel %vm943, 1, 0
    %v1200 = vsel %vm944, 1, 0
    %v1201 = vsel %vm945, 1, 0
    %v1202 = vsel %vm946, 1, 0
    %v1203 = vsel %vm947, 1, 0
    %v1204 = vsel %vm948, 1, 0
    %v1205 = vsel %vm949, 1, 0
    %v1206 = vsel %vm950, 1, 0
    %v1207 = vsel %vm951, 1, 0
    %v1208 = vsel %vm952, 1, 0
    %v1209 = vsel %vm953, 1, 0
    %v1210 = vsel %vm954, 1, 0
    %v1211 = vsel %vm955, 1, 0
    %v1212 = vsel %vm956, 1, 0
    %v1213 = vsel %vm957, 1, 0
    %v1214 = vsel %vm958, 1, 0
    %v1215 = vsel %vm959, 1, 0
    %v1216 = vsel %vm960, 1, 0
    %v1217 = vsel %vm961, 1, 0
    %v1218 = vsel %vm962, 1, 0
    %v1219 = vsel %vm963, 1, 0
    %v1220 = vsel %vm964, 1, 0
    %v1221 = vsel %vm965, 1, 0
    %v1222 = vsel %vm966, 1, 0
    %v1223 = vsel %vm967, 1, 0
    %v1224 = vsel %vm968, 1, 0
    %v1225 = vsel %vm969, 1, 0
    %v1226 = vsel %vm970, 1, 0
    %v1227 = vsel %vm971, 1, 0
    %v1228 = vsel %vm972, 1, 0
    %v1229 = vsel %vm973, 1, 0
    %v1230 = vsel %vm974, 1, 0
    %v1231 = vsel %vm975, 1, 0
    %v1232 = vsel %vm976, 1, 0
    %v1233 = vsel %vm977, 1, 0
    %v1234 = vsel %vm978, 1, 0
    %v1235 = vsel %vm979, 1, 0
    %v1236 = vsel %vm980, 1, 0
    %v1237 = vsel %vm981, 1, 0
    %v1238 = vsel %vm982, 1, 0
    %v1239 = vsel %vm983, 1, 0
    %v1240 = vsel %vm984, 1, 0
    %v1241 = vsel %vm985, 1, 0
    %v1242 = vsel %vm986, 1, 0
    %v1243 = vsel %vm987, 1, 0
    %v1244 = vsel %vm988, 1, 0
    %v1245 = vsel %vm989, 1, 0
    %v1246 = vsel %vm990, 1, 0
    %v1247 = vsel %vm991, 1, 0
    %v1248 = vsel %vm992, 1, 0
    %v1249 = vsel %vm993, 1, 0
    %v1250 = vsel %vm994, 1, 0
    %v1251 = vsel %vm995, 1, 0
    %v1252 = vsel %vm996, 1, 0
    %v1253 = vsel %vm997, 1, 0
    %v1254 = vsel %vm998, 1, 0
    %v1255 = vsel %vm999, 1, 0
    %v1256 = vsel %vm1000, 1, 0
    %v1257 = vsel %vm1001, 1, 0
    %v1258 = vsel %vm1002, 1, 0
    %v1259 = vsel %vm1003, 1, 0
    %v1260 = vsel %vm1004, 1, 0
    %v1261 = vsel %vm1005, 1, 0
    %v1262 = vsel %vm1006, 1, 0
    %v1263 = vsel %vm1007, 1, 0
    %v1264 = vsel %vm1008, 1, 0
    %v1265 = vsel %vm1009, 1, 0
    %v1266 = vsel %vm1010, 1, 0
    %v1267 = vsel %vm1011, 1, 0
    %v1268 = vsel %vm1012, 1, 0
    %v1269 = vsel %vm1013, 1, 0
    %v1270 = vsel %vm1014, 1, 0
    %v1271 = vsel %vm1015, 1, 0
    %v1272 = vsel %vm1016, 1, 0
    %v1273 = vsel %vm1017, 1, 0
    %v1274 = vsel %vm1018, 1, 0
    %v1275 = vsel %vm1019, 1, 0
    %v1276 = vsel %vm1020, 1, 0
    %v1277 = vsel %vm1021, 1, 0
    %v1278 = vsel %vm1022, 1, 0
    %v1279 = vsel %vm1023, 1, 0
    %v1280 = vsel %vm1024, 1, 0
    %v1281 = vsel %vm1025, 1, 0
    %v1282 = vsel %vm1026, 1, 0
    %v1283 = vsel %vm1027, 1, 0
    %v1284 = vsel %vm1028, 1, 0
    %v1285 = vsel %vm1029, 1, 0
    %v1286 = vsel %vm1030, 1, 0
    %v1287 = vsel %vm1031, 1, 0
    %v1288 = vsel %vm1032, 1, 0
    %v1289 = vsel %vm1033, 1, 0
    %v1290 = vsel %vm1034, 1, 0
    %v1291 = vsel %vm1035, 1, 0
    %v1292 = vsel %vm1036, 1, 0
    %v1293 = vsel %vm1037, 1, 0
    %v1294 = vsel %vm1038, 1, 0
    %v1295 = vsel %vm1039, 1, 0
    %v1296 = vsel %vm1040, 1, 0
    %v1297 = vsel %vm1041, 1, 0
    %v1298 = vsel %vm1042, 1, 0
    %v1299 = vsel %vm1043, 1, 0
    %v1300 = vsel %vm1044, 1, 0
    %v1301 = vsel %vm1045, 1, 0
    %v1302 = vsel %vm1046, 1, 0
    %v1303 = vsel %vm1047, 1, 0
    %v1304 = vsel %vm1048, 1, 0
    %v1305 = vsel %vm1049, 1, 0
    %v1306 = vsel %vm1050, 1, 0
    %v1307 = vsel %vm1051, 1, 0
    %v1308 = vsel %vm1052, 1, 0
    %v1309 = vsel %vm1053, 1, 0
    %v1310 = vsel %vm1054, 1, 0
    %v1311 = vsel %vm1055, 1, 0
    %v1312 = vsel %vm1056, 1, 0
    %v1313 = vsel %vm1057, 1, 0
    %v1314 = vsel %vm1058, 1, 0
    %v1315 = vsel %vm1059, 1, 0
    %v1316 = vsel %vm1060, 1, 0
    %v1317 = vsel %vm1061, 1, 0
    %v1318 = vsel %vm1062, 1, 0
    %v1319 = vsel %vm1063, 1, 0
    %v1320 = vsel %vm1064, 1, 0
    %v1321 = vsel %vm1065, 1, 0
    %v1322 = vsel %vm1066, 1, 0
    %v1323 = vsel %vm1067, 1, 0
    %v1324 = vsel %vm1068, 1, 0
    %v1325 = vsel %vm1069, 1, 0
    %v1326 = vsel %vm1070, 1, 0
    %v1327 = vsel %vm1071, 1, 0
    %v1328 = vsel %vm1072, 1, 0
    %v1329 = vsel %vm1073, 1, 0
    %v1330 = vsel %vm1074, 1, 0
    %v1331 = vsel %vm1075, 1, 0
    %v1332 = vsel %vm1076, 1, 0
    %v1333 = vsel %vm1077, 1, 0
    %v1334 = vsel %vm1078, 1, 0
    %v1335 = vsel %vm1079, 1, 0
    %v1336 = vsel %vm1080, 1, 0
    %v1337 = vsel %vm1081, 1, 0
    %v1338 = vsel %vm1082, 1, 0
    %v1339 = vsel %vm1083, 1, 0
    %v1340 = vsel %vm1084, 1, 0
    %v1341 = vsel %vm1085, 1, 0
    %v1342 = vsel %vm1086, 1, 0
    %v1343 = vsel %vm1087, 1, 0
    %v1344 = vsel %vm1088, 1, 0
    %v1345 = vsel %vm1089, 1, 0
    %v1346 = vcvt.s32.f32 %v1090
    %v1347 = vcvt.s32.f32 %v1091
    %v1348 = vcvt.s32.f32 %v1092
    %v1349 = vcvt.s32.f32 %v1093
    %v1350 = vcvt.s32.f32 %v1094
    %v1351 = vcvt.s32.f32 %v1095
    %v1352 = vcvt.s32.f32 %v1096
    %v1353 = vcvt.s32.f32 %v1097
    %v1354 = vcvt.s32.f32 %v1098
    %v1355 = vcvt.s32.f32 %v1099
    %v1356 = vcvt.s32.f32 %v1100
    %v1357 = vcvt.s32.f32 %v1101
    %v1358 = vcvt.s32.f32 %v1102
    %v1359 = vcvt.s32.f32 %v1103
    %v1360 = vcvt.s32.f32 %v1104
    %v1361 = vcvt.s32.f32 %v1105
    %v1362 = vcvt.s32.f32 %v1106
    %v1363 = vcvt.s32.f32 %v1107
    %v1364 = vcvt.s32.f32 %v1108
    %v1365 = vcvt.s32.f32 %v1109
    %v1366 = vcvt.s32.f32 %v1110
    %v1367 = vcvt.s32.f32 %v1111
    %v1368 = vcvt.s32.f32 %v1112
    %v1369 = vcvt.s32.f32 %v1113
    %v1370 = vcvt.s32.f32 %v1114
    %v1371 = vcvt.s32.f32 %v1115
    %v1372 = vcvt.s32.f32 %v1116
    %v1373 = vcvt.s32.f32 %v1117
    %v1374 = vcvt.s32.f32 %v1118
    %v1375 = vcvt.s32.f32 %v1119
    %v1376 = vcvt.s32.f32 %v1120
    %v1377 = vcvt.s32.f32 %v1121
    %v1378 = vcvt.s32.f32 %v1122
    %v1379 = vcvt.s32.f32 %v1123
    %v1380 = vcvt.s32.f32 %v1124
    %v1381 = vcvt.s32.f32 %v1125
    %v1382 = vcvt.s32.f32 %v1126
    %v1383 = vcvt.s32.f32 %v1127
    %v1384 = vcvt.s32.f32 %v1128
    %v1385 = vcvt.s32.f32 %v1129
    %v1386 = vcvt.s32.f32 %v1130
    %v1387 = vcvt.s32.f32 %v1131
    %v1388 = vcvt.s32.f32 %v1132
    %v1389 = vcvt.s32.f32 %v1133
    %v1390 = vcvt.s32.f32 %v1134
    %v1391 = vcvt.s32.f32 %v1135
    %v1392 = vcvt.s32.f32 %v1136
    %v1393 = vcvt.s32.f32 %v1137
    %v1394 = vcvt.s32.f32 %v1138
    %v1395 = vcvt.s32.f32 %v1139
    %v1396 = vcvt.s32.f32 %v1140
    %v1397 = vcvt.s32.f32 %v1141
    %v1398 = vcvt.s32.f32 %v1142
    %v1399 = vcvt.s32.f32 %v1143
    %v1400 = vcvt.s32.f32 %v1144
    %v1401 = vcvt.s32.f32 %v1145
    %v1402 = vcvt.s32.f32 %v1146
    %v1403 = vcvt.s32.f32 %v1147
    %v1404 = vcvt.s32.f32 %v1148
    %v1405 = vcvt.s32.f32 %v1149
    %v1406 = vcvt.s32.f32 %v1150
    %v1407 = vcvt.s32.f32 %v1151
    %v1408 = vcvt.s32.f32 %v1152
    %v1409 = vcvt.s32.f32 %v1153
    %v1410 = vcvt.s32.f32 %v1154
    %v1411 = vcvt.s32.f32 %v1155
    %v1412 = vcvt.s32.f32 %v1156
    %v1413 = vcvt.s32.f32 %v1157
    %v1414 = vcvt.s32.f32 %v1158
    %v1415 = vcvt.s32.f32 %v1159
    %v1416 = vcvt.s32.f32 %v1160
    %v1417 = vcvt.s32.f32 %v1161
    %v1418 = vcvt.s32.f32 %v1162
    %v1419 = vcvt.s32.f32 %v1163
    %v1420 = vcvt.s32.f32 %v1164
    %v1421 = vcvt.s32.f32 %v1165
    %v1422 = vcvt.s32.f32 %v1166
    %v1423 = vcvt.s32.f32 %v1167
    %v1424 = vcvt.s32.f32 %v1168
    %v1425 = vcvt.s32.f32 %v1169
    %v1426 = vcvt.s32.f32 %v1170
    %v1427 = vcvt.s32.f32 %v1171
    %v1428 = vcvt.s32.f32 %v1172
    %v1429 = vcvt.s32.f32 %v1173
    %v1430 = vcvt.s32.f32 %v1174
    %v1431 = vcvt.s32.f32 %v1175
    %v1432 = vcvt.s32.f32 %v1176
    %v1433 = vcvt.s32.f32 %v1177
    %v1434 = vcvt.s32.f32 %v1178
    %v1435 = vcvt.s32.f32 %v1179
    %v1436 = vcvt.s32.f32 %v1180
    %v1437 = vcvt.s32.f32 %v1181
    %v1438 = vcvt.s32.f32 %v1182
    %v1439 = vcvt.s32.f32 %v1183
    %v1440 = vcvt.s32.f32 %v1184
    %v1441 = vcvt.s32.f32 %v1185
    %v1442 = vcvt.s32.f32 %v1186
    %v1443 = vcvt.s32.f32 %v1187
    %v1444 = vcvt.s32.f32 %v1188
    %v1445 = vcvt.s32.f32 %v1189
    %v1446 = vcvt.s32.f32 %v1190
    %v1447 = vcvt.s32.f32 %v1191
    %v1448 = vcvt.s32.f32 %v1192
    %v1449 = vcvt.s32.f32 %v1193
    %v1450 = vcvt.s32.f32 %v1194
    %v1451 = vcvt.s32.f32 %v1195
    %v1452 = vcvt.s32.f32 %v1196
    %v1453 = vcvt.s32.f32 %v1197
    %v1454 = vcvt.s32.f32 %v1198
    %v1455 = vcvt.s32.f32 %v1199
    %v1456 = vcvt.s32.f32 %v1200
    %v1457 = vcvt.s32.f32 %v1201
    %v1458 = vcvt.s32.f32 %v1202
    %v1459 = vcvt.s32.f32 %v1203
    %v1460 = vcvt.s32.f32 %v1204
    %v1461 = vcvt.s32.f32 %v1205
    %v1462 = vcvt.s32.f32 %v1206
    %v1463 = vcvt.s32.f32 %v1207
    %v1464 = vcvt.s32.f32 %v1208
    %v1465 = vcvt.s32.f32 %v1209
    %v1466 = vcvt.s32.f32 %v1210
    %v1467 = vcvt.s32.f32 %v1211
    %v1468 = vcvt.s32.f32 %v1212
    %v1469 = vcvt.s32.f32 %v1213
    %v1470 = vcvt.s32.f32 %v1214
    %v1471 = vcvt.s32.f32 %v1215
    %v1472 = vcvt.s32.f32 %v1216
    %v1473 = vcvt.s32.f32 %v1217
    %v1474 = vcvt.s32.f32 %v1218
    %v1475 = vcvt.s32.f32 %v1219
    %v1476 = vcvt.s32.f32 %v1220
    %v1477 = vcvt.s32.f32 %v1221
    %v1478 = vcvt.s32.f32 %v1222
    %v1479 = vcvt.s32.f32 %v1223
    %v1480 = vcvt.s32.f32 %v1224
    %v1481 = vcvt.s32.f32 %v1225
    %v1482 = vcvt.s32.f32 %v1226
    %v1483 = vcvt.s32.f32 %v1227
    %v1484 = vcvt.s32.f32 %v1228
    %v1485 = vcvt.s32.f32 %v1229
    %v1486 = vcvt.s32.f32 %v1230
    %v1487 = vcvt.s32.f32 %v1231
    %v1488 = vcvt.s32.f32 %v1232
    %v1489 = vcvt.s32.f32 %v1233
    %v1490 = vcvt.s32.f32 %v1234
    %v1491 = vcvt.s32.f32 %v1235
    %v1492 = vcvt.s32.f32 %v1236
    %v1493 = vcvt.s32.f32 %v1237
    %v1494 = vcvt.s32.f32 %v1238
    %v1495 = vcvt.s32.f32 %v1239
    %v1496 = vcvt.s32.f32 %v1240
    %v1497 = vcvt.s32.f32 %v1241
    %v1498 = vcvt.s32.f32 %v1242
    %v1499 = vcvt.s32.f32 %v1243
    %v1500 = vcvt.s32.f32 %v1244
    %v1501 = vcvt.s32.f32 %v1245
    %v1502 = vcvt.s32.f32 %v1246
    %v1503 = vcvt.s32.f32 %v1247
    %v1504 = vcvt.s32.f32 %v1248
    %v1505 = vcvt.s32.f32 %v1249
    %v1506 = vcvt.s32.f32 %v1250
    %v1507 = vcvt.s32.f32 %v1251
    %v1508 = vcvt.s32.f32 %v1252
    %v1509 = vcvt.s32.f32 %v1253
    %v1510 = vcvt.s32.f32 %v1254
    %v1511 = vcvt.s32.f32 %v1255
    %v1512 = vcvt.s32.f32 %v1256
    %v1513 = vcvt.s32.f32 %v1257
    %v1514 = vcvt.s32.f32 %v1258
    %v1515 = vcvt.s32.f32 %v1259
    %v1516 = vcvt.s32.f32 %v1260
    %v1517 = vcvt.s32.f32 %v1261
    %v1518 = vcvt.s32.f32 %v1262
    %v1519 = vcvt.s32.f32 %v1263
    %v1520 = vcvt.s32.f32 %v1264
    %v1521 = vcvt.s32.f32 %v1265
    %v1522 = vcvt.s32.f32 %v1266
    %v1523 = vcvt.s32.f32 %v1267
    %v1524 = vcvt.s32.f32 %v1268
    %v1525 = vcvt.s32.f32 %v1269
    %v1526 = vcvt.s32.f32 %v1270
    %v1527 = vcvt.s32.f32 %v1271
    %v1528 = vcvt.s32.f32 %v1272
    %v1529 = vcvt.s32.f32 %v1273
    %v1530 = vcvt.s32.f32 %v1274
    %v1531 = vcvt.s32.f32 %v1275
    %v1532 = vcvt.s32.f32 %v1276
    %v1533 = vcvt.s32.f32 %v1277
    %v1534 = vcvt.s32.f32 %v1278
    %v1535 = vcvt.s32.f32 %v1279
    %v1536 = vcvt.s32.f32 %v1280
    %v1537 = vcvt.s32.f32 %v1281
    %v1538 = vcvt.s32.f32 %v1282
    %v1539 = vcvt.s32.f32 %v1283
    %v1540 = vcvt.s32.f32 %v1284
    %v1541 = vcvt.s32.f32 %v1285
    %v1542 = vcvt.s32.f32 %v1286
    %v1543 = vcvt.s32.f32 %v1287
    %v1544 = vcvt.s32.f32 %v1288
    %v1545 = vcvt.s32.f32 %v1289
    %v1546 = vcvt.s32.f32 %v1290
    %v1547 = vcvt.s32.f32 %v1291
    %v1548 = vcvt.s32.f32 %v1292
    %v1549 = vcvt.s32.f32 %v1293
    %v1550 = vcvt.s32.f32 %v1294
    %v1551 = vcvt.s32.f32 %v1295
    %v1552 = vcvt.s32.f32 %v1296
    %v1553 = vcvt.s32.f32 %v1297
    %v1554 = vcvt.s32.f32 %v1298
    %v1555 = vcvt.s32.f32 %v1299
    %v1556 = vcvt.s32.f32 %v1300
    %v1557 = vcvt.s32.f32 %v1301
    %v1558 = vcvt.s32.f32 %v1302
    %v1559 = vcvt.s32.f32 %v1303
    %v1560 = vcvt.s32.f32 %v1304
    %v1561 = vcvt.s32.f32 %v1305
    %v1562 = vcvt.s32.f32 %v1306
    %v1563 = vcvt.s32.f32 %v1307
    %v1564 = vcvt.s32.f32 %v1308
    %v1565 = vcvt.s32.f32 %v1309
    %v1566 = vcvt.s32.f32 %v1310
    %v1567 = vcvt.s32.f32 %v1311
    %v1568 = vcvt.s32.f32 %v1312
    %v1569 = vcvt.s32.f32 %v1313
    %v1570 = vcvt.s32.f32 %v1314
    %v1571 = vcvt.s32.f32 %v1315
    %v1572 = vcvt.s32.f32 %v1316
    %v1573 = vcvt.s32.f32 %v1317
    %v1574 = vcvt.s32.f32 %v1318
    %v1575 = vcvt.s32.f32 %v1319
    %v1576 = vcvt.s32.f32 %v1320
    %v1577 = vcvt.s32.f32 %v1321
    %v1578 = vcvt.s32.f32 %v1322
    %v1579 = vcvt.s32.f32 %v1323
    %v1580 = vcvt.s32.f32 %v1324
    %v1581 = vcvt.s32.f32 %v1325
    %v1582 = vcvt.s32.f32 %v1326
    %v1583 = vcvt.s32.f32 %v1327
    %v1584 = vcvt.s32.f32 %v1328
    %v1585 = vcvt.s32.f32 %v1329
    %v1586 = vcvt.s32.f32 %v1330
    %v1587 = vcvt.s32.f32 %v1331
    %v1588 = vcvt.s32.f32 %v1332
    %v1589 = vcvt.s32.f32 %v1333
    %v1590 = vcvt.s32.f32 %v1334
    %v1591 = vcvt.s32.f32 %v1335
    %v1592 = vcvt.s32.f32 %v1336
    %v1593 = vcvt.s32.f32 %v1337
    %v1594 = vcvt.s32.f32 %v1338
    %v1595 = vcvt.s32.f32 %v1339
    %v1596 = vcvt.s32.f32 %v1340
    %v1597 = vcvt.s32.f32 %v1341
    %v1598 = vcvt.s32.f32 %v1342
    %v1599 = vcvt.s32.f32 %v1343
    %v1600 = vcvt.s32.f32 %v1344
    %v1601 = vcvt.s32.f32 %v1345
    %1602 = vmatprep.subr.mxu0 0.0
    %1603 = vmatpush1.msra.mxu0 %v1346
    %1604 = vmatprep.subr.mxu0 0.0
    %1605 = vmatpush1.msra.mxu0 %v1347
    %1606 = vmatprep.subr.mxu0 0.0
    %1607 = vmatpush1.msra.mxu0 %v1348
    %1608 = vmatprep.subr.mxu0 0.0
    %1609 = vmatpush1.msra.mxu0 %v1349
    %1610 = vmatprep.subr.mxu0 0.0
    %1611 = vmatpush1.msra.mxu0 %v1350
    %1612 = vmatprep.subr.mxu0 0.0
    %1613 = vmatpush1.msra.mxu0 %v1351
    %1614 = vmatprep.subr.mxu0 0.0
    %1615 = vmatpush1.msra.mxu0 %v1352
    %1616 = vmatprep.subr.mxu0 0.0
    %1617 = vmatpush1.msra.mxu0 %v1353
    %1618 = vmatprep.subr.mxu0 0.0
    %1619 = vmatpush1.msra.mxu0 %v1354
    %1620 = vmatprep.subr.mxu0 0.0
    %1621 = vmatpush1.msra.mxu0 %v1355
    %1622 = vmatprep.subr.mxu0 0.0
    %1623 = vmatpush1.msra.mxu0 %v1356
    %1624 = vmatprep.subr.mxu0 0.0
    %1625 = vmatpush1.msra.mxu0 %v1357
    %1626 = vmatprep.subr.mxu0 0.0
    %1627 = vmatpush1.msra.mxu0 %v1358
    %1628 = vmatprep.subr.mxu0 0.0
    %1629 = vmatpush1.msra.mxu0 %v1359
    %1630 = vmatprep.subr.mxu0 0.0
    %1631 = vmatpush1.msra.mxu0 %v1360
    %1632 = vmatprep.subr.mxu0 0.0
    %1633 = vmatpush1.msra.mxu0 %v1361
    %1634 = vmatprep.subr.mxu0 0.0
    %1635 = vmatpush1.msra.mxu0 %v1362
    %1636 = vmatprep.subr.mxu0 0.0
    %1637 = vmatpush1.msra.mxu0 %v1363
    %1638 = vmatprep.subr.mxu0 0.0
    %1639 = vmatpush1.msra.mxu0 %v1364
    %1640 = vmatprep.subr.mxu0 0.0
    %1641 = vmatpush1.msra.mxu0 %v1365
    %1642 = vmatprep.subr.mxu0 0.0
    %1643 = vmatpush1.msra.mxu0 %v1366
    %1644 = vmatprep.subr.mxu0 0.0
    %1645 = vmatpush1.msra.mxu0 %v1367
    %1646 = vmatprep.subr.mxu0 0.0
    %1647 = vmatpush1.msra.mxu0 %v1368
    %1648 = vmatprep.subr.mxu0 0.0
    %1649 = vmatpush1.msra.mxu0 %v1369
    %1650 = vmatprep.subr.mxu0 0.0
    %1651 = vmatpush1.msra.mxu0 %v1370
    %1652 = vmatprep.subr.mxu0 0.0
    %1653 = vmatpush1.msra.mxu0 %v1371
    %1654 = vmatprep.subr.mxu0 0.0
    %1655 = vmatpush1.msra.mxu0 %v1372
    %1656 = vmatprep.subr.mxu0 0.0
    %1657 = vmatpush1.msra.mxu0 %v1373
    %1658 = vmatprep.subr.mxu0 0.0
    %1659 = vmatpush1.msra.mxu0 %v1374
    %1660 = vmatprep.subr.mxu0 0.0
    %1661 = vmatpush1.msra.mxu0 %v1375
    %1662 = vmatprep.subr.mxu0 0.0
    %1663 = vmatpush1.msra.mxu0 %v1376
    %1664 = vmatprep.subr.mxu0 0.0
    %1665 = vmatpush1.msra.mxu0 %v1377
    %1666 = vmatprep.mubr.f32.mxu0 %v30
    %1667 = vmatmul.mubr.f32.gmra.mrb[0].mxu0 %v29
    %v1668 = vpop.f32.mrb[0].mxu0
    %v1669 = vadd.f32 0.0, %v1668
    %v1670 = vpop.f32.mrb[0].mxu0
    %1671 = vmatprep.mubr.f32.mxu0 %v46
    %1672 = vmatmul.mubr.f32.gmra.mrb[0].mxu0 %v45
    %v1673 = vpop.f32.mrb[0].mxu0
    %v1674 = vadd.f32 0.0, %v1673
    %v1675 = vpop.f32.mrb[0].mxu0
    %1676 = vdwg.mxu0
    %1677 = vmatprep.subr.mxu0 0.0
    %1678 = vmatpush1.msra.mxu0 %v1378
    %1679 = vmatprep.subr.mxu0 0.0
    %1680 = vmatpush1.msra.mxu0 %v1379
    %1681 = vmatprep.subr.mxu0 0.0
    %1682 = vmatpush1.msra.mxu0 %v1380
    %1683 = vmatprep.subr.mxu0 0.0
    %1684 = vmatpush1.msra.mxu0 %v1381
    %1685 = vmatprep.subr.mxu0 0.0
    %1686 = vmatpush1.msra.mxu0 %v1382
    %1687 = vmatprep.subr.mxu0 0.0
    %1688 = vmatpush1.msra.mxu0 %v1383
    %1689 = vmatprep.subr.mxu0 0.0
    %1690 = vmatpush1.msra.mxu0 %v1384
    %1691 = vmatprep.subr.mxu0 0.0
    %1692 = vmatpush1.msra.mxu0 %v1385
    %1693 = vmatprep.subr.mxu0 0.0
    %1694 = vmatpush1.msra.mxu0 %v1386
    %1695 = vmatprep.subr.mxu0 0.0
    %1696 = vmatpush1.msra.mxu0 %v1387
    %1697 = vmatprep.subr.mxu0 0.0
    %1698 = vmatpush1.msra.mxu0 %v1388
    %1699 = vmatprep.subr.mxu0 0.0
    %1700 = vmatpush1.msra.mxu0 %v1389
    %1701 = vmatprep.subr.mxu0 0.0
    %1702 = vmatpush1.msra.mxu0 %v1390
    %1703 = vmatprep.subr.mxu0 0.0
    %1704 = vmatpush1.msra.mxu0 %v1391
    %1705 = vmatprep.subr.mxu0 0.0
    %1706 = vmatpush1.msra.mxu0 %v1392
    %1707 = vmatprep.subr.mxu0 0.0
    %1708 = vmatpush1.msra.mxu0 %v1393
    %1709 = vmatprep.subr.mxu0 0.0
    %1710 = vmatpush1.msra.mxu0 %v1394
    %1711 = vmatprep.subr.mxu0 0.0
    %1712 = vmatpush1.msra.mxu0 %v1395
    %1713 = vmatprep.subr.mxu0 0.0
    %1714 = vmatpush1.msra.mxu0 %v1396
    %1715 = vmatprep.subr.mxu0 0.0
    %1716 = vmatpush1.msra.mxu0 %v1397
    %1717 = vmatprep.subr.mxu0 0.0
    %1718 = vmatpush1.msra.mxu0 %v1398
    %1719 = vmatprep.subr.mxu0 0.0
    %1720 = vmatpush1.msra.mxu0 %v1399
    %1721 = vmatprep.subr.mxu0 0.0
    %1722 = vmatpush1.msra.mxu0 %v1400
    %1723 = vmatprep.subr.mxu0 0.0
    %1724 = vmatpush1.msra.mxu0 %v1401
    %1725 = vmatprep.subr.mxu0 0.0
    %1726 = vmatpush1.msra.mxu0 %v1402
    %1727 = vmatprep.subr.mxu0 0.0
    %1728 = vmatpush1.msra.mxu0 %v1403
    %1729 = vmatprep.subr.mxu0 0.0
    %1730 = vmatpush1.msra.mxu0 %v1404
    %1731 = vmatprep.subr.mxu0 0.0
    %1732 = vmatpush1.msra.mxu0 %v1405
    %1733 = vmatprep.subr.mxu0 0.0
    %1734 = vmatpush1.msra.mxu0 %v1406
    %1735 = vmatprep.subr.mxu0 0.0
    %1736 = vmatpush1.msra.mxu0 %v1407
    %1737 = vmatprep.subr.mxu0 0.0
    %1738 = vmatpush1.msra.mxu0 %v1408
    %1739 = vmatprep.subr.mxu0 0.0
    %1740 = vmatpush1.msra.mxu0 %v1409
    %1741 = vmatprep.mubr.f32.mxu0 %v32
    %1742 = vmatmul.mubr.f32.gmra.mrb[0].mxu0 %v31
    %v1743 = vpop.f32.mrb[0].mxu0
    %v1744 = vadd.f32 %v1669, %v1743
    %v1745 = vpop.f32.mrb[0].mxu0
    %1746 = vmatprep.mubr.f32.mxu0 %v48
    %1747 = vmatmul.mubr.f32.gmra.mrb[0].mxu0 %v47
    %v1748 = vpop.f32.mrb[0].mxu0
    %v1749 = vadd.f32 %v1674, %v1748
    %v1750 = vpop.f32.mrb[0].mxu0
    %1751 = vdwg.mxu0
    %1752 = vmatprep.subr.mxu0 0.0
    %1753 = vmatpush1.msra.mxu0 %v1410
    %1754 = vmatprep.subr.mxu0 0.0
    %1755 = vmatpush1.msra.mxu0 %v1411
    %1756 = vmatprep.subr.mxu0 0.0
    %1757 = vmatpush1.msra.mxu0 %v1412
    %1758 = vmatprep.subr.mxu0 0.0
    %1759 = vmatpush1.msra.mxu0 %v1413
    %1760 = vmatprep.subr.mxu0 0.0
    %1761 = vmatpush1.msra.mxu0 %v1414
    %1762 = vmatprep.subr.mxu0 0.0
    %1763 = vmatpush1.msra.mxu0 %v1415
    %1764 = vmatprep.subr.mxu0 0.0
    %1765 = vmatpush1.msra.mxu0 %v1416
    %1766 = vmatprep.subr.mxu0 0.0
    %1767 = vmatpush1.msra.mxu0 %v1417
    %1768 = vmatprep.subr.mxu0 0.0
    %1769 = vmatpush1.msra.mxu0 %v1418
    %1770 = vmatprep.subr.mxu0 0.0
    %1771 = vmatpush1.msra.mxu0 %v1419
    %1772 = vmatprep.subr.mxu0 0.0
    %1773 = vmatpush1.msra.mxu0 %v1420
    %1774 = vmatprep.subr.mxu0 0.0
    %1775 = vmatpush1.msra.mxu0 %v1421
    %1776 = vmatprep.subr.mxu0 0.0
    %1777 = vmatpush1.msra.mxu0 %v1422
    %1778 = vmatprep.subr.mxu0 0.0
    %1779 = vmatpush1.msra.mxu0 %v1423
    %1780 = vmatprep.subr.mxu0 0.0
    %1781 = vmatpush1.msra.mxu0 %v1424
    %1782 = vmatprep.subr.mxu0 0.0
    %1783 = vmatpush1.msra.mxu0 %v1425
    %1784 = vmatprep.subr.mxu0 0.0
    %1785 = vmatpush1.msra.mxu0 %v1426
    %1786 = vmatprep.subr.mxu0 0.0
    %1787 = vmatpush1.msra.mxu0 %v1427
    %1788 = vmatprep.subr.mxu0 0.0
    %1789 = vmatpush1.msra.mxu0 %v1428
    %1790 = vmatprep.subr.mxu0 0.0
    %1791 = vmatpush1.msra.mxu0 %v1429
    %1792 = vmatprep.subr.mxu0 0.0
    %1793 = vmatpush1.msra.mxu0 %v1430
    %1794 = vmatprep.subr.mxu0 0.0
    %1795 = vmatpush1.msra.mxu0 %v1431
    %1796 = vmatprep.subr.mxu0 0.0
    %1797 = vmatpush1.msra.mxu0 %v1432
    %1798 = vmatprep.subr.mxu0 0.0
    %1799 = vmatpush1.msra.mxu0 %v1433
    %1800 = vmatprep.subr.mxu0 0.0
    %1801 = vmatpush1.msra.mxu0 %v1434
    %1802 = vmatprep.subr.mxu0 0.0
    %1803 = vmatpush1.msra.mxu0 %v1435
    %1804 = vmatprep.subr.mxu0 0.0
    %1805 = vmatpush1.msra.mxu0 %v1436
    %1806 = vmatprep.subr.mxu0 0.0
    %1807 = vmatpush1.msra.mxu0 %v1437
    %1808 = vmatprep.subr.mxu0 0.0
    %1809 = vmatpush1.msra.mxu0 %v1438
    %1810 = vmatprep.subr.mxu0 0.0
    %1811 = vmatpush1.msra.mxu0 %v1439
    %1812 = vmatprep.subr.mxu0 0.0
    %1813 = vmatpush1.msra.mxu0 %v1440
    %1814 = vmatprep.subr.mxu0 0.0
    %1815 = vmatpush1.msra.mxu0 %v1441
    %1816 = vmatprep.mubr.f32.mxu0 %v34
    %1817 = vmatmul.mubr.f32.gmra.mrb[0].mxu0 %v33
    %v1818 = vpop.f32.mrb[0].mxu0
    %v1819 = vadd.f32 %v1744, %v1818
    %v1820 = vpop.f32.mrb[0].mxu0
    %1821 = vmatprep.mubr.f32.mxu0 %v50
    %1822 = vmatmul.mubr.f32.gmra.mrb[0].mxu0 %v49
    %v1823 = vpop.f32.mrb[0].mxu0
    %v1824 = vadd.f32 %v1749, %v1823
    %v1825 = vpop.f32.mrb[0].mxu0
    %1826 = vdwg.mxu0
    %1827 = vmatprep.subr.mxu0 0.0
    %1828 = vmatpush1.msra.mxu0 %v1442
    %1829 = vmatprep.subr.mxu0 0.0
    %1830 = vmatpush1.msra.mxu0 %v1443
    %1831 = vmatprep.subr.mxu0 0.0
    %1832 = vmatpush1.msra.mxu0 %v1444
    %1833 = vmatprep.subr.mxu0 0.0
    %1834 = vmatpush1.msra.mxu0 %v1445
    %1835 = vmatprep.subr.mxu0 0.0
    %1836 = vmatpush1.msra.mxu0 %v1446
    %1837 = vmatprep.subr.mxu0 0.0
    %1838 = vmatpush1.msra.mxu0 %v1447
    %1839 = vmatprep.subr.mxu0 0.0
    %1840 = vmatpush1.msra.mxu0 %v1448
    %1841 = vmatprep.subr.mxu0 0.0
    %1842 = vmatpush1.msra.mxu0 %v1449
    %1843 = vmatprep.subr.mxu0 0.0
    %1844 = vmatpush1.msra.mxu0 %v1450
    %1845 = vmatprep.subr.mxu0 0.0
    %1846 = vmatpush1.msra.mxu0 %v1451
    %1847 = vmatprep.subr.mxu0 0.0
    %1848 = vmatpush1.msra.mxu0 %v1452
    %1849 = vmatprep.subr.mxu0 0.0
    %1850 = vmatpush1.msra.mxu0 %v1453
    %1851 = vmatprep.subr.mxu0 0.0
    %1852 = vmatpush1.msra.mxu0 %v1454
    %1853 = vmatprep.subr.mxu0 0.0
    %1854 = vmatpush1.msra.mxu0 %v1455
    %1855 = vmatprep.subr.mxu0 0.0
    %1856 = vmatpush1.msra.mxu0 %v1456
    %1857 = vmatprep.subr.mxu0 0.0
    %1858 = vmatpush1.msra.mxu0 %v1457
    %1859 = vmatprep.subr.mxu0 0.0
    %1860 = vmatpush1.msra.mxu0 %v1458
    %1861 = vmatprep.subr.mxu0 0.0
    %1862 = vmatpush1.msra.mxu0 %v1459
    %1863 = vmatprep.subr.mxu0 0.0
    %1864 = vmatpush1.msra.mxu0 %v1460
    %1865 = vmatprep.subr.mxu0 0.0
    %1866 = vmatpush1.msra.mxu0 %v1461
    %1867 = vmatprep.subr.mxu0 0.0
    %1868 = vmatpush1.msra.mxu0 %v1462
    %1869 = vmatprep.subr.mxu0 0.0
    %1870 = vmatpush1.msra.mxu0 %v1463
    %1871 = vmatprep.subr.mxu0 0.0
    %1872 = vmatpush1.msra.mxu0 %v1464
    %1873 = vmatprep.subr.mxu0 0.0
    %1874 = vmatpush1.msra.mxu0 %v1465
    %1875 = vmatprep.subr.mxu0 0.0
    %1876 = vmatpush1.msra.mxu0 %v1466
    %1877 = vmatprep.subr.mxu0 0.0
    %1878 = vmatpush1.msra.mxu0 %v1467
    %1879 = vmatprep.subr.mxu0 0.0
    %1880 = vmatpush1.msra.mxu0 %v1468
    %1881 = vmatprep.subr.mxu0 0.0
    %1882 = vmatpush1.msra.mxu0 %v1469
    %1883 = vmatprep.subr.mxu0 0.0
    %1884 = vmatpush1.msra.mxu0 %v1470
    %1885 = vmatprep.subr.mxu0 0.0
    %1886 = vmatpush1.msra.mxu0 %v1471
    %1887 = vmatprep.subr.mxu0 0.0
    %1888 = vmatpush1.msra.mxu0 %v1472
    %1889 = vmatprep.subr.mxu0 0.0
    %1890 = vmatpush1.msra.mxu0 %v1473
    %1891 = vmatprep.mubr.f32.mxu0 %v36
    %1892 = vmatmul.mubr.f32.gmra.mrb[0].mxu0 %v35
    %v1893 = vpop.f32.mrb[0].mxu0
    %v1894 = vadd.f32 %v1819, %v1893
    %v1895 = vpop.f32.mrb[0].mxu0
    %1896 = vmatprep.mubr.f32.mxu0 %v52
    %1897 = vmatmul.mubr.f32.gmra.mrb[0].mxu0 %v51
    %v1898 = vpop.f32.mrb[0].mxu0
    %v1899 = vadd.f32 %v1824, %v1898
    %v1900 = vpop.f32.mrb[0].mxu0
    %1901 = vdwg.mxu0
    %1902 = vmatprep.subr.mxu0 0.0
    %1903 = vmatpush1.msra.mxu0 %v1474
    %1904 = vmatprep.subr.mxu0 0.0
    %1905 = vmatpush1.msra.mxu0 %v1475
    %1906 = vmatprep.subr.mxu0 0.0
    %1907 = vmatpush1.msra.mxu0 %v1476
    %1908 = vmatprep.subr.mxu0 0.0
    %1909 = vmatpush1.msra.mxu0 %v1477
    %1910 = vmatprep.subr.mxu0 0.0
    %1911 = vmatpush1.msra.mxu0 %v1478
    %1912 = vmatprep.subr.mxu0 0.0
    %1913 = vmatpush1.msra.mxu0 %v1479
    %1914 = vmatprep.subr.mxu0 0.0
    %1915 = vmatpush1.msra.mxu0 %v1480
    %1916 = vmatprep.subr.mxu0 0.0
    %1917 = vmatpush1.msra.mxu0 %v1481
    %1918 = vmatprep.subr.mxu0 0.0
    %1919 = vmatpush1.msra.mxu0 %v1482
    %1920 = vmatprep.subr.mxu0 0.0
    %1921 = vmatpush1.msra.mxu0 %v1483
    %1922 = vmatprep.subr.mxu0 0.0
    %1923 = vmatpush1.msra.mxu0 %v1484
    %1924 = vmatprep.subr.mxu0 0.0
    %1925 = vmatpush1.msra.mxu0 %v1485
    %1926 = vmatprep.subr.mxu0 0.0
    %1927 = vmatpush1.msra.mxu0 %v1486
    %1928 = vmatprep.subr.mxu0 0.0
    %1929 = vmatpush1.msra.mxu0 %v1487
    %1930 = vmatprep.subr.mxu0 0.0
    %1931 = vmatpush1.msra.mxu0 %v1488
    %1932 = vmatprep.subr.mxu0 0.0
    %1933 = vmatpush1.msra.mxu0 %v1489
    %1934 = vmatprep.subr.mxu0 0.0
    %1935 = vmatpush1.msra.mxu0 %v1490
    %1936 = vmatprep.subr.mxu0 0.0
    %1937 = vmatpush1.msra.mxu0 %v1491
    %1938 = vmatprep.subr.mxu0 0.0
    %1939 = vmatpush1.msra.mxu0 %v1492
    %1940 = vmatprep.subr.mxu0 0.0
    %1941 = vmatpush1.msra.mxu0 %v1493
    %1942 = vmatprep.subr.mxu0 0.0
    %1943 = vmatpush1.msra.mxu0 %v1494
    %1944 = vmatprep.subr.mxu0 0.0
    %1945 = vmatpush1.msra.mxu0 %v1495
    %1946 = vmatprep.subr.mxu0 0.0
    %1947 = vmatpush1.msra.mxu0 %v1496
    %1948 = vmatprep.subr.mxu0 0.0
    %1949 = vmatpush1.msra.mxu0 %v1497
    %1950 = vmatprep.subr.mxu0 0.0
    %1951 = vmatpush1.msra.mxu0 %v1498
    %1952 = vmatprep.subr.mxu0 0.0
    %1953 = vmatpush1.msra.mxu0 %v1499
    %1954 = vmatprep.subr.mxu0 0.0
    %1955 = vmatpush1.msra.mxu0 %v1500
    %1956 = vmatprep.subr.mxu0 0.0
    %1957 = vmatpush1.msra.mxu0 %v1501
    %1958 = vmatprep.subr.mxu0 0.0
    %1959 = vmatpush1.msra.mxu0 %v1502
    %1960 = vmatprep.subr.mxu0 0.0
    %1961 = vmatpush1.msra.mxu0 %v1503
    %1962 = vmatprep.subr.mxu0 0.0
    %1963 = vmatpush1.msra.mxu0 %v1504
    %1964 = vmatprep.subr.mxu0 0.0
    %1965 = vmatpush1.msra.mxu0 %v1505
    %1966 = vmatprep.mubr.f32.mxu0 %v38
    %1967 = vmatmul.mubr.f32.gmra.mrb[0].mxu0 %v37
    %v1968 = vpop.f32.mrb[0].mxu0
    %v1969 = vadd.f32 %v1894, %v1968
    %v1970 = vpop.f32.mrb[0].mxu0
    %1971 = vmatprep.mubr.f32.mxu0 %v54
    %1972 = vmatmul.mubr.f32.gmra.mrb[0].mxu0 %v53
    %v1973 = vpop.f32.mrb[0].mxu0
    %v1974 = vadd.f32 %v1899, %v1973
    %v1975 = vpop.f32.mrb[0].mxu0
    %1976 = vdwg.mxu0
    %1977 = vmatprep.subr.mxu0 0.0
    %1978 = vmatpush1.msra.mxu0 %v1506
    %1979 = vmatprep.subr.mxu0 0.0
    %1980 = vmatpush1.msra.mxu0 %v1507
    %1981 = vmatprep.subr.mxu0 0.0
    %1982 = vmatpush1.msra.mxu0 %v1508
    %1983 = vmatprep.subr.mxu0 0.0
    %1984 = vmatpush1.msra.mxu0 %v1509
    %1985 = vmatprep.subr.mxu0 0.0
    %1986 = vmatpush1.msra.mxu0 %v1510
    %1987 = vmatprep.subr.mxu0 0.0
    %1988 = vmatpush1.msra.mxu0 %v1511
    %1989 = vmatprep.subr.mxu0 0.0
    %1990 = vmatpush1.msra.mxu0 %v1512
    %1991 = vmatprep.subr.mxu0 0.0
    %1992 = vmatpush1.msra.mxu0 %v1513
    %1993 = vmatprep.subr.mxu0 0.0
    %1994 = vmatpush1.msra.mxu0 %v1514
    %1995 = vmatprep.subr.mxu0 0.0
    %1996 = vmatpush1.msra.mxu0 %v1515
    %1997 = vmatprep.subr.mxu0 0.0
    %1998 = vmatpush1.msra.mxu0 %v1516
    %1999 = vmatprep.subr.mxu0 0.0
    %2000 = vmatpush1.msra.mxu0 %v1517
    %2001 = vmatprep.subr.mxu0 0.0
    %2002 = vmatpush1.msra.mxu0 %v1518
    %2003 = vmatprep.subr.mxu0 0.0
    %2004 = vmatpush1.msra.mxu0 %v1519
    %2005 = vmatprep.subr.mxu0 0.0
    %2006 = vmatpush1.msra.mxu0 %v1520
    %2007 = vmatprep.subr.mxu0 0.0
    %2008 = vmatpush1.msra.mxu0 %v1521
    %2009 = vmatprep.subr.mxu0 0.0
    %2010 = vmatpush1.msra.mxu0 %v1522
    %2011 = vmatprep.subr.mxu0 0.0
    %2012 = vmatpush1.msra.mxu0 %v1523
    %2013 = vmatprep.subr.mxu0 0.0
    %2014 = vmatpush1.msra.mxu0 %v1524
    %2015 = vmatprep.subr.mxu0 0.0
    %2016 = vmatpush1.msra.mxu0 %v1525
    %2017 = vmatprep.subr.mxu0 0.0
    %2018 = vmatpush1.msra.mxu0 %v1526
    %2019 = vmatprep.subr.mxu0 0.0
    %2020 = vmatpush1.msra.mxu0 %v1527
    %2021 = vmatprep.subr.mxu0 0.0
    %2022 = vmatpush1.msra.mxu0 %v1528
    %2023 = vmatprep.subr.mxu0 0.0
    %2024 = vmatpush1.msra.mxu0 %v1529
    %2025 = vmatprep.subr.mxu0 0.0
    %2026 = vmatpush1.msra.mxu0 %v1530
    %2027 = vmatprep.subr.mxu0 0.0
    %2028 = vmatpush1.msra.mxu0 %v1531
    %2029 = vmatprep.subr.mxu0 0.0
    %2030 = vmatpush1.msra.mxu0 %v1532
    %2031 = vmatprep.subr.mxu0 0.0
    %2032 = vmatpush1.msra.mxu0 %v1533
    %2033 = vmatprep.subr.mxu0 0.0
    %2034 = vmatpush1.msra.mxu0 %v1534
    %2035 = vmatprep.subr.mxu0 0.0
    %2036 = vmatpush1.msra.mxu0 %v1535
    %2037 = vmatprep.subr.mxu0 0.0
    %2038 = vmatpush1.msra.mxu0 %v1536
    %2039 = vmatprep.subr.mxu0 0.0
    %2040 = vmatpush1.msra.mxu0 %v1537
    %2041 = vmatprep.mubr.f32.mxu0 %v40
    %2042 = vmatmul.mubr.f32.gmra.mrb[0].mxu0 %v39
    %v2043 = vpop.f32.mrb[0].mxu0
    %v2044 = vadd.f32 %v1969, %v2043
    %v2045 = vpop.f32.mrb[0].mxu0
    %2046 = vmatprep.mubr.f32.mxu0 %v56
    %2047 = vmatmul.mubr.f32.gmra.mrb[0].mxu0 %v55
    %v2048 = vpop.f32.mrb[0].mxu0
    %v2049 = vadd.f32 %v1974, %v2048
    %v2050 = vpop.f32.mrb[0].mxu0
    %2051 = vdwg.mxu0
    %2052 = vmatprep.subr.mxu0 0.0
    %2053 = vmatpush1.msra.mxu0 %v1538
    %2054 = vmatprep.subr.mxu0 0.0
    %2055 = vmatpush1.msra.mxu0 %v1539
    %2056 = vmatprep.subr.mxu0 0.0
    %2057 = vmatpush1.msra.mxu0 %v1540
    %2058 = vmatprep.subr.mxu0 0.0
    %2059 = vmatpush1.msra.mxu0 %v1541
    %2060 = vmatprep.subr.mxu0 0.0
    %2061 = vmatpush1.msra.mxu0 %v1542
    %2062 = vmatprep.subr.mxu0 0.0
    %2063 = vmatpush1.msra.mxu0 %v1543
    %2064 = vmatprep.subr.mxu0 0.0
    %2065 = vmatpush1.msra.mxu0 %v1544
    %2066 = vmatprep.subr.mxu0 0.0
    %2067 = vmatpush1.msra.mxu0 %v1545
    %2068 = vmatprep.subr.mxu0 0.0
    %2069 = vmatpush1.msra.mxu0 %v1546
    %2070 = vmatprep.subr.mxu0 0.0
    %2071 = vmatpush1.msra.mxu0 %v1547
    %2072 = vmatprep.subr.mxu0 0.0
    %2073 = vmatpush1.msra.mxu0 %v1548
    %2074 = vmatprep.subr.mxu0 0.0
    %2075 = vmatpush1.msra.mxu0 %v1549
    %2076 = vmatprep.subr.mxu0 0.0
    %2077 = vmatpush1.msra.mxu0 %v1550
    %2078 = vmatprep.subr.mxu0 0.0
    %2079 = vmatpush1.msra.mxu0 %v1551
    %2080 = vmatprep.subr.mxu0 0.0
    %2081 = vmatpush1.msra.mxu0 %v1552
    %2082 = vmatprep.subr.mxu0 0.0
    %2083 = vmatpush1.msra.mxu0 %v1553
    %2084 = vmatprep.subr.mxu0 0.0
    %2085 = vmatpush1.msra.mxu0 %v1554
    %2086 = vmatprep.subr.mxu0 0.0
    %2087 = vmatpush1.msra.mxu0 %v1555
    %2088 = vmatprep.subr.mxu0 0.0
    %2089 = vmatpush1.msra.mxu0 %v1556
    %2090 = vmatprep.subr.mxu0 0.0
    %2091 = vmatpush1.msra.mxu0 %v1557
    %2092 = vmatprep.subr.mxu0 0.0
    %2093 = vmatpush1.msra.mxu0 %v1558
    %2094 = vmatprep.subr.mxu0 0.0
    %2095 = vmatpush1.msra.mxu0 %v1559
    %2096 = vmatprep.subr.mxu0 0.0
    %2097 = vmatpush1.msra.mxu0 %v1560
    %2098 = vmatprep.subr.mxu0 0.0
    %2099 = vmatpush1.msra.mxu0 %v1561
    %2100 = vmatprep.subr.mxu0 0.0
    %2101 = vmatpush1.msra.mxu0 %v1562
    %2102 = vmatprep.subr.mxu0 0.0
    %2103 = vmatpush1.msra.mxu0 %v1563
    %2104 = vmatprep.subr.mxu0 0.0
    %2105 = vmatpush1.msra.mxu0 %v1564
    %2106 = vmatprep.subr.mxu0 0.0
    %2107 = vmatpush1.msra.mxu0 %v1565
    %2108 = vmatprep.subr.mxu0 0.0
    %2109 = vmatpush1.msra.mxu0 %v1566
    %2110 = vmatprep.subr.mxu0 0.0
    %2111 = vmatpush1.msra.mxu0 %v1567
    %2112 = vmatprep.subr.mxu0 0.0
    %2113 = vmatpush1.msra.mxu0 %v1568
    %2114 = vmatprep.subr.mxu0 0.0
    %2115 = vmatpush1.msra.mxu0 %v1569
    %2116 = vmatprep.mubr.f32.mxu0 %v42
    %2117 = vmatmul.mubr.f32.gmra.mrb[0].mxu0 %v41
    %v2118 = vpop.f32.mrb[0].mxu0
    %v2119 = vadd.f32 %v2044, %v2118
    %v2120 = vpop.f32.mrb[0].mxu0
    %2121 = vmatprep.mubr.f32.mxu0 %v58
    %2122 = vmatmul.mubr.f32.gmra.mrb[0].mxu0 %v57
    %v2123 = vpop.f32.mrb[0].mxu0
    %v2124 = vadd.f32 %v2049, %v2123
    %v2125 = vpop.f32.mrb[0].mxu0
    %2126 = vdwg.mxu0
    %2127 = vmatprep.subr.mxu0 0.0
    %2128 = vmatpush1.msra.mxu0 %v1570
    %2129 = vmatprep.subr.mxu0 0.0
    %2130 = vmatpush1.msra.mxu0 %v1571
    %2131 = vmatprep.subr.mxu0 0.0
    %2132 = vmatpush1.msra.mxu0 %v1572
    %2133 = vmatprep.subr.mxu0 0.0
    %2134 = vmatpush1.msra.mxu0 %v1573
    %2135 = vmatprep.subr.mxu0 0.0
    %2136 = vmatpush1.msra.mxu0 %v1574
    %2137 = vmatprep.subr.mxu0 0.0
    %2138 = vmatpush1.msra.mxu0 %v1575
    %2139 = vmatprep.subr.mxu0 0.0
    %2140 = vmatpush1.msra.mxu0 %v1576
    %2141 = vmatprep.subr.mxu0 0.0
    %2142 = vmatpush1.msra.mxu0 %v1577
    %2143 = vmatprep.subr.mxu0 0.0
    %2144 = vmatpush1.msra.mxu0 %v1578
    %2145 = vmatprep.subr.mxu0 0.0
    %2146 = vmatpush1.msra.mxu0 %v1579
    %2147 = vmatprep.subr.mxu0 0.0
    %2148 = vmatpush1.msra.mxu0 %v1580
    %2149 = vmatprep.subr.mxu0 0.0
    %2150 = vmatpush1.msra.mxu0 %v1581
    %2151 = vmatprep.subr.mxu0 0.0
    %2152 = vmatpush1.msra.mxu0 %v1582
    %2153 = vmatprep.subr.mxu0 0.0
    %2154 = vmatpush1.msra.mxu0 %v1583
    %2155 = vmatprep.subr.mxu0 0.0
    %2156 = vmatpush1.msra.mxu0 %v1584
    %2157 = vmatprep.subr.mxu0 0.0
    %2158 = vmatpush1.msra.mxu0 %v1585
    %2159 = vmatprep.subr.mxu0 0.0
    %2160 = vmatpush1.msra.mxu0 %v1586
    %2161 = vmatprep.subr.mxu0 0.0
    %2162 = vmatpush1.msra.mxu0 %v1587
    %2163 = vmatprep.subr.mxu0 0.0
    %2164 = vmatpush1.msra.mxu0 %v1588
    %2165 = vmatprep.subr.mxu0 0.0
    %2166 = vmatpush1.msra.mxu0 %v1589
    %2167 = vmatprep.subr.mxu0 0.0
    %2168 = vmatpush1.msra.mxu0 %v1590
    %2169 = vmatprep.subr.mxu0 0.0
    %2170 = vmatpush1.msra.mxu0 %v1591
    %2171 = vmatprep.subr.mxu0 0.0
    %2172 = vmatpush1.msra.mxu0 %v1592
    %2173 = vmatprep.subr.mxu0 0.0
    %2174 = vmatpush1.msra.mxu0 %v1593
    %2175 = vmatprep.subr.mxu0 0.0
    %2176 = vmatpush1.msra.mxu0 %v1594
    %2177 = vmatprep.subr.mxu0 0.0
    %2178 = vmatpush1.msra.mxu0 %v1595
    %2179 = vmatprep.subr.mxu0 0.0
    %2180 = vmatpush1.msra.mxu0 %v1596
    %2181 = vmatprep.subr.mxu0 0.0
    %2182 = vmatpush1.msra.mxu0 %v1597
    %2183 = vmatprep.subr.mxu0 0.0
    %2184 = vmatpush1.msra.mxu0 %v1598
    %2185 = vmatprep.subr.mxu0 0.0
    %2186 = vmatpush1.msra.mxu0 %v1599
    %2187 = vmatprep.subr.mxu0 0.0
    %2188 = vmatpush1.msra.mxu0 %v1600
    %2189 = vmatprep.subr.mxu0 0.0
    %2190 = vmatpush1.msra.mxu0 %v1601
    %2191 = vmatprep.mubr.f32.mxu0 %v44
    %2192 = vmatmul.mubr.f32.gmra.mrb[0].mxu0 %v43
    %v2193 = vpop.f32.mrb[0].mxu0
    %v2194 = vadd.f32 %v2119, %v2193
    %v2195 = vpop.f32.mrb[0].mxu0
    %2196 = vmatprep.mubr.f32.mxu0 %v60
    %2197 = vmatmul.mubr.f32.gmra.mrb[0].mxu0 %v59
    %v2198 = vpop.f32.mrb[0].mxu0
    %v2199 = vadd.f32 %v2124, %v2198
    %v2200 = vpop.f32.mrb[0].mxu0
    %2201 = vdwg.mxu0
    %v2202 = vld [vmem:[%s1] sm:$0xff]
    %v2203 = vld [vmem:[%s1 + $0x8] sm:$0xff]
    %v2204 = vld [vmem:[%s1 + $0x10] sm:$0xff]
    %v2205 = vld [vmem:[%s1 + $0x18] sm:$0xff]
    %v2206 = vld [vmem:[%s1 + $0x20] sm:$0xff]
    %v2207 = vld [vmem:[%s1 + $0x28] sm:$0xff]
    %v2208 = vld [vmem:[%s1 + $0x30] sm:$0xff]
    %v2209 = vld [vmem:[%s1 + $0x38] sm:$0xff]
    %v2210 = vld [vmem:[%s1 + $0x40] sm:$0xff]
    %v2211 = vld [vmem:[%s1 + $0x48] sm:$0xff]
    %v2212 = vld [vmem:[%s1 + $0x50] sm:$0xff]
    %v2213 = vld [vmem:[%s1 + $0x58] sm:$0xff]
    %v2214 = vld [vmem:[%s1 + $0x60] sm:$0xff]
    %v2215 = vld [vmem:[%s1 + $0x68] sm:$0xff]
    %v2216 = vld [vmem:[%s1 + $0x70] sm:$0xff]
    %v2217 = vld [vmem:[%s1 + $0x78] sm:$0xff]
    %2218 = vmatprep.subr.mxu0 0.0
    %2219 = vmatpush1.msra.mxu0 %v2202
    %2220 = vmatprep.subr.mxu0 0.0
    %2221 = vmatpush1.msra.mxu0 %v2203
    %2222 = vmatprep.subr.mxu0 0.0
    %2223 = vmatpush1.msra.mxu0 %v2204
    %2224 = vmatprep.subr.mxu0 0.0
    %2225 = vmatpush1.msra.mxu0 %v2205
    %2226 = vmatprep.subr.mxu0 0.0
    %2227 = vmatpush1.msra.mxu0 %v2206
    %2228 = vmatprep.subr.mxu0 0.0
    %2229 = vmatpush1.msra.mxu0 %v2207
    %2230 = vmatprep.subr.mxu0 0.0
    %2231 = vmatpush1.msra.mxu0 %v2208
    %2232 = vmatprep.subr.mxu0 0.0
    %2233 = vmatpush1.msra.mxu0 %v2209
    %2234 = vmatprep.subr.mxu0 0.0
    %2235 = vmatpush1.msra.mxu0 %v2210
    %2236 = vmatprep.subr.mxu0 0.0
    %2237 = vmatpush1.msra.mxu0 %v2211
    %2238 = vmatprep.subr.mxu0 0.0
    %2239 = vmatpush1.msra.mxu0 %v2212
    %2240 = vmatprep.subr.mxu0 0.0
    %2241 = vmatpush1.msra.mxu0 %v2213
    %2242 = vmatprep.subr.mxu0 0.0
    %2243 = vmatpush1.msra.mxu0 %v2214
    %2244 = vmatprep.subr.mxu0 0.0
    %2245 = vmatpush1.msra.mxu0 %v2215
    %2246 = vmatprep.subr.mxu0 0.0
    %2247 = vmatpush1.msra.mxu0 %v2216
    %2248 = vmatprep.subr.mxu0 0.0
    %2249 = vmatpush1.msra.mxu0 %v2217
    %2250 = vmatprep.subr.mxu0 0.0
    %2251 = vmatpush1.msra.mxu0 0.0
    %2252 = vmatprep.subr.mxu0 0.0
    %2253 = vmatpush1.msra.mxu0 0.0
    %2254 = vmatprep.subr.mxu0 0.0
    %2255 = vmatpush1.msra.mxu0 0.0
    %2256 = vmatprep.subr.mxu0 0.0
    %2257 = vmatpush1.msra.mxu0 0.0
    %2258 = vmatprep.subr.mxu0 0.0
    %2259 = vmatpush1.msra.mxu0 0.0
    %2260 = vmatprep.subr.mxu0 0.0
    %2261 = vmatpush1.msra.mxu0 0.0
    %2262 = vmatprep.subr.mxu0 0.0
    %2263 = vmatpush1.msra.mxu0 0.0
    %2264 = vmatprep.subr.mxu0 0.0
    %2265 = vmatpush1.msra.mxu0 0.0
    %2266 = vmatprep.subr.mxu0 0.0
    %2267 = vmatpush1.msra.mxu0 0.0
    %2268 = vmatprep.subr.mxu0 0.0
    %2269 = vmatpush1.msra.mxu0 0.0
    %2270 = vmatprep.subr.mxu0 0.0
    %2271 = vmatpush1.msra.mxu0 0.0
    %2272 = vmatprep.subr.mxu0 0.0
    %2273 = vmatpush1.msra.mxu0 0.0
    %2274 = vmatprep.subr.mxu0 0.0
    %2275 = vmatpush1.msra.mxu0 0.0
    %2276 = vmatprep.subr.mxu0 0.0
    %2277 = vmatpush1.msra.mxu0 0.0
    %2278 = vmatprep.subr.mxu0 0.0
    %2279 = vmatpush1.msra.mxu0 0.0
    %2280 = vmatprep.subr.mxu0 0.0
    %2281 = vmatpush1.msra.mxu0 0.0
    %2282 = vmatprep.mubr.f32.mxu0 0.0
    %2283 = vmatmul.mubr.f32.gmra.mrb[0].mxu0 %v2194
    %v2284 = vpop.f32.mrb[0].mxu0
    %v2285 = vadd.f32 0.0, %v2284
    %v2286 = vpop.f32.mrb[0].mxu0
    %2287 = vmatprep.mubr.f32.mxu0 0.0
    %2288 = vmatmul.mubr.f32.gmra.mrb[0].mxu0 %v2199
    %v2289 = vpop.f32.mrb[0].mxu0
    %v2290 = vadd.f32 0.0, %v2289
    %v2291 = vpop.f32.mrb[0].mxu0
    %2292 = vdwg.mxu0
    %v2293 = vmax.f32 %v2285, 0.0
    %v2294 = vmax.f32 %v2290, 0.0
    %v2295 = vld [vmem:[%s2] sm:$0xff]
    %vm2296 = vcmask 64512
    %v2298 = vsel %vm2296, %v2293, 0
    %v2301 = vsel %vm2296, %v2294, 0
    %2303 = vmatprep.subr.mxu0 0.0
    %2304 = vmatpush1.msra.mxu0 %v2295
    %2305 = vmatprep.subr.mxu0 0.0
    %2306 = vmatpush1.msra.mxu0 0.0
    %2307 = vmatprep.subr.mxu0 0.0
    %2308 = vmatpush1.msra.mxu0 0.0
    %2309 = vmatprep.subr.mxu0 0.0
    %2310 = vmatpush1.msra.mxu0 0.0
    %2311 = vmatprep.subr.mxu0 0.0
    %2312 = vmatpush1.msra.mxu0 0.0
    %2313 = vmatprep.subr.mxu0 0.0
    %2314 = vmatpush1.msra.mxu0 0.0
    %2315 = vmatprep.subr.mxu0 0.0
    %2316 = vmatpush1.msra.mxu0 0.0
    %2317 = vmatprep.subr.mxu0 0.0
    %2318 = vmatpush1.msra.mxu0 0.0
    %2319 = vmatprep.subr.mxu0 0.0
    %2320 = vmatpush1.msra.mxu0 0.0
    %2321 = vmatprep.subr.mxu0 0.0
    %2322 = vmatpush1.msra.mxu0 0.0
    %2323 = vmatprep.subr.mxu0 0.0
    %2324 = vmatpush1.msra.mxu0 0.0
    %2325 = vmatprep.subr.mxu0 0.0
    %2326 = vmatpush1.msra.mxu0 0.0
    %2327 = vmatprep.subr.mxu0 0.0
    %2328 = vmatpush1.msra.mxu0 0.0
    %2329 = vmatprep.subr.mxu0 0.0
    %2330 = vmatpush1.msra.mxu0 0.0
    %2331 = vmatprep.subr.mxu0 0.0
    %2332 = vmatpush1.msra.mxu0 0.0
    %2333 = vmatprep.subr.mxu0 0.0
    %2334 = vmatpush1.msra.mxu0 0.0
    %2335 = vmatprep.subr.mxu0 0.0
    %2336 = vmatpush1.msra.mxu0 0.0
    %2337 = vmatprep.subr.mxu0 0.0
    %2338 = vmatpush1.msra.mxu0 0.0
    %2339 = vmatprep.subr.mxu0 0.0
    %2340 = vmatpush1.msra.mxu0 0.0
    %2341 = vmatprep.subr.mxu0 0.0
    %2342 = vmatpush1.msra.mxu0 0.0
    %2343 = vmatprep.subr.mxu0 0.0
    %2344 = vmatpush1.msra.mxu0 0.0
    %2345 = vmatprep.subr.mxu0 0.0
    %2346 = vmatpush1.msra.mxu0 0.0
    %2347 = vmatprep.subr.mxu0 0.0
    %2348 = vmatpush1.msra.mxu0 0.0
    %2349 = vmatprep.subr.mxu0 0.0
    %2350 = vmatpush1.msra.mxu0 0.0
    %2351 = vmatprep.subr.mxu0 0.0
    %2352 = vmatpush1.msra.mxu0 0.0
    %2353 = vmatprep.subr.mxu0 0.0
    %2354 = vmatpush1.msra.mxu0 0.0
    %2355 = vmatprep.subr.mxu0 0.0
    %2356 = vmatpush1.msra.mxu0 0.0
    %2357 = vmatprep.subr.mxu0 0.0
    %2358 = vmatpush1.msra.mxu0 0.0
    %2359 = vmatprep.subr.mxu0 0.0
    %2360 = vmatpush1.msra.mxu0 0.0
    %2361 = vmatprep.subr.mxu0 0.0
    %2362 = vmatpush1.msra.mxu0 0.0
    %2363 = vmatprep.subr.mxu0 0.0
    %2364 = vmatpush1.msra.mxu0 0.0
    %2365 = vmatprep.subr.mxu0 0.0
    %2366 = vmatpush1.msra.mxu0 0.0
    %2367 = vmatprep.mubr.f32.mxu0 0.0
    %2368 = vmatmul.mubr.f32.gmra.mrb[0].mxu0 %v2298
    %v2369 = vpop.f32.mrb[0].mxu0
    %v2370 = vadd.f32 0.0, %v2369
    %v2371 = vpop.f32.mrb[0].mxu0
    %2372 = vmatprep.mubr.f32.mxu0 0.0
    %2373 = vmatmul.mubr.f32.gmra.mrb[0].mxu0 %v2301
    %v2374 = vpop.f32.mrb[0].mxu0
    %v2375 = vadd.f32 0.0, %v2374
    %v2376 = vpop.f32.mrb[0].mxu0
    %2377 = vdwg.mxu0
    %v2378 = vsub.f32 0.0, %v2370
    %v2379 = vsub.f32 0.0, %v2375
    %v2380 = vmul.f32 %v2378, 1.442695
    %v2381 = vpow.pop %v2380
    %v2382 = vmul.f32 %v2379, 1.442695
    %v2383 = vpow.pop %v2382
    %v2384 = vadd.f32 %v2381, 1.0
    %v2385 = vadd.f32 %v2383, 1.0
    %v2386 = vrcp.pop %v2384
    %v2387 = vmul.f32 1.0, %v2386
    %v2388 = vrcp.pop %v2385
    %v2389 = vmul.f32 1.0, %v2388
    %2390 = vmatprep.subr.mxu0 0.0
    %2391 = vmatpush1.xpose.msra.mxu0 %v1346
    %2392 = vmatprep.subr.mxu0 0.0
    %2393 = vmatpush1.xpose.msra.mxu0 %v1347
    %2394 = vmatprep.subr.mxu0 0.0
    %2395 = vmatpush1.xpose.msra.mxu0 %v1348
    %2396 = vmatprep.subr.mxu0 0.0
    %2397 = vmatpush1.xpose.msra.mxu0 %v1349
    %2398 = vmatprep.subr.mxu0 0.0
    %2399 = vmatpush1.xpose.msra.mxu0 %v1350
    %2400 = vmatprep.subr.mxu0 0.0
    %2401 = vmatpush1.xpose.msra.mxu0 %v1351
    %2402 = vmatprep.subr.mxu0 0.0
    %2403 = vmatpush1.xpose.msra.mxu0 %v1352
    %2404 = vmatprep.subr.mxu0 0.0
    %2405 = vmatpush1.xpose.msra.mxu0 %v1353
    %2406 = vmatprep.subr.mxu0 0.0
    %2407 = vmatpush1.xpose.msra.mxu0 %v1354
    %2408 = vmatprep.subr.mxu0 0.0
    %2409 = vmatpush1.xpose.msra.mxu0 %v1355
    %2410 = vmatprep.subr.mxu0 0.0
    %2411 = vmatpush1.xpose.msra.mxu0 %v1356
    %2412 = vmatprep.subr.mxu0 0.0
    %2413 = vmatpush1.xpose.msra.mxu0 %v1357
    %2414 = vmatprep.subr.mxu0 0.0
    %2415 = vmatpush1.xpose.msra.mxu0 %v1358
    %2416 = vmatprep.subr.mxu0 0.0
    %2417 = vmatpush1.xpose.msra.mxu0 %v1359
    %2418 = vmatprep.subr.mxu0 0.0
    %2419 = vmatpush1.xpose.msra.mxu0 %v1360
    %2420 = vmatprep.subr.mxu0 0.0
    %2421 = vmatpush1.xpose.msra.mxu0 %v1361
    %2422 = vmatprep.subr.mxu0 0.0
    %2423 = vmatpush1.xpose.msra.mxu0 %v1362
    %2424 = vmatprep.subr.mxu0 0.0
    %2425 = vmatpush1.xpose.msra.mxu0 %v1363
    %2426 = vmatprep.subr.mxu0 0.0
    %2427 = vmatpush1.xpose.msra.mxu0 %v1364
    %2428 = vmatprep.subr.mxu0 0.0
    %2429 = vmatpush1.xpose.msra.mxu0 %v1365
    %2430 = vmatprep.subr.mxu0 0.0
    %2431 = vmatpush1.xpose.msra.mxu0 %v1366
    %2432 = vmatprep.subr.mxu0 0.0
    %2433 = vmatpush1.xpose.msra.mxu0 %v1367
    %2434 = vmatprep.subr.mxu0 0.0
    %2435 = vmatpush1.xpose.msra.mxu0 %v1368
    %2436 = vmatprep.subr.mxu0 0.0
    %2437 = vmatpush1.xpose.msra.mxu0 %v1369
    %2438 = vmatprep.subr.mxu0 0.0
    %2439 = vmatpush1.xpose.msra.mxu0 %v1370
    %2440 = vmatprep.subr.mxu0 0.0
    %2441 = vmatpush1.xpose.msra.mxu0 %v1371
    %2442 = vmatprep.subr.mxu0 0.0
    %2443 = vmatpush1.xpose.msra.mxu0 %v1372
    %2444 = vmatprep.subr.mxu0 0.0
    %2445 = vmatpush1.xpose.msra.mxu0 %v1373
    %2446 = vmatprep.subr.mxu0 0.0
    %2447 = vmatpush1.xpose.msra.mxu0 %v1374
    %2448 = vmatprep.subr.mxu0 0.0
    %2449 = vmatpush1.xpose.msra.mxu0 %v1375
    %2450 = vmatprep.subr.mxu0 0.0
    %2451 = vmatpush1.xpose.msra.mxu0 %v1376
    %2452 = vmatprep.subr.mxu0 0.0
    %2453 = vmatpush1.xpose.msra.mxu0 %v1377
    %2454 = vmatprep.mubr.f32.mxu0 0.0
    %2455 = vmatmul.mubr.f32.gmra.mrb[0].mxu0 %v2387
    %v2456 = vpop.f32.mrb[0].mxu0
    %v2457 = vadd.f32 0.0, %v2456
    %v2458 = vpop.f32.mrb[0].mxu0
    %v2459 = vadd.f32 0.0, %v2458
    %2460 = vmatprep.mubr.f32.mxu0 0.0
    %2461 = vmatmul.mubr.f32.gmra.mrb[0].mxu0 %v2389
    %v2462 = vpop.f32.mrb[0].mxu0
    %v2463 = vadd.f32 0.0, %v2462
    %v2464 = vpop.f32.mrb[0].mxu0
    %v2465 = vadd.f32 0.0, %v2464
    %2466 = vdwg.mxu0
    %2467 = vmatprep.subr.mxu0 0.0
    %2468 = vmatpush1.xpose.msra.mxu0 %v1378
    %2469 = vmatprep.subr.mxu0 0.0
    %2470 = vmatpush1.xpose.msra.mxu0 %v1379
    %2471 = vmatprep.subr.mxu0 0.0
    %2472 = vmatpush1.xpose.msra.mxu0 %v1380
    %2473 = vmatprep.subr.mxu0 0.0
    %2474 = vmatpush1.xpose.msra.mxu0 %v1381
    %2475 = vmatprep.subr.mxu0 0.0
    %2476 = vmatpush1.xpose.msra.mxu0 %v1382
    %2477 = vmatprep.subr.mxu0 0.0
    %2478 = vmatpush1.xpose.msra.mxu0 %v1383
    %2479 = vmatprep.subr.mxu0 0.0
    %2480 = vmatpush1.xpose.msra.mxu0 %v1384
    %2481 = vmatprep.subr.mxu0 0.0
    %2482 = vmatpush1.xpose.msra.mxu0 %v1385
    %2483 = vmatprep.subr.mxu0 0.0
    %2484 = vmatpush1.xpose.msra.mxu0 %v1386
    %2485 = vmatprep.subr.mxu0 0.0
    %2486 = vmatpush1.xpose.msra.mxu0 %v1387
    %2487 = vmatprep.subr.mxu0 0.0
    %2488 = vmatpush1.xpose.msra.mxu0 %v1388
    %2489 = vmatprep.subr.mxu0 0.0
    %2490 = vmatpush1.xpose.msra.mxu0 %v1389
    %2491 = vmatprep.subr.mxu0 0.0
    %2492 = vmatpush1.xpose.msra.mxu0 %v1390
    %2493 = vmatprep.subr.mxu0 0.0
    %2494 = vmatpush1.xpose.msra.mxu0 %v1391
    %2495 = vmatprep.subr.mxu0 0.0
    %2496 = vmatpush1.xpose.msra.mxu0 %v1392
    %2497 = vmatprep.subr.mxu0 0.0
    %2498 = vmatpush1.xpose.msra.mxu0 %v1393
    %2499 = vmatprep.subr.mxu0 0.0
    %2500 = vmatpush1.xpose.msra.mxu0 %v1394
    %2501 = vmatprep.subr.mxu0 0.0
    %2502 = vmatpush1.xpose.msra.mxu0 %v1395
    %2503 = vmatprep.subr.mxu0 0.0
    %2504 = vmatpush1.xpose.msra.mxu0 %v1396
    %2505 = vmatprep.subr.mxu0 0.0
    %2506 = vmatpush1.xpose.msra.mxu0 %v1397
    %2507 = vmatprep.subr.mxu0 0.0
    %2508 = vmatpush1.xpose.msra.mxu0 %v1398
    %2509 = vmatprep.subr.mxu0 0.0
    %2510 = vmatpush1.xpose.msra.mxu0 %v1399
    %2511 = vmatprep.subr.mxu0 0.0
    %2512 = vmatpush1.xpose.msra.mxu0 %v1400
    %2513 = vmatprep.subr.mxu0 0.0
    %2514 = vmatpush1.xpose.msra.mxu0 %v1401
    %2515 = vmatprep.subr.mxu0 0.0
    %2516 = vmatpush1.xpose.msra.mxu0 %v1402
    %2517 = vmatprep.subr.mxu0 0.0
    %2518 = vmatpush1.xpose.msra.mxu0 %v1403
    %2519 = vmatprep.subr.mxu0 0.0
    %2520 = vmatpush1.xpose.msra.mxu0 %v1404
    %2521 = vmatprep.subr.mxu0 0.0
    %2522 = vmatpush1.xpose.msra.mxu0 %v1405
    %2523 = vmatprep.subr.mxu0 0.0
    %2524 = vmatpush1.xpose.msra.mxu0 %v1406
    %2525 = vmatprep.subr.mxu0 0.0
    %2526 = vmatpush1.xpose.msra.mxu0 %v1407
    %2527 = vmatprep.subr.mxu0 0.0
    %2528 = vmatpush1.xpose.msra.mxu0 %v1408
    %2529 = vmatprep.subr.mxu0 0.0
    %2530 = vmatpush1.xpose.msra.mxu0 %v1409
    %2531 = vmatprep.mubr.f32.mxu0 0.0
    %2532 = vmatmul.mubr.f32.gmra.mrb[0].mxu0 %v2387
    %v2533 = vpop.f32.mrb[0].mxu0
    %v2534 = vadd.f32 0.0, %v2533
    %v2535 = vpop.f32.mrb[0].mxu0
    %v2536 = vadd.f32 0.0, %v2535
    %2537 = vmatprep.mubr.f32.mxu0 0.0
    %2538 = vmatmul.mubr.f32.gmra.mrb[0].mxu0 %v2389
    %v2539 = vpop.f32.mrb[0].mxu0
    %v2540 = vadd.f32 0.0, %v2539
    %v2541 = vpop.f32.mrb[0].mxu0
    %v2542 = vadd.f32 0.0, %v2541
    %2543 = vdwg.mxu0
    %2544 = vmatprep.subr.mxu0 0.0
    %2545 = vmatpush1.xpose.msra.mxu0 %v1410
    %2546 = vmatprep.subr.mxu0 0.0
    %2547 = vmatpush1.xpose.msra.mxu0 %v1411
    %2548 = vmatprep.subr.mxu0 0.0
    %2549 = vmatpush1.xpose.msra.mxu0 %v1412
    %2550 = vmatprep.subr.mxu0 0.0
    %2551 = vmatpush1.xpose.msra.mxu0 %v1413
    %2552 = vmatprep.subr.mxu0 0.0
    %2553 = vmatpush1.xpose.msra.mxu0 %v1414
    %2554 = vmatprep.subr.mxu0 0.0
    %2555 = vmatpush1.xpose.msra.mxu0 %v1415
    %2556 = vmatprep.subr.mxu0 0.0
    %2557 = vmatpush1.xpose.msra.mxu0 %v1416
    %2558 = vmatprep.subr.mxu0 0.0
    %2559 = vmatpush1.xpose.msra.mxu0 %v1417
    %2560 = vmatprep.subr.mxu0 0.0
    %2561 = vmatpush1.xpose.msra.mxu0 %v1418
    %2562 = vmatprep.subr.mxu0 0.0
    %2563 = vmatpush1.xpose.msra.mxu0 %v1419
    %2564 = vmatprep.subr.mxu0 0.0
    %2565 = vmatpush1.xpose.msra.mxu0 %v1420
    %2566 = vmatprep.subr.mxu0 0.0
    %2567 = vmatpush1.xpose.msra.mxu0 %v1421
    %2568 = vmatprep.subr.mxu0 0.0
    %2569 = vmatpush1.xpose.msra.mxu0 %v1422
    %2570 = vmatprep.subr.mxu0 0.0
    %2571 = vmatpush1.xpose.msra.mxu0 %v1423
    %2572 = vmatprep.subr.mxu0 0.0
    %2573 = vmatpush1.xpose.msra.mxu0 %v1424
    %2574 = vmatprep.subr.mxu0 0.0
    %2575 = vmatpush1.xpose.msra.mxu0 %v1425
    %2576 = vmatprep.subr.mxu0 0.0
    %2577 = vmatpush1.xpose.msra.mxu0 %v1426
    %2578 = vmatprep.subr.mxu0 0.0
    %2579 = vmatpush1.xpose.msra.mxu0 %v1427
    %2580 = vmatprep.subr.mxu0 0.0
    %2581 = vmatpush1.xpose.msra.mxu0 %v1428
    %2582 = vmatprep.subr.mxu0 0.0
    %2583 = vmatpush1.xpose.msra.mxu0 %v1429
    %2584 = vmatprep.subr.mxu0 0.0
    %2585 = vmatpush1.xpose.msra.mxu0 %v1430
    %2586 = vmatprep.subr.mxu0 0.0
    %2587 = vmatpush1.xpose.msra.mxu0 %v1431
    %2588 = vmatprep.subr.mxu0 0.0
    %2589 = vmatpush1.xpose.msra.mxu0 %v1432
    %2590 = vmatprep.subr.mxu0 0.0
    %2591 = vmatpush1.xpose.msra.mxu0 %v1433
    %2592 = vmatprep.subr.mxu0 0.0
    %2593 = vmatpush1.xpose.msra.mxu0 %v1434
    %2594 = vmatprep.subr.mxu0 0.0
    %2595 = vmatpush1.xpose.msra.mxu0 %v1435
    %2596 = vmatprep.subr.mxu0 0.0
    %2597 = vmatpush1.xpose.msra.mxu0 %v1436
    %2598 = vmatprep.subr.mxu0 0.0
    %2599 = vmatpush1.xpose.msra.mxu0 %v1437
    %2600 = vmatprep.subr.mxu0 0.0
    %2601 = vmatpush1.xpose.msra.mxu0 %v1438
    %2602 = vmatprep.subr.mxu0 0.0
    %2603 = vmatpush1.xpose.msra.mxu0 %v1439
    %2604 = vmatprep.subr.mxu0 0.0
    %2605 = vmatpush1.xpose.msra.mxu0 %v1440
    %2606 = vmatprep.subr.mxu0 0.0
    %2607 = vmatpush1.xpose.msra.mxu0 %v1441
    %2608 = vmatprep.mubr.f32.mxu0 0.0
    %2609 = vmatmul.mubr.f32.gmra.mrb[0].mxu0 %v2387
    %v2610 = vpop.f32.mrb[0].mxu0
    %v2611 = vadd.f32 0.0, %v2610
    %v2612 = vpop.f32.mrb[0].mxu0
    %v2613 = vadd.f32 0.0, %v2612
    %2614 = vmatprep.mubr.f32.mxu0 0.0
    %2615 = vmatmul.mubr.f32.gmra.mrb[0].mxu0 %v2389
    %v2616 = vpop.f32.mrb[0].mxu0
    %v2617 = vadd.f32 0.0, %v2616
    %v2618 = vpop.f32.mrb[0].mxu0
    %v2619 = vadd.f32 0.0, %v2618
    %2620 = vdwg.mxu0
    %2621 = vmatprep.subr.mxu0 0.0
    %2622 = vmatpush1.xpose.msra.mxu0 %v1442
    %2623 = vmatprep.subr.mxu0 0.0
    %2624 = vmatpush1.xpose.msra.mxu0 %v1443
    %2625 = vmatprep.subr.mxu0 0.0
    %2626 = vmatpush1.xpose.msra.mxu0 %v1444
    %2627 = vmatprep.subr.mxu0 0.0
    %2628 = vmatpush1.xpose.msra.mxu0 %v1445
    %2629 = vmatprep.subr.mxu0 0.0
    %2630 = vmatpush1.xpose.msra.mxu0 %v1446
    %2631 = vmatprep.subr.mxu0 0.0
    %2632 = vmatpush1.xpose.msra.mxu0 %v1447
    %2633 = vmatprep.subr.mxu0 0.0
    %2634 = vmatpush1.xpose.msra.mxu0 %v1448
    %2635 = vmatprep.subr.mxu0 0.0
    %2636 = vmatpush1.xpose.msra.mxu0 %v1449
    %2637 = vmatprep.subr.mxu0 0.0
    %2638 = vmatpush1.xpose.msra.mxu0 %v1450
    %2639 = vmatprep.subr.mxu0 0.0
    %2640 = vmatpush1.xpose.msra.mxu0 %v1451
    %2641 = vmatprep.subr.mxu0 0.0
    %2642 = vmatpush1.xpose.msra.mxu0 %v1452
    %2643 = vmatprep.subr.mxu0 0.0
    %2644 = vmatpush1.xpose.msra.mxu0 %v1453
    %2645 = vmatprep.subr.mxu0 0.0
    %2646 = vmatpush1.xpose.msra.mxu0 %v1454
    %2647 = vmatprep.subr.mxu0 0.0
    %2648 = vmatpush1.xpose.msra.mxu0 %v1455
    %2649 = vmatprep.subr.mxu0 0.0
    %2650 = vmatpush1.xpose.msra.mxu0 %v1456
    %2651 = vmatprep.subr.mxu0 0.0
    %2652 = vmatpush1.xpose.msra.mxu0 %v1457
    %2653 = vmatprep.subr.mxu0 0.0
    %2654 = vmatpush1.xpose.msra.mxu0 %v1458
    %2655 = vmatprep.subr.mxu0 0.0
    %2656 = vmatpush1.xpose.msra.mxu0 %v1459
    %2657 = vmatprep.subr.mxu0 0.0
    %2658 = vmatpush1.xpose.msra.mxu0 %v1460
    %2659 = vmatprep.subr.mxu0 0.0
    %2660 = vmatpush1.xpose.msra.mxu0 %v1461
    %2661 = vmatprep.subr.mxu0 0.0
    %2662 = vmatpush1.xpose.msra.mxu0 %v1462
    %2663 = vmatprep.subr.mxu0 0.0
    %2664 = vmatpush1.xpose.msra.mxu0 %v1463
    %2665 = vmatprep.subr.mxu0 0.0
    %2666 = vmatpush1.xpose.msra.mxu0 %v1464
    %2667 = vmatprep.subr.mxu0 0.0
    %2668 = vmatpush1.xpose.msra.mxu0 %v1465
    %2669 = vmatprep.subr.mxu0 0.0
    %2670 = vmatpush1.xpose.msra.mxu0 %v1466
    %2671 = vmatprep.subr.mxu0 0.0
    %2672 = vmatpush1.xpose.msra.mxu0 %v1467
    %2673 = vmatprep.subr.mxu0 0.0
    %2674 = vmatpush1.xpose.msra.mxu0 %v1468
    %2675 = vmatprep.subr.mxu0 0.0
    %2676 = vmatpush1.xpose.msra.mxu0 %v1469
    %2677 = vmatprep.subr.mxu0 0.0
    %2678 = vmatpush1.xpose.msra.mxu0 %v1470
    %2679 = vmatprep.subr.mxu0 0.0
    %2680 = vmatpush1.xpose.msra.mxu0 %v1471
    %2681 = vmatprep.subr.mxu0 0.0
    %2682 = vmatpush1.xpose.msra.mxu0 %v1472
    %2683 = vmatprep.subr.mxu0 0.0
    %2684 = vmatpush1.xpose.msra.mxu0 %v1473
    %2685 = vmatprep.mubr.f32.mxu0 0.0
    %2686 = vmatmul.mubr.f32.gmra.mrb[0].mxu0 %v2387
    %v2687 = vpop.f32.mrb[0].mxu0
    %v2688 = vadd.f32 0.0, %v2687
    %v2689 = vpop.f32.mrb[0].mxu0
    %v2690 = vadd.f32 0.0, %v2689
    %2691 = vmatprep.mubr.f32.mxu0 0.0
    %2692 = vmatmul.mubr.f32.gmra.mrb[0].mxu0 %v2389
    %v2693 = vpop.f32.mrb[0].mxu0
    %v2694 = vadd.f32 0.0, %v2693
    %v2695 = vpop.f32.mrb[0].mxu0
    %v2696 = vadd.f32 0.0, %v2695
    %2697 = vdwg.mxu0
    %2698 = vmatprep.subr.mxu0 0.0
    %2699 = vmatpush1.xpose.msra.mxu0 %v1474
    %2700 = vmatprep.subr.mxu0 0.0
    %2701 = vmatpush1.xpose.msra.mxu0 %v1475
    %2702 = vmatprep.subr.mxu0 0.0
    %2703 = vmatpush1.xpose.msra.mxu0 %v1476
    %2704 = vmatprep.subr.mxu0 0.0
    %2705 = vmatpush1.xpose.msra.mxu0 %v1477
    %2706 = vmatprep.subr.mxu0 0.0
    %2707 = vmatpush1.xpose.msra.mxu0 %v1478
    %2708 = vmatprep.subr.mxu0 0.0
    %2709 = vmatpush1.xpose.msra.mxu0 %v1479
    %2710 = vmatprep.subr.mxu0 0.0
    %2711 = vmatpush1.xpose.msra.mxu0 %v1480
    %2712 = vmatprep.subr.mxu0 0.0
    %2713 = vmatpush1.xpose.msra.mxu0 %v1481
    %2714 = vmatprep.subr.mxu0 0.0
    %2715 = vmatpush1.xpose.msra.mxu0 %v1482
    %2716 = vmatprep.subr.mxu0 0.0
    %2717 = vmatpush1.xpose.msra.mxu0 %v1483
    %2718 = vmatprep.subr.mxu0 0.0
    %2719 = vmatpush1.xpose.msra.mxu0 %v1484
    %2720 = vmatprep.subr.mxu0 0.0
    %2721 = vmatpush1.xpose.msra.mxu0 %v1485
    %2722 = vmatprep.subr.mxu0 0.0
    %2723 = vmatpush1.xpose.msra.mxu0 %v1486
    %2724 = vmatprep.subr.mxu0 0.0
    %2725 = vmatpush1.xpose.msra.mxu0 %v1487
    %2726 = vmatprep.subr.mxu0 0.0
    %2727 = vmatpush1.xpose.msra.mxu0 %v1488
    %2728 = vmatprep.subr.mxu0 0.0
    %2729 = vmatpush1.xpose.msra.mxu0 %v1489
    %2730 = vmatprep.subr.mxu0 0.0
    %2731 = vmatpush1.xpose.msra.mxu0 %v1490
    %2732 = vmatprep.subr.mxu0 0.0
    %2733 = vmatpush1.xpose.msra.mxu0 %v1491
    %2734 = vmatprep.subr.mxu0 0.0
    %2735 = vmatpush1.xpose.msra.mxu0 %v1492
    %2736 = vmatprep.subr.mxu0 0.0
    %2737 = vmatpush1.xpose.msra.mxu0 %v1493
    %2738 = vmatprep.subr.mxu0 0.0
    %2739 = vmatpush1.xpose.msra.mxu0 %v1494
    %2740 = vmatprep.subr.mxu0 0.0
    %2741 = vmatpush1.xpose.msra.mxu0 %v1495
    %2742 = vmatprep.subr.mxu0 0.0
    %2743 = vmatpush1.xpose.msra.mxu0 %v1496
    %2744 = vmatprep.subr.mxu0 0.0
    %2745 = vmatpush1.xpose.msra.mxu0 %v1497
    %2746 = vmatprep.subr.mxu0 0.0
    %2747 = vmatpush1.xpose.msra.mxu0 %v1498
    %2748 = vmatprep.subr.mxu0 0.0
    %2749 = vmatpush1.xpose.msra.mxu0 %v1499
    %2750 = vmatprep.subr.mxu0 0.0
    %2751 = vmatpush1.xpose.msra.mxu0 %v1500
    %2752 = vmatprep.subr.mxu0 0.0
    %2753 = vmatpush1.xpose.msra.mxu0 %v1501
    %2754 = vmatprep.subr.mxu0 0.0
    %2755 = vmatpush1.xpose.msra.mxu0 %v1502
    %2756 = vmatprep.subr.mxu0 0.0
    %2757 = vmatpush1.xpose.msra.mxu0 %v1503
    %2758 = vmatprep.subr.mxu0 0.0
    %2759 = vmatpush1.xpose.msra.mxu0 %v1504
    %2760 = vmatprep.subr.mxu0 0.0
    %2761 = vmatpush1.xpose.msra.mxu0 %v1505
    %2762 = vmatprep.mubr.f32.mxu0 0.0
    %2763 = vmatmul.mubr.f32.gmra.mrb[0].mxu0 %v2387
    %v2764 = vpop.f32.mrb[0].mxu0
    %v2765 = vadd.f32 0.0, %v2764
    %v2766 = vpop.f32.mrb[0].mxu0
    %v2767 = vadd.f32 0.0, %v2766
    %2768 = vmatprep.mubr.f32.mxu0 0.0
    %2769 = vmatmul.mubr.f32.gmra.mrb[0].mxu0 %v2389
    %v2770 = vpop.f32.mrb[0].mxu0
    %v2771 = vadd.f32 0.0, %v2770
    %v2772 = vpop.f32.mrb[0].mxu0
    %v2773 = vadd.f32 0.0, %v2772
    %2774 = vdwg.mxu0
    %2775 = vmatprep.subr.mxu0 0.0
    %2776 = vmatpush1.xpose.msra.mxu0 %v1506
    %2777 = vmatprep.subr.mxu0 0.0
    %2778 = vmatpush1.xpose.msra.mxu0 %v1507
    %2779 = vmatprep.subr.mxu0 0.0
    %2780 = vmatpush1.xpose.msra.mxu0 %v1508
    %2781 = vmatprep.subr.mxu0 0.0
    %2782 = vmatpush1.xpose.msra.mxu0 %v1509
    %2783 = vmatprep.subr.mxu0 0.0
    %2784 = vmatpush1.xpose.msra.mxu0 %v1510
    %2785 = vmatprep.subr.mxu0 0.0
    %2786 = vmatpush1.xpose.msra.mxu0 %v1511
    %2787 = vmatprep.subr.mxu0 0.0
    %2788 = vmatpush1.xpose.msra.mxu0 %v1512
    %2789 = vmatprep.subr.mxu0 0.0
    %2790 = vmatpush1.xpose.msra.mxu0 %v1513
    %2791 = vmatprep.subr.mxu0 0.0
    %2792 = vmatpush1.xpose.msra.mxu0 %v1514
    %2793 = vmatprep.subr.mxu0 0.0
    %2794 = vmatpush1.xpose.msra.mxu0 %v1515
    %2795 = vmatprep.subr.mxu0 0.0
    %2796 = vmatpush1.xpose.msra.mxu0 %v1516
    %2797 = vmatprep.subr.mxu0 0.0
    %2798 = vmatpush1.xpose.msra.mxu0 %v1517
    %2799 = vmatprep.subr.mxu0 0.0
    %2800 = vmatpush1.xpose.msra.mxu0 %v1518
    %2801 = vmatprep.subr.mxu0 0.0
    %2802 = vmatpush1.xpose.msra.mxu0 %v1519
    %2803 = vmatprep.subr.mxu0 0.0
    %2804 = vmatpush1.xpose.msra.mxu0 %v1520
    %2805 = vmatprep.subr.mxu0 0.0
    %2806 = vmatpush1.xpose.msra.mxu0 %v1521
    %2807 = vmatprep.subr.mxu0 0.0
    %2808 = vmatpush1.xpose.msra.mxu0 %v1522
    %2809 = vmatprep.subr.mxu0 0.0
    %2810 = vmatpush1.xpose.msra.mxu0 %v1523
    %2811 = vmatprep.subr.mxu0 0.0
    %2812 = vmatpush1.xpose.msra.mxu0 %v1524
    %2813 = vmatprep.subr.mxu0 0.0
    %2814 = vmatpush1.xpose.msra.mxu0 %v1525
    %2815 = vmatprep.subr.mxu0 0.0
    %2816 = vmatpush1.xpose.msra.mxu0 %v1526
    %2817 = vmatprep.subr.mxu0 0.0
    %2818 = vmatpush1.xpose.msra.mxu0 %v1527
    %2819 = vmatprep.subr.mxu0 0.0
    %2820 = vmatpush1.xpose.msra.mxu0 %v1528
    %2821 = vmatprep.subr.mxu0 0.0
    %2822 = vmatpush1.xpose.msra.mxu0 %v1529
    %2823 = vmatprep.subr.mxu0 0.0
    %2824 = vmatpush1.xpose.msra.mxu0 %v1530
    %2825 = vmatprep.subr.mxu0 0.0
    %2826 = vmatpush1.xpose.msra.mxu0 %v1531
    %2827 = vmatprep.subr.mxu0 0.0
    %2828 = vmatpush1.xpose.msra.mxu0 %v1532
    %2829 = vmatprep.subr.mxu0 0.0
    %2830 = vmatpush1.xpose.msra.mxu0 %v1533
    %2831 = vmatprep.subr.mxu0 0.0
    %2832 = vmatpush1.xpose.msra.mxu0 %v1534
    %2833 = vmatprep.subr.mxu0 0.0
    %2834 = vmatpush1.xpose.msra.mxu0 %v1535
    %2835 = vmatprep.subr.mxu0 0.0
    %2836 = vmatpush1.xpose.msra.mxu0 %v1536
    %2837 = vmatprep.subr.mxu0 0.0
    %2838 = vmatpush1.xpose.msra.mxu0 %v1537
    %2839 = vmatprep.mubr.f32.mxu0 0.0
    %2840 = vmatmul.mubr.f32.gmra.mrb[0].mxu0 %v2387
    %v2841 = vpop.f32.mrb[0].mxu0
    %v2842 = vadd.f32 0.0, %v2841
    %v2843 = vpop.f32.mrb[0].mxu0
    %v2844 = vadd.f32 0.0, %v2843
    %2845 = vmatprep.mubr.f32.mxu0 0.0
    %2846 = vmatmul.mubr.f32.gmra.mrb[0].mxu0 %v2389
    %v2847 = vpop.f32.mrb[0].mxu0
    %v2848 = vadd.f32 0.0, %v2847
    %v2849 = vpop.f32.mrb[0].mxu0
    %v2850 = vadd.f32 0.0, %v2849
    %2851 = vdwg.mxu0
    %2852 = vmatprep.subr.mxu0 0.0
    %2853 = vmatpush1.xpose.msra.mxu0 %v1538
    %2854 = vmatprep.subr.mxu0 0.0
    %2855 = vmatpush1.xpose.msra.mxu0 %v1539
    %2856 = vmatprep.subr.mxu0 0.0
    %2857 = vmatpush1.xpose.msra.mxu0 %v1540
    %2858 = vmatprep.subr.mxu0 0.0
    %2859 = vmatpush1.xpose.msra.mxu0 %v1541
    %2860 = vmatprep.subr.mxu0 0.0
    %2861 = vmatpush1.xpose.msra.mxu0 %v1542
    %2862 = vmatprep.subr.mxu0 0.0
    %2863 = vmatpush1.xpose.msra.mxu0 %v1543
    %2864 = vmatprep.subr.mxu0 0.0
    %2865 = vmatpush1.xpose.msra.mxu0 %v1544
    %2866 = vmatprep.subr.mxu0 0.0
    %2867 = vmatpush1.xpose.msra.mxu0 %v1545
    %2868 = vmatprep.subr.mxu0 0.0
    %2869 = vmatpush1.xpose.msra.mxu0 %v1546
    %2870 = vmatprep.subr.mxu0 0.0
    %2871 = vmatpush1.xpose.msra.mxu0 %v1547
    %2872 = vmatprep.subr.mxu0 0.0
    %2873 = vmatpush1.xpose.msra.mxu0 %v1548
    %2874 = vmatprep.subr.mxu0 0.0
    %2875 = vmatpush1.xpose.msra.mxu0 %v1549
    %2876 = vmatprep.subr.mxu0 0.0
    %2877 = vmatpush1.xpose.msra.mxu0 %v1550
    %2878 = vmatprep.subr.mxu0 0.0
    %2879 = vmatpush1.xpose.msra.mxu0 %v1551
    %2880 = vmatprep.subr.mxu0 0.0
    %2881 = vmatpush1.xpose.msra.mxu0 %v1552
    %2882 = vmatprep.subr.mxu0 0.0
    %2883 = vmatpush1.xpose.msra.mxu0 %v1553
    %2884 = vmatprep.subr.mxu0 0.0
    %2885 = vmatpush1.xpose.msra.mxu0 %v1554
    %2886 = vmatprep.subr.mxu0 0.0
    %2887 = vmatpush1.xpose.msra.mxu0 %v1555
    %2888 = vmatprep.subr.mxu0 0.0
    %2889 = vmatpush1.xpose.msra.mxu0 %v1556
    %2890 = vmatprep.subr.mxu0 0.0
    %2891 = vmatpush1.xpose.msra.mxu0 %v1557
    %2892 = vmatprep.subr.mxu0 0.0
    %2893 = vmatpush1.xpose.msra.mxu0 %v1558
    %2894 = vmatprep.subr.mxu0 0.0
    %2895 = vmatpush1.xpose.msra.mxu0 %v1559
    %2896 = vmatprep.subr.mxu0 0.0
    %2897 = vmatpush1.xpose.msra.mxu0 %v1560
    %2898 = vmatprep.subr.mxu0 0.0
    %2899 = vmatpush1.xpose.msra.mxu0 %v1561
    %2900 = vmatprep.subr.mxu0 0.0
    %2901 = vmatpush1.xpose.msra.mxu0 %v1562
    %2902 = vmatprep.subr.mxu0 0.0
    %2903 = vmatpush1.xpose.msra.mxu0 %v1563
    %2904 = vmatprep.subr.mxu0 0.0
    %2905 = vmatpush1.xpose.msra.mxu0 %v1564
    %2906 = vmatprep.subr.mxu0 0.0
    %2907 = vmatpush1.xpose.msra.mxu0 %v1565
    %2908 = vmatprep.subr.mxu0 0.0
    %2909 = vmatpush1.xpose.msra.mxu0 %v1566
    %2910 = vmatprep.subr.mxu0 0.0
    %2911 = vmatpush1.xpose.msra.mxu0 %v1567
    %2912 = vmatprep.subr.mxu0 0.0
    %2913 = vmatpush1.xpose.msra.mxu0 %v1568
    %2914 = vmatprep.subr.mxu0 0.0
    %2915 = vmatpush1.xpose.msra.mxu0 %v1569
    %2916 = vmatprep.mubr.f32.mxu0 0.0
    %2917 = vmatmul.mubr.f32.gmra.mrb[0].mxu0 %v2387
    %v2918 = vpop.f32.mrb[0].mxu0
    %v2919 = vadd.f32 0.0, %v2918
    %v2920 = vpop.f32.mrb[0].mxu0
    %v2921 = vadd.f32 0.0, %v2920
    %2922 = vmatprep.mubr.f32.mxu0 0.0
    %2923 = vmatmul.mubr.f32.gmra.mrb[0].mxu0 %v2389
    %v2924 = vpop.f32.mrb[0].mxu0
    %v2925 = vadd.f32 0.0, %v2924
    %v2926 = vpop.f32.mrb[0].mxu0
    %v2927 = vadd.f32 0.0, %v2926
    %2928 = vdwg.mxu0
    %2929 = vmatprep.subr.mxu0 0.0
    %2930 = vmatpush1.xpose.msra.mxu0 %v1570
    %2931 = vmatprep.subr.mxu0 0.0
    %2932 = vmatpush1.xpose.msra.mxu0 %v1571
    %2933 = vmatprep.subr.mxu0 0.0
    %2934 = vmatpush1.xpose.msra.mxu0 %v1572
    %2935 = vmatprep.subr.mxu0 0.0
    %2936 = vmatpush1.xpose.msra.mxu0 %v1573
    %2937 = vmatprep.subr.mxu0 0.0
    %2938 = vmatpush1.xpose.msra.mxu0 %v1574
    %2939 = vmatprep.subr.mxu0 0.0
    %2940 = vmatpush1.xpose.msra.mxu0 %v1575
    %2941 = vmatprep.subr.mxu0 0.0
    %2942 = vmatpush1.xpose.msra.mxu0 %v1576
    %2943 = vmatprep.subr.mxu0 0.0
    %2944 = vmatpush1.xpose.msra.mxu0 %v1577
    %2945 = vmatprep.subr.mxu0 0.0
    %2946 = vmatpush1.xpose.msra.mxu0 %v1578
    %2947 = vmatprep.subr.mxu0 0.0
    %2948 = vmatpush1.xpose.msra.mxu0 %v1579
    %2949 = vmatprep.subr.mxu0 0.0
    %2950 = vmatpush1.xpose.msra.mxu0 %v1580
    %2951 = vmatprep.subr.mxu0 0.0
    %2952 = vmatpush1.xpose.msra.mxu0 %v1581
    %2953 = vmatprep.subr.mxu0 0.0
    %2954 = vmatpush1.xpose.msra.mxu0 %v1582
    %2955 = vmatprep.subr.mxu0 0.0
    %2956 = vmatpush1.xpose.msra.mxu0 %v1583
    %2957 = vmatprep.subr.mxu0 0.0
    %2958 = vmatpush1.xpose.msra.mxu0 %v1584
    %2959 = vmatprep.subr.mxu0 0.0
    %2960 = vmatpush1.xpose.msra.mxu0 %v1585
    %2961 = vmatprep.subr.mxu0 0.0
    %2962 = vmatpush1.xpose.msra.mxu0 %v1586
    %2963 = vmatprep.subr.mxu0 0.0
    %2964 = vmatpush1.xpose.msra.mxu0 %v1587
    %2965 = vmatprep.subr.mxu0 0.0
    %2966 = vmatpush1.xpose.msra.mxu0 %v1588
    %2967 = vmatprep.subr.mxu0 0.0
    %2968 = vmatpush1.xpose.msra.mxu0 %v1589
    %2969 = vmatprep.subr.mxu0 0.0
    %2970 = vmatpush1.xpose.msra.mxu0 %v1590
    %2971 = vmatprep.subr.mxu0 0.0
    %2972 = vmatpush1.xpose.msra.mxu0 %v1591
    %2973 = vmatprep.subr.mxu0 0.0
    %2974 = vmatpush1.xpose.msra.mxu0 %v1592
    %2975 = vmatprep.subr.mxu0 0.0
    %2976 = vmatpush1.xpose.msra.mxu0 %v1593
    %2977 = vmatprep.subr.mxu0 0.0
    %2978 = vmatpush1.xpose.msra.mxu0 %v1594
    %2979 = vmatprep.subr.mxu0 0.0
    %2980 = vmatpush1.xpose.msra.mxu0 %v1595
    %2981 = vmatprep.subr.mxu0 0.0
    %2982 = vmatpush1.xpose.msra.mxu0 %v1596
    %2983 = vmatprep.subr.mxu0 0.0
    %2984 = vmatpush1.xpose.msra.mxu0 %v1597
    %2985 = vmatprep.subr.mxu0 0.0
    %2986 = vmatpush1.xpose.msra.mxu0 %v1598
    %2987 = vmatprep.subr.mxu0 0.0
    %2988 = vmatpush1.xpose.msra.mxu0 %v1599
    %2989 = vmatprep.subr.mxu0 0.0
    %2990 = vmatpush1.xpose.msra.mxu0 %v1600
    %2991 = vmatprep.subr.mxu0 0.0
    %2992 = vmatpush1.xpose.msra.mxu0 %v1601
    %2993 = vmatprep.mubr.f32.mxu0 0.0
    %2994 = vmatmul.mubr.f32.gmra.mrb[0].mxu0 %v2387
    %v2995 = vpop.f32.mrb[0].mxu0
    %v2996 = vadd.f32 0.0, %v2995
    %v2997 = vpop.f32.mrb[0].mxu0
    %v2998 = vadd.f32 0.0, %v2997
    %2999 = vmatprep.mubr.f32.mxu0 0.0
    %3000 = vmatmul.mubr.f32.gmra.mrb[0].mxu0 %v2389
    %v3001 = vpop.f32.mrb[0].mxu0
    %v3002 = vadd.f32 0.0, %v3001
    %v3003 = vpop.f32.mrb[0].mxu0
    %v3004 = vadd.f32 0.0, %v3003
    %3005 = vdwg.mxu0
    %v3006 = vmul.f32 %v29, %v2457
    %v3007 = vmul.f32 %v30, %v2459
    %v3008 = vmul.f32 %v31, %v2534
    %v3009 = vmul.f32 %v32, %v2536
    %v3010 = vmul.f32 %v33, %v2611
    %v3011 = vmul.f32 %v34, %v2613
    %v3012 = vmul.f32 %v35, %v2688
    %v3013 = vmul.f32 %v36, %v2690
    %v3014 = vmul.f32 %v37, %v2765
    %v3015 = vmul.f32 %v38, %v2767
    %v3016 = vmul.f32 %v39, %v2842
    %v3017 = vmul.f32 %v40, %v2844
    %v3018 = vmul.f32 %v41, %v2919
    %v3019 = vmul.f32 %v42, %v2921
    %v3020 = vmul.f32 %v43, %v2996
    %v3021 = vmul.f32 %v44, %v2998
    %v3022 = vmul.f32 %v45, %v2463
    %v3023 = vmul.f32 %v46, %v2465
    %v3024 = vmul.f32 %v47, %v2540
    %v3025 = vmul.f32 %v48, %v2542
    %v3026 = vmul.f32 %v49, %v2617
    %v3027 = vmul.f32 %v50, %v2619
    %v3028 = vmul.f32 %v51, %v2694
    %v3029 = vmul.f32 %v52, %v2696
    %v3030 = vmul.f32 %v53, %v2771
    %v3031 = vmul.f32 %v54, %v2773
    %v3032 = vmul.f32 %v55, %v2848
    %v3033 = vmul.f32 %v56, %v2850
    %v3034 = vmul.f32 %v57, %v2925
    %v3035 = vmul.f32 %v58, %v2927
    %v3036 = vmul.f32 %v59, %v3002
    %v3037 = vmul.f32 %v60, %v3004
    %3038 = vst [vmem:[#allocation5] sm:$0xff] %v3006
    %3039 = vst [vmem:[#allocation5 + $0x8] sm:$0xff] %v3007
    %3040 = vst [vmem:[#allocation5 + $0x10] sm:$0xff] %v3008
    %3041 = vst [vmem:[#allocation5 + $0x18] sm:$0xff] %v3009
    %3042 = vst [vmem:[#allocation5 + $0x20] sm:$0xff] %v3010
    %3043 = vst [vmem:[#allocation5 + $0x28] sm:$0xff] %v3011
    %3044 = vst [vmem:[#allocation5 + $0x30] sm:$0xff] %v3012
    %3045 = vst [vmem:[#allocation5 + $0x38] sm:$0xff] %v3013
    %3046 = vst [vmem:[#allocation5 + $0x40] sm:$0xff] %v3014
    %3047 = vst [vmem:[#allocation5 + $0x48] sm:$0xff] %v3015
    %3048 = vst [vmem:[#allocation5 + $0x50] sm:$0xff] %v3016
    %3049 = vst [vmem:[#allocation5 + $0x58] sm:$0xff] %v3017
    %3050 = vst [vmem:[#allocation5 + $0x60] sm:$0xff] %v3018
    %3051 = vst [vmem:[#allocation5 + $0x68] sm:$0xff] %v3019
    %3052 = vst [vmem:[#allocation5 + $0x70] sm:$0xff] %v3020
    %3053 = vst [vmem:[#allocation5 + $0x78] sm:$0xff] %v3021
    %3054 = vst [vmem:[#allocation5 + $0x80] sm:$0xff] %v3022
    %3055 = vst [vmem:[#allocation5 + $0x88] sm:$0xff] %v3023
    %3056 = vst [vmem:[#allocation5 + $0x90] sm:$0xff] %v3024
    %3057 = vst [vmem:[#allocation5 + $0x98] sm:$0xff] %v3025
    %3058 = vst [vmem:[#allocation5 + $0xa0] sm:$0xff] %v3026
    %3059 = vst [vmem:[#allocation5 + $0xa8] sm:$0xff] %v3027
    %3060 = vst [vmem:[#allocation5 + $0xb0] sm:$0xff] %v3028
    %3061 = vst [vmem:[#allocation5 + $0xb8] sm:$0xff] %v3029
    %3062 = vst [vmem:[#allocation5 + $0xc0] sm:$0xff] %v3030
    %3063 = vst [vmem:[#allocation5 + $0xc8] sm:$0xff] %v3031
    %3064 = vst [vmem:[#allocation5 + $0xd0] sm:$0xff] %v3032
    %3065 = vst [vmem:[#allocation5 + $0xd8] sm:$0xff] %v3033
    %3066 = vst [vmem:[#allocation5 + $0xe0] sm:$0xff] %v3034
    %3067 = vst [vmem:[#allocation5 + $0xe8] sm:$0xff] %v3035
    %3068 = vst [vmem:[#allocation5 + $0xf0] sm:$0xff] %v3036
    %3069 = vst [vmem:[#allocation5 + $0xf8] sm:$0xff] %v3037
    // Predicated region
    $region18: #{tpu_custom_call.1} parent=1 // pred_check
      _
    $region19: #{tpu_custom_call.1} parent=1 // pred_check_branch
      %3071 = sbr.rel (0) target = $region21
    $region20: #{tpu_custom_call.1} parent=1 // pred_region
      %s3073 = ssub.s32 4096, 4096
      %3074 = vsyncadd [#allocation4], %s3073
      %s3075 = sshll.u32 [#allocation5], 4
      %s3076 = int_to_ptr.vmem [resolvable:$true] %s3075
      %3081 = dma.vmem_to_hbm [thread:$0]  %s3076, 4096, %s3, [#allocation4], 2048, 2048, 128
    $region21: #{tpu_custom_call.1} parent=1 // pred_fallthru
      _
    // Predicated region
    $region22: #{tpu_custom_call.1} parent=1 // pred_check
      _
    $region23: #{tpu_custom_call.1} parent=1 // pred_check_branch
      %3083 = sbr.rel (0) target = $region25
    $region24: #{tpu_custom_call.1} parent=1 // pred_region
      %3084 = dma.done [#allocation4], 4096
    $region25: #{tpu_custom_call.1} parent=1 // pred_fallthru
      _
    %3085 = vsyncpa [#allocation3], 1
    %3086 = vsyncpa [#allocation4], 1

</llo_original>
